<compile_context>
chip_gen: v7x
topology: tpu7x:2x2x1
jax: 0.10.0
libtpu: 0.0.40
codegen_flags: <defaults>
</compile_context>

<pallas_src>
import functools

import jax
import jax.numpy as jnp
from jax.experimental import pallas as pl
from jax.experimental.pallas import tpu as pltpu

CLASSES = 8
EMO_DIM = 960      # MobileNetV3-Large feature width
ID_DIM = 2048      # VGGFace2 ResNet-50 feature width
OUT_PAD = 128      # lane-dense padded classifier output width


def _round_up(x, m):
    return ((x + m - 1) // m) * m


def _cdiv(a, b):
    return -(-a // b)


def _encoder_classifier_kernel(
    x_ref,                        # (TM, C, THW) f32 image chunk (no pre-pass)
    we_ref, wi_ref,               # (C, 960), (C, 2048) f32, 1/HW pre-folded
    w1e_ref, w1i_ref, b1_ref,     # fc1 split over the [emotion | id] concat
    w2_ref, b2_ref,
    w3_ref, b3_ref,
    w4_ref, b4_ref,
    w5_ref, b5_ref,               # padded to OUT_PAD output lanes
    out_ref,                      # (TM, OUT_PAD) f32
    acc_ref,                      # (TM, C) f32 scratch: running channel sums
    *, hw_total,
):
    f32 = jnp.float32
    tm, c, thw = x_ref.shape
    j = pl.program_id(1)

    @pl.when(j == 0)
    def _init():
        acc_ref[...] = jnp.zeros_like(acc_ref)

    # Stream this HW chunk straight from the original f32 image and
    # accumulate per-channel spatial sums (the reduce is hidden under the
    # multi-MiB chunk DMA).
    x = x_ref[...].astype(f32)
    if hw_total % thw != 0:
        # Ragged last chunk: zero the stale lanes instead of padding in HBM.
        valid = hw_total - j * thw
        lane = jax.lax.broadcasted_iota(jnp.int32, (tm, c, thw), 2)
        x = jnp.where(lane < valid, x, 0.0)
    acc_ref[...] += jnp.sum(x, axis=-1)

    @pl.when(j == pl.num_programs(1) - 1)
    def _finalize():
        pooled = acc_ref[...]          # (TM, C); mean scale folded into we/wi

        # Encoder surrogates: linear projection of the pooled channels.
        # K == C is tiny, so this is a single fused C-term broadcast-FMA
        # expression on the VPU (a padded-K MXU dot would be ~2% utilized;
        # no carried whole-row accumulator across iterations).
        emo = sum(pooled[:, ci:ci + 1] * we_ref[ci:ci + 1, :]
                  for ci in range(c))
        idf = sum(pooled[:, ci:ci + 1] * wi_ref[ci:ci + 1, :]
                  for ci in range(c))
        emo = emo.astype(w1e_ref.dtype)
        idf = idf.astype(w1i_ref.dtype)

        # Classifier head (exact semantics of the PyTorch module):
        # fc1(torch.cat((emo, idf), 1)) == emo @ W1[:960] + idf @ W1[960:]
        h = (jnp.dot(emo, w1e_ref[...], preferred_element_type=f32)
             + jnp.dot(idf, w1i_ref[...], preferred_element_type=f32)
             + b1_ref[...])
        h = jnp.maximum(h, 0.0)
        h = jnp.maximum(
            jnp.dot(h.astype(w2_ref.dtype), w2_ref[...],
                    preferred_element_type=f32) + b2_ref[...], 0.0)
        h = jnp.maximum(
            jnp.dot(h.astype(w3_ref.dtype), w3_ref[...],
                    preferred_element_type=f32) + b3_ref[...], 0.0)
        h = jnp.maximum(
            jnp.dot(h.astype(w4_ref.dtype), w4_ref[...],
                    preferred_element_type=f32) + b4_ref[...], 0.0)
        out_ref[...] = (
            jnp.dot(h, w5_ref[...], preferred_element_type=f32) + b5_ref[...])


def prepare_params(params, hw):
    """Cast / scale / pad raw params into the kernel-ready layout."""
    f32, bf16 = jnp.float32, jnp.bfloat16
    prep = dict(
        we_s=(params["we"] / float(hw)).astype(f32),   # fold the 1/HW of the mean
        wi_s=(params["wi"] / float(hw)).astype(f32),
        w1e=params["w1e"].astype(bf16),                # fc1..fc4 weights -> bf16
        w1i=params["w1i"].astype(bf16),
        b1=params["b1"].astype(f32),
        w2=params["w2"].astype(bf16), b2=params["b2"].astype(f32),
        w3=params["w3"].astype(bf16), b3=params["b3"].astype(f32),
        w4=params["w4"].astype(bf16), b4=params["b4"].astype(f32),
    )
    w5 = params["w5"].astype(f32)
    b5 = params["b5"].astype(f32)
    prep["w5p"] = jnp.pad(w5, ((0, 0), (0, OUT_PAD - w5.shape[1])))
    prep["b5p"] = jnp.pad(b5, ((0, 0), (0, OUT_PAD - b5.shape[1])))
    return prep


def pretrained_encoder_classifier(x_nchw, params, *, tm=None, thw_cap=2048):
    """x_nchw: (B, C, H, W) float32 image; params: dict from init_params.

    thw_cap: spatial chunk width (lanes), multiple of 128.  Default 2048
    keeps the full working set well under v7x's 64 MiB VMEM; on v5e/v6e
    (128 MiB VMEM) 4096..8192 trims per-step overhead further.
    """
    B, C, H, W = x_nchw.shape
    HW = H * W
    prep = prepare_params(params, HW)

    # Batch tile: aim for >=2 batch tiles once B is large enough so the
    # "parallel" batch axis can be sharded across TensorCores (v7x megacore).
    if tm is None:
        tm = B if B <= 8 else min(128, _round_up(_cdiv(B, 2), 8))
    n_btiles = _cdiv(B, tm)
    b_out = n_btiles * tm

    # Spatial chunk: full HW if it fits, otherwise thw_cap-wide chunks with
    # the ragged tail masked in-kernel (no HBM pad copy).
    assert thw_cap % 128 == 0
    thw = HW if HW <= thw_cap else thw_cap
    n_hw = _cdiv(HW, thw)

    # Consume the original f32 image directly: (B,C,H,W)->(B,C,HW) is a free
    # reshape; no cast / pad / transpose pre-pass (no extra HBM round trip).
    x = x_nchw.reshape(B, C, HW)

    grid = (n_btiles, n_hw)

    def const_spec(arr):
        nd = arr.ndim
        return pl.BlockSpec(arr.shape, lambda i, j, _nd=nd: (0,) * _nd)

    weight_order = ("we_s", "wi_s", "w1e", "w1i", "b1", "w2", "b2",
                    "w3", "b3", "w4", "b4", "w5p", "b5p")
    w_args = tuple(prep[k] for k in weight_order)
    w_specs = [const_spec(a) for a in w_args]

    # Deeper x pipelining hides the finalize (projection + head) bubble when
    # there is more than one grid step; stay at 2 buffers for huge chunks.
    x_bufs = 3 if (n_btiles * n_hw) > 3 else 2
    if x_bufs * tm * _round_up(C, 8) * thw * 4 > (48 << 20):
        x_bufs = 2
    x_index = lambda i, j: (i, 0, j)
    if x_bufs > 2:
        x_spec = pl.BlockSpec((tm, C, thw), x_index,
                              pipeline_mode=pl.Buffered(x_bufs))
    else:
        x_spec = pl.BlockSpec((tm, C, thw), x_index)

    # VMEM budget: f32 x chunks pad C=3 -> 8 sublanes (VMEM-capacity-only
    # cost; the DMA still reads dense HBM), weights are double-buffered.
    xbuf_bytes = x_bufs * tm * _round_up(C, 8) * thw * 4
    wbuf_bytes = 2 * sum(int(a.size) * a.dtype.itemsize for a in w_args)
    tmp_bytes = tm * (EMO_DIM + ID_DIM) * 6 + tm * OUT_PAD * 8 + (2 << 20)
    vmem_limit = int(min(100 << 20,
                         max(32 << 20,
                             (xbuf_bytes + wbuf_bytes + tmp_bytes) * 5 // 4)))

    flops = 2 * B * (C * HW + C * (EMO_DIM + ID_DIM)
                     + EMO_DIM * 256 + ID_DIM * 256
                     + 256 * 128 + 128 * 64 + 64 * 32 + 32 * OUT_PAD)
    bytes_accessed = (x.size * x.dtype.itemsize
                      + sum(int(a.size) * a.dtype.itemsize for a in w_args)
                      + b_out * OUT_PAD * 4)

    kernel = functools.partial(_encoder_classifier_kernel, hw_total=HW)

    out = pl.pallas_call(
        kernel,
        out_shape=jax.ShapeDtypeStruct((b_out, OUT_PAD), jnp.float32),
        grid_spec=pltpu.PrefetchScalarGridSpec(
            num_scalar_prefetch=0,
            grid=grid,
            in_specs=[x_spec] + w_specs,
            out_specs=pl.BlockSpec((tm, OUT_PAD), lambda i, j: (i, 0)),
            scratch_shapes=[pltpu.VMEM((tm, C), jnp.float32)],
        ),
        compiler_params=pltpu.CompilerParams(
            dimension_semantics=("parallel", "arbitrary"),
            vmem_limit_bytes=vmem_limit,
        ),
        cost_estimate=pl.CostEstimate(
            flops=flops, transcendentals=0, bytes_accessed=bytes_accessed),
    )(x, *w_args)

    return out[:B, :CLASSES]


def init_params(key, in_channels=3, classes=CLASSES):
    ks = jax.random.split(key, 12)
    s = 0.05

    def dense(k, fan_in, fan_out):
        kw, kb = jax.random.split(k)
        w = jax.random.normal(kw, (fan_in, fan_out), jnp.float32) * s
        b = jax.random.normal(kb, (1, fan_out), jnp.float32) * s
        return w, b

    # surrogate encoder projections (pool -> linear; no extra nonlinearity)
    we = jax.random.normal(ks[0], (in_channels, EMO_DIM), jnp.float32) * s
    wi = jax.random.normal(ks[1], (in_channels, ID_DIM), jnp.float32) * s

    # fc1 is nn.Linear(960 + 2048, 256); store it split along the concat axis
    w1, b1 = dense(ks[2], EMO_DIM + ID_DIM, 256)
    w1e, w1i = w1[:EMO_DIM], w1[EMO_DIM:]
    w2, b2 = dense(ks[3], 256, 128)
    w3, b3 = dense(ks[4], 128, 64)
    w4, b4 = dense(ks[5], 64, 32)
    w5, b5 = dense(ks[6], 32, classes)

    return dict(we=we, wi=wi, w1e=w1e, w1i=w1i, b1=b1,
                w2=w2, b2=b2, w3=w3, b3=b3, w4=w4, b4=b4, w5=w5, b5=b5)


def reference_forward(x_nchw, params):
    """Pure-JAX reference mirroring the kernel's numerics."""
    f32, bf16 = jnp.float32, jnp.bfloat16
    B, C, H, W = x_nchw.shape
    HW = H * W
    p = prepare_params(params, HW)

    x = x_nchw.reshape(B, C, HW).astype(f32)
    pooled = jnp.sum(x, axis=-1)                        # (B, C)
    emo = sum(pooled[:, c:c + 1] * p["we_s"][c:c + 1, :] for c in range(C))
    idf = sum(pooled[:, c:c + 1] * p["wi_s"][c:c + 1, :] for c in range(C))
    emo = emo.astype(bf16)
    idf = idf.astype(bf16)

    h = (jnp.dot(emo, p["w1e"], preferred_element_type=f32)
         + jnp.dot(idf, p["w1i"], preferred_element_type=f32) + p["b1"])
    h = jax.nn.relu(h)
    h = jax.nn.relu(jnp.dot(h.astype(bf16), p["w2"],
                            preferred_element_type=f32) + p["b2"])
    h = jax.nn.relu(jnp.dot(h.astype(bf16), p["w3"],
                            preferred_element_type=f32) + p["b3"])
    h = jax.nn.relu(jnp.dot(h.astype(bf16), p["w4"],
                            preferred_element_type=f32) + p["b4"])
    out = jnp.dot(h, p["w5p"], preferred_element_type=f32) + p["b5p"]
    return out[:, :CLASSES]


if __name__ == "__main__":
    key = jax.random.PRNGKey(0)
    kx, kp = jax.random.split(key)

    # small image consistent with the module's NCHW face-image input
    x = jax.random.normal(kx, (2, 3, 16, 16), jnp.float32)
    params = init_params(kp)

    out = pretrained_encoder_classifier(x, params)
    out = jax.block_until_ready(out)

    ref = reference_forward(x, params)
    assert out.shape == (2, CLASSES)
    err = jnp.max(jnp.abs(out - ref))
    assert jnp.allclose(out, ref, atol=2e-3, rtol=2e-3), f"max abs err {err}"

    print("KERNEL_OK")
</pallas_src>

<mosaic_0001>
module attributes {stable_mosaic.version = 11 : i64} {
  func.func @_encoder_classifier_kernel(%arg0: i32, %arg1: i32, %arg2: memref<2x3x256xf32, #tpu.memory_space<vmem>>, %arg3: memref<3x960xf32, #tpu.memory_space<vmem>>, %arg4: memref<3x2048xf32, #tpu.memory_space<vmem>>, %arg5: memref<960x256xbf16, #tpu.memory_space<vmem>>, %arg6: memref<2048x256xbf16, #tpu.memory_space<vmem>>, %arg7: memref<1x256xf32, #tpu.memory_space<vmem>>, %arg8: memref<256x128xbf16, #tpu.memory_space<vmem>>, %arg9: memref<1x128xf32, #tpu.memory_space<vmem>>, %arg10: memref<128x64xbf16, #tpu.memory_space<vmem>>, %arg11: memref<1x64xf32, #tpu.memory_space<vmem>>, %arg12: memref<64x32xbf16, #tpu.memory_space<vmem>>, %arg13: memref<1x32xf32, #tpu.memory_space<vmem>>, %arg14: memref<32x128xf32, #tpu.memory_space<vmem>>, %arg15: memref<1x128xf32, #tpu.memory_space<vmem>>, %arg16: memref<2x128xf32, #tpu.memory_space<vmem>>, %arg17: memref<2x3xf32, #tpu.memory_space<vmem>>) attributes {dimension_semantics = [#tpu.dimension_semantics<parallel>, #tpu.dimension_semantics<arbitrary>], iteration_bounds = array<i64: 1, 1>, scalar_prefetch = 0 : i64, scratch_operands = 1 : i64, tpu.core_type = #tpu.core_type<tc>, window_params = [{transform_indices = @transform_0, window_bounds = array<i64: 2, 3, 256>}, {pipeline_mode = #tpu.pipeline_mode<synchronous>, transform_indices = @transform_1, window_bounds = array<i64: 3, 960>}, {pipeline_mode = #tpu.pipeline_mode<synchronous>, transform_indices = @transform_2, window_bounds = array<i64: 3, 2048>}, {pipeline_mode = #tpu.pipeline_mode<synchronous>, transform_indices = @transform_3, window_bounds = array<i64: 960, 256>}, {pipeline_mode = #tpu.pipeline_mode<synchronous>, transform_indices = @transform_4, window_bounds = array<i64: 2048, 256>}, {pipeline_mode = #tpu.pipeline_mode<synchronous>, transform_indices = @transform_5, window_bounds = array<i64: 1, 256>}, {pipeline_mode = #tpu.pipeline_mode<synchronous>, transform_indices = @transform_6, window_bounds = array<i64: 256, 128>}, {pipeline_mode = #tpu.pipeline_mode<synchronous>, transform_indices = @transform_7, window_bounds = array<i64: 1, 128>}, {pipeline_mode = #tpu.pipeline_mode<synchronous>, transform_indices = @transform_8, window_bounds = array<i64: 128, 64>}, {pipeline_mode = #tpu.pipeline_mode<synchronous>, transform_indices = @transform_9, window_bounds = array<i64: 1, 64>}, {pipeline_mode = #tpu.pipeline_mode<synchronous>, transform_indices = @transform_10, window_bounds = array<i64: 64, 32>}, {pipeline_mode = #tpu.pipeline_mode<synchronous>, transform_indices = @transform_11, window_bounds = array<i64: 1, 32>}, {pipeline_mode = #tpu.pipeline_mode<synchronous>, transform_indices = @transform_12, window_bounds = array<i64: 32, 128>}, {pipeline_mode = #tpu.pipeline_mode<synchronous>, transform_indices = @transform_13, window_bounds = array<i64: 1, 128>}, {transform_indices = @transform_14, window_bounds = array<i64: 2, 128>}]} {
    %c0_i32 = arith.constant 0 : i32
    %0 = arith.cmpi eq, %arg1, %c0_i32 : i32
    %1 = arith.extui %0 : i1 to i32
    %c0_i32_0 = arith.constant 0 : i32
    %2 = arith.cmpi ne, %1, %c0_i32_0 : i32
    scf.if %2 {
      %cst_9 = arith.constant 0.000000e+00 : f32
      %11 = vector.broadcast %cst_9 : f32 to vector<2x3xf32>
      %c0_10 = arith.constant 0 : index
      %c0_11 = arith.constant 0 : index
      %12 = vector.load %arg17[%c0_10, %c0_11] : memref<2x3xf32, #tpu.memory_space<vmem>>, vector<2x3xf32>
      tpu.vector_store %arg17[%c0_10, %c0_11], %11 {strides = array<i32>} : memref<2x3xf32, #tpu.memory_space<vmem>>, vector<2x3xf32>,
    } else {
    }
    %c0 = arith.constant 0 : index
    %c0_1 = arith.constant 0 : index
    %c0_2 = arith.constant 0 : index
    %3 = vector.load %arg2[%c0, %c0_1, %c0_2] : memref<2x3x256xf32, #tpu.memory_space<vmem>>, vector<2x3x256xf32>
    %c0_3 = arith.constant 0 : index
    %c0_4 = arith.constant 0 : index
    %4 = vector.load %arg17[%c0_3, %c0_4] : memref<2x3xf32, #tpu.memory_space<vmem>>, vector<2x3xf32>
    %cst = arith.constant dense<0.000000e+00> : vector<2x3xf32>
    %5 = vector.multi_reduction <add>, %3, %cst [2] : vector<2x3x256xf32> to vector<2x3xf32>
    %6 = arith.addf %4, %5 : vector<2x3xf32>
    %c0_5 = arith.constant 0 : index
    %c0_6 = arith.constant 0 : index
    %7 = vector.load %arg17[%c0_5, %c0_6] : memref<2x3xf32, #tpu.memory_space<vmem>>, vector<2x3xf32>
    tpu.vector_store %arg17[%c0_5, %c0_6], %6 {strides = array<i32>} : memref<2x3xf32, #tpu.memory_space<vmem>>, vector<2x3xf32>,
    %c0_i32_7 = arith.constant 0 : i32
    %8 = arith.cmpi eq, %arg1, %c0_i32_7 : i32
    %9 = arith.extui %8 : i1 to i32
    %c0_i32_8 = arith.constant 0 : i32
    %10 = arith.cmpi ne, %9, %c0_i32_8 : i32
    scf.if %10 {
      %c0_9 = arith.constant 0 : index
      %c0_10 = arith.constant 0 : index
      %11 = vector.load %arg17[%c0_9, %c0_10] : memref<2x3xf32, #tpu.memory_space<vmem>>, vector<2x3xf32>
      %12 = vector.extract_strided_slice %11 {offsets = [0, 0], sizes = [2, 1], strides = [1, 1]} : vector<2x3xf32> to vector<2x1xf32>
      %c0_11 = arith.constant 0 : index
      %c0_12 = arith.constant 0 : index
      %13 = vector.load %arg3[%c0_11, %c0_12] : memref<3x960xf32, #tpu.memory_space<vmem>>, vector<1x960xf32>
      %14 = vector.broadcast %12 : vector<2x1xf32> to vector<2x960xf32>
      %15 = vector.broadcast %13 : vector<1x960xf32> to vector<2x960xf32>
      %16 = arith.mulf %14, %15 : vector<2x960xf32>
      %cst_13 = arith.constant 0.000000e+00 : f32
      %17 = vector.broadcast %cst_13 : f32 to vector<2x960xf32>
      %18 = arith.addf %17, %16 : vector<2x960xf32>
      %19 = vector.extract_strided_slice %11 {offsets = [0, 1], sizes = [2, 1], strides = [1, 1]} : vector<2x3xf32> to vector<2x1xf32>
      %c1 = arith.constant 1 : index
      %c0_14 = arith.constant 0 : index
      %20 = vector.load %arg3[%c1, %c0_14] : memref<3x960xf32, #tpu.memory_space<vmem>>, vector<1x960xf32>
      %21 = vector.broadcast %19 : vector<2x1xf32> to vector<2x960xf32>
      %22 = vector.broadcast %20 : vector<1x960xf32> to vector<2x960xf32>
      %23 = arith.mulf %21, %22 : vector<2x960xf32>
      %24 = arith.addf %18, %23 : vector<2x960xf32>
      %25 = vector.extract_strided_slice %11 {offsets = [0, 2], sizes = [2, 1], strides = [1, 1]} : vector<2x3xf32> to vector<2x1xf32>
      %c2 = arith.constant 2 : index
      %c0_15 = arith.constant 0 : index
      %26 = vector.load %arg3[%c2, %c0_15] : memref<3x960xf32, #tpu.memory_space<vmem>>, vector<1x960xf32>
      %27 = vector.broadcast %25 : vector<2x1xf32> to vector<2x960xf32>
      %28 = vector.broadcast %26 : vector<1x960xf32> to vector<2x960xf32>
      %29 = arith.mulf %27, %28 : vector<2x960xf32>
      %30 = arith.addf %24, %29 : vector<2x960xf32>
      %31 = vector.extract_strided_slice %11 {offsets = [0, 0], sizes = [2, 1], strides = [1, 1]} : vector<2x3xf32> to vector<2x1xf32>
      %c0_16 = arith.constant 0 : index
      %c0_17 = arith.constant 0 : index
      %32 = vector.load %arg4[%c0_16, %c0_17] : memref<3x2048xf32, #tpu.memory_space<vmem>>, vector<1x2048xf32>
      %33 = vector.broadcast %31 : vector<2x1xf32> to vector<2x2048xf32>
      %34 = vector.broadcast %32 : vector<1x2048xf32> to vector<2x2048xf32>
      %35 = arith.mulf %33, %34 : vector<2x2048xf32>
      %cst_18 = arith.constant 0.000000e+00 : f32
      %36 = vector.broadcast %cst_18 : f32 to vector<2x2048xf32>
      %37 = arith.addf %36, %35 : vector<2x2048xf32>
      %38 = vector.extract_strided_slice %11 {offsets = [0, 1], sizes = [2, 1], strides = [1, 1]} : vector<2x3xf32> to vector<2x1xf32>
      %c1_19 = arith.constant 1 : index
      %c0_20 = arith.constant 0 : index
      %39 = vector.load %arg4[%c1_19, %c0_20] : memref<3x2048xf32, #tpu.memory_space<vmem>>, vector<1x2048xf32>
      %40 = vector.broadcast %38 : vector<2x1xf32> to vector<2x2048xf32>
      %41 = vector.broadcast %39 : vector<1x2048xf32> to vector<2x2048xf32>
      %42 = arith.mulf %40, %41 : vector<2x2048xf32>
      %43 = arith.addf %37, %42 : vector<2x2048xf32>
      %44 = vector.extract_strided_slice %11 {offsets = [0, 2], sizes = [2, 1], strides = [1, 1]} : vector<2x3xf32> to vector<2x1xf32>
      %c2_21 = arith.constant 2 : index
      %c0_22 = arith.constant 0 : index
      %45 = vector.load %arg4[%c2_21, %c0_22] : memref<3x2048xf32, #tpu.memory_space<vmem>>, vector<1x2048xf32>
      %46 = vector.broadcast %44 : vector<2x1xf32> to vector<2x2048xf32>
      %47 = vector.broadcast %45 : vector<1x2048xf32> to vector<2x2048xf32>
      %48 = arith.mulf %46, %47 : vector<2x2048xf32>
      %49 = arith.addf %43, %48 : vector<2x2048xf32>
      %50 = arith.truncf %30 : vector<2x960xf32> to vector<2x960xbf16>
      %51 = arith.truncf %49 : vector<2x2048xf32> to vector<2x2048xbf16>
      %c0_23 = arith.constant 0 : index
      %c0_24 = arith.constant 0 : index
      %52 = vector.load %arg5[%c0_23, %c0_24] : memref<960x256xbf16, #tpu.memory_space<vmem>>, vector<960x256xbf16>
      %cst_25 = arith.constant dense<0.000000e+00> : vector<2x256xf32>
      %53 = tpu.matmul %50, %52, %cst_25 {dimension_numbers = #tpu.dot_dimension_numbers<[1], [0], [0], [1], [0, 0, 1, 1], [], []>} : vector<2x960xbf16>, vector<960x256xbf16>, vector<2x256xf32> -> vector<2x256xf32>
      %c0_26 = arith.constant 0 : index
      %c0_27 = arith.constant 0 : index
      %54 = vector.load %arg6[%c0_26, %c0_27] : memref<2048x256xbf16, #tpu.memory_space<vmem>>, vector<2048x256xbf16>
      %cst_28 = arith.constant dense<0.000000e+00> : vector<2x256xf32>
      %55 = tpu.matmul %51, %54, %cst_28 {dimension_numbers = #tpu.dot_dimension_numbers<[1], [0], [0], [1], [0, 0, 1, 1], [], []>} : vector<2x2048xbf16>, vector<2048x256xbf16>, vector<2x256xf32> -> vector<2x256xf32>
      %56 = arith.addf %53, %55 : vector<2x256xf32>
      %c0_29 = arith.constant 0 : index
      %c0_30 = arith.constant 0 : index
      %57 = vector.load %arg7[%c0_29, %c0_30] : memref<1x256xf32, #tpu.memory_space<vmem>>, vector<1x256xf32>
      %58 = vector.broadcast %57 : vector<1x256xf32> to vector<2x256xf32>
      %59 = arith.addf %56, %58 : vector<2x256xf32>
      %cst_31 = arith.constant 0.000000e+00 : f32
      %60 = vector.broadcast %cst_31 : f32 to vector<2x256xf32>
      %61 = arith.maximumf %59, %60 : vector<2x256xf32>
      %62 = arith.truncf %61 : vector<2x256xf32> to vector<2x256xbf16>
      %c0_32 = arith.constant 0 : index
      %c0_33 = arith.constant 0 : index
      %63 = vector.load %arg8[%c0_32, %c0_33] : memref<256x128xbf16, #tpu.memory_space<vmem>>, vector<256x128xbf16>
      %cst_34 = arith.constant dense<0.000000e+00> : vector<2x128xf32>
      %64 = tpu.matmul %62, %63, %cst_34 {dimension_numbers = #tpu.dot_dimension_numbers<[1], [0], [0], [1], [0, 0, 1, 1], [], []>} : vector<2x256xbf16>, vector<256x128xbf16>, vector<2x128xf32> -> vector<2x128xf32>
      %c0_35 = arith.constant 0 : index
      %c0_36 = arith.constant 0 : index
      %65 = vector.load %arg9[%c0_35, %c0_36] : memref<1x128xf32, #tpu.memory_space<vmem>>, vector<1x128xf32>
      %66 = vector.broadcast %65 : vector<1x128xf32> to vector<2x128xf32>
      %67 = arith.addf %64, %66 : vector<2x128xf32>
      %cst_37 = arith.constant 0.000000e+00 : f32
      %68 = vector.broadcast %cst_37 : f32 to vector<2x128xf32>
      %69 = arith.maximumf %67, %68 : vector<2x128xf32>
      %70 = arith.truncf %69 : vector<2x128xf32> to vector<2x128xbf16>
      %c0_38 = arith.constant 0 : index
      %c0_39 = arith.constant 0 : index
      %71 = vector.load %arg10[%c0_38, %c0_39] : memref<128x64xbf16, #tpu.memory_space<vmem>>, vector<128x64xbf16>
      %cst_40 = arith.constant dense<0.000000e+00> : vector<2x64xf32>
      %72 = tpu.matmul %70, %71, %cst_40 {dimension_numbers = #tpu.dot_dimension_numbers<[1], [0], [0], [1], [0, 0, 1, 1], [], []>} : vector<2x128xbf16>, vector<128x64xbf16>, vector<2x64xf32> -> vector<2x64xf32>
      %c0_41 = arith.constant 0 : index
      %c0_42 = arith.constant 0 : index
      %73 = vector.load %arg11[%c0_41, %c0_42] : memref<1x64xf32, #tpu.memory_space<vmem>>, vector<1x64xf32>
      %74 = vector.broadcast %73 : vector<1x64xf32> to vector<2x64xf32>
      %75 = arith.addf %72, %74 : vector<2x64xf32>
      %cst_43 = arith.constant 0.000000e+00 : f32
      %76 = vector.broadcast %cst_43 : f32 to vector<2x64xf32>
      %77 = arith.maximumf %75, %76 : vector<2x64xf32>
      %78 = arith.truncf %77 : vector<2x64xf32> to vector<2x64xbf16>
      %c0_44 = arith.constant 0 : index
      %c0_45 = arith.constant 0 : index
      %79 = vector.load %arg12[%c0_44, %c0_45] : memref<64x32xbf16, #tpu.memory_space<vmem>>, vector<64x32xbf16>
      %cst_46 = arith.constant dense<0.000000e+00> : vector<2x32xf32>
      %80 = tpu.matmul %78, %79, %cst_46 {dimension_numbers = #tpu.dot_dimension_numbers<[1], [0], [0], [1], [0, 0, 1, 1], [], []>} : vector<2x64xbf16>, vector<64x32xbf16>, vector<2x32xf32> -> vector<2x32xf32>
      %c0_47 = arith.constant 0 : index
      %c0_48 = arith.constant 0 : index
      %81 = vector.load %arg13[%c0_47, %c0_48] : memref<1x32xf32, #tpu.memory_space<vmem>>, vector<1x32xf32>
      %82 = vector.broadcast %81 : vector<1x32xf32> to vector<2x32xf32>
      %83 = arith.addf %80, %82 : vector<2x32xf32>
      %cst_49 = arith.constant 0.000000e+00 : f32
      %84 = vector.broadcast %cst_49 : f32 to vector<2x32xf32>
      %85 = arith.maximumf %83, %84 : vector<2x32xf32>
      %c0_50 = arith.constant 0 : index
      %c0_51 = arith.constant 0 : index
      %86 = vector.load %arg14[%c0_50, %c0_51] : memref<32x128xf32, #tpu.memory_space<vmem>>, vector<32x128xf32>
      %cst_52 = arith.constant dense<0.000000e+00> : vector<2x128xf32>
      %87 = tpu.matmul %85, %86, %cst_52 {dimension_numbers = #tpu.dot_dimension_numbers<[1], [0], [0], [1], [0, 0, 1, 1], [], []>} : vector<2x32xf32>, vector<32x128xf32>, vector<2x128xf32> -> vector<2x128xf32>
      %c0_53 = arith.constant 0 : index
      %c0_54 = arith.constant 0 : index
      %88 = vector.load %arg15[%c0_53, %c0_54] : memref<1x128xf32, #tpu.memory_space<vmem>>, vector<1x128xf32>
      %89 = vector.broadcast %88 : vector<1x128xf32> to vector<2x128xf32>
      %90 = arith.addf %87, %89 : vector<2x128xf32>
      %c0_55 = arith.constant 0 : index
      %c0_56 = arith.constant 0 : index
      %91 = vector.load %arg16[%c0_55, %c0_56] : memref<2x128xf32, #tpu.memory_space<vmem>>, vector<2x128xf32>
      tpu.vector_store %arg16[%c0_55, %c0_56], %90 {strides = array<i32>} : memref<2x128xf32, #tpu.memory_space<vmem>>, vector<2x128xf32>,
    } else {
    }
    return
  }
  func.func @transform_0(%arg0: i32, %arg1: i32) -> (i32, i32, i32) {
    %c0_i32 = arith.constant 0 : i32
    %c0_i32_0 = arith.constant 0 : i32
    return %arg0, %c0_i32, %arg1 : i32, i32, i32
  }
  func.func @transform_1(%arg0: i32, %arg1: i32) -> (i32, i32) {
    %c0_i32 = arith.constant 0 : i32
    %c0_i32_0 = arith.constant 0 : i32
    %c0_i32_1 = arith.constant 0 : i32
    return %c0_i32, %c0_i32_0 : i32, i32
  }
  func.func @transform_2(%arg0: i32, %arg1: i32) -> (i32, i32) {
    %c0_i32 = arith.constant 0 : i32
    %c0_i32_0 = arith.constant 0 : i32
    %c0_i32_1 = arith.constant 0 : i32
    return %c0_i32, %c0_i32_0 : i32, i32
  }
  func.func @transform_3(%arg0: i32, %arg1: i32) -> (i32, i32) {
    %c0_i32 = arith.constant 0 : i32
    %c0_i32_0 = arith.constant 0 : i32
    %c0_i32_1 = arith.constant 0 : i32
    return %c0_i32, %c0_i32_0 : i32, i32
  }
  func.func @transform_4(%arg0: i32, %arg1: i32) -> (i32, i32) {
    %c0_i32 = arith.constant 0 : i32
    %c0_i32_0 = arith.constant 0 : i32
    %c0_i32_1 = arith.constant 0 : i32
    return %c0_i32, %c0_i32_0 : i32, i32
  }
  func.func @transform_5(%arg0: i32, %arg1: i32) -> (i32, i32) {
    %c0_i32 = arith.constant 0 : i32
    %c0_i32_0 = arith.constant 0 : i32
    %c0_i32_1 = arith.constant 0 : i32
    return %c0_i32, %c0_i32_0 : i32, i32
  }
  func.func @transform_6(%arg0: i32, %arg1: i32) -> (i32, i32) {
    %c0_i32 = arith.constant 0 : i32
    %c0_i32_0 = arith.constant 0 : i32
    %c0_i32_1 = arith.constant 0 : i32
    return %c0_i32, %c0_i32_0 : i32, i32
  }
  func.func @transform_7(%arg0: i32, %arg1: i32) -> (i32, i32) {
    %c0_i32 = arith.constant 0 : i32
    %c0_i32_0 = arith.constant 0 : i32
    %c0_i32_1 = arith.constant 0 : i32
    return %c0_i32, %c0_i32_0 : i32, i32
  }
  func.func @transform_8(%arg0: i32, %arg1: i32) -> (i32, i32) {
    %c0_i32 = arith.constant 0 : i32
    %c0_i32_0 = arith.constant 0 : i32
    %c0_i32_1 = arith.constant 0 : i32
    return %c0_i32, %c0_i32_0 : i32, i32
  }
  func.func @transform_9(%arg0: i32, %arg1: i32) -> (i32, i32) {
    %c0_i32 = arith.constant 0 : i32
    %c0_i32_0 = arith.constant 0 : i32
    %c0_i32_1 = arith.constant 0 : i32
    return %c0_i32, %c0_i32_0 : i32, i32
  }
  func.func @transform_10(%arg0: i32, %arg1: i32) -> (i32, i32) {
    %c0_i32 = arith.constant 0 : i32
    %c0_i32_0 = arith.constant 0 : i32
    %c0_i32_1 = arith.constant 0 : i32
    return %c0_i32, %c0_i32_0 : i32, i32
  }
  func.func @transform_11(%arg0: i32, %arg1: i32) -> (i32, i32) {
    %c0_i32 = arith.constant 0 : i32
    %c0_i32_0 = arith.constant 0 : i32
    %c0_i32_1 = arith.constant 0 : i32
    return %c0_i32, %c0_i32_0 : i32, i32
  }
  func.func @transform_12(%arg0: i32, %arg1: i32) -> (i32, i32) {
    %c0_i32 = arith.constant 0 : i32
    %c0_i32_0 = arith.constant 0 : i32
    %c0_i32_1 = arith.constant 0 : i32
    return %c0_i32, %c0_i32_0 : i32, i32
  }
  func.func @transform_13(%arg0: i32, %arg1: i32) -> (i32, i32) {
    %c0_i32 = arith.constant 0 : i32
    %c0_i32_0 = arith.constant 0 : i32
    %c0_i32_1 = arith.constant 0 : i32
    return %c0_i32, %c0_i32_0 : i32, i32
  }
  func.func @transform_14(%arg0: i32, %arg1: i32) -> (i32, i32) {
    %c0_i32 = arith.constant 0 : i32
    %c0_i32_0 = arith.constant 0 : i32
    return %arg0, %c0_i32 : i32, i32
  }
}

</mosaic_0001>

<llo_original>
// kernel: tpu_custom_call.1
$region0: #{tpu_custom_call.1}
  #allocation0 [shape = 'u32[]', space=smem, size = 0x4, offset = 0x4, fixed_abs, tag = 'smem constant byte address 0x4 - core index']
  #allocation1 [shape = 'u32[144,128]{1,0:T(1,128)}', space=vmem, size = 0x12000, scoped, tag = 'internal scratch']
  #allocation2 [shape = 'f32[2,3]{1,0:T(2,128)}', space=vmem, size = 0x400, scoped, tag = 'scratch operand']
  %s0 = inlined_call_operand.vmem [shape: f32[2,3,256], index: 0, kind: input, shape index: {}]
  %s1 = inlined_call_operand.hbm [shape: f32[3,960], index: 1, kind: input, shape index: {}]
  %s2 = inlined_call_operand.vmem [shape: f32[3,2048], index: 2, kind: input, shape index: {}]
  %s3 = inlined_call_operand.hbm [shape: bf16[960,256], index: 3, kind: input, shape index: {}]
  %s4 = inlined_call_operand.hbm [shape: bf16[2048,256], index: 4, kind: input, shape index: {}]
  %s5 = inlined_call_operand.hbm [shape: f32[1,256], index: 5, kind: input, shape index: {}]
  %s6 = inlined_call_operand.vmem [shape: bf16[256,128], index: 6, kind: input, shape index: {}]
  %s7 = inlined_call_operand.vmem [shape: f32[1,128], index: 7, kind: input, shape index: {}]
  %s8 = inlined_call_operand.vmem [shape: bf16[128,64], index: 8, kind: input, shape index: {}]
  %s9 = inlined_call_operand.hbm [shape: f32[1,64], index: 9, kind: input, shape index: {}]
  %s10 = inlined_call_operand.vmem [shape: bf16[64,32], index: 10, kind: input, shape index: {}]
  %s11 = inlined_call_operand.vmem [shape: f32[1,32], index: 11, kind: input, shape index: {}]
  %s12 = inlined_call_operand.hbm [shape: f32[32,128], index: 12, kind: input, shape index: {}]
  %s13 = inlined_call_operand.vmem [shape: f32[1,128], index: 13, kind: input, shape index: {}]
  %s14 = inlined_call_operand.hbm [shape: f32[2,128], index: 14, kind: output, shape index: {}]
  %s15 = sld [smem:[#allocation0]]
  $region98: #{tpu_custom_call.1} parent=0
    _
  %s17 = ssub.s32 1, %s15
  %s18 = scalar_select 0, %s17, %s15
  $region1: #{tpu_custom_call.1} parent=0
    #allocation3 [shape = 'u8[16384]{0}', space=vmem, size = 0x4000, scoped, tag = 'input window, operand 1, single buffered']
    #allocation4 [shape = 's32[1]{0}', space=sflag, size = 0x4, scoped, tag = 'scoped memory for tpu_custom_call.1']
    #allocation5 [shape = 's32[1]{0}', space=sflag, size = 0x4, scoped, tag = 'scoped memory for tpu_custom_call.1']
    #allocation6 [shape = 'u8[491520]{0}', space=vmem, size = 0x78000, scoped, tag = 'input window, operand 3, single buffered']
    #allocation7 [shape = 's32[1]{0}', space=sflag, size = 0x4, scoped, tag = 'scoped memory for tpu_custom_call.1']
    #allocation8 [shape = 'u8[1048576]{0}', space=vmem, size = 0x100000, scoped, tag = 'input window, operand 4, single buffered']
    #allocation9 [shape = 'u8[1024]{0}', space=vmem, size = 0x400, scoped, tag = 'input window, operand 5, single buffered']
    #allocation10 [shape = 's32[1]{0}', space=sflag, size = 0x4, scoped, tag = 'scoped memory for tpu_custom_call.1']
    #allocation11 [shape = 'u8[512]{0}', space=vmem, size = 0x400, scoped, tag = 'input window, operand 9, single buffered']
    #allocation12 [shape = 'u8[16384]{0}', space=vmem, size = 0x4000, scoped, tag = 'input window, operand 12, single buffered']
    #allocation13 [shape = 's32[1]{0}', space=sflag, size = 0x4, scoped, tag = 'scoped memory for tpu_custom_call.1']
    #allocation14 [shape = 'u8[1024]{0}', space=vmem, size = 0x400, scoped, tag = 'output window, operand 0, single buffered']
    %19 = vsyncpa [#allocation4], 0
    %20 = vsyncpa [#allocation7], 0
    %21 = vsyncpa [#allocation10], 0
    %22 = vsyncpa [#allocation13], 0
    %23 = vsyncpa [#allocation5], 0
    // Predicated region
    $region2: #{tpu_custom_call.1} parent=1 // pred_check
      _
    $region3: #{tpu_custom_call.1} parent=1 // pred_check_branch
      %25 = sbr.rel (0) target = $region5
    $region4: #{tpu_custom_call.1} parent=1 // pred_region
      _
    $region5: #{tpu_custom_call.1} parent=1 // pred_fallthru
      _
    // Predicated region
    $region6: #{tpu_custom_call.1} parent=1 // pred_check
      _
    $region7: #{tpu_custom_call.1} parent=1 // pred_check_branch
      %27 = sbr.rel (0) target = $region9
    $region8: #{tpu_custom_call.1} parent=1 // pred_region
      %s29 = ssub.s32 512, 512
      %30 = vsyncadd [#allocation4], %s29
      %s32 = sshll.u32 [#allocation3], 4
      %s33 = int_to_ptr.vmem [resolvable:$true] %s32
      %35 = dma.hbm_to_vmem [thread:$0]  %s1, 512, %s33, [#allocation4]
    $region9: #{tpu_custom_call.1} parent=1 // pred_fallthru
      _
    // Predicated region
    $region10: #{tpu_custom_call.1} parent=1 // pred_check
      _
    $region11: #{tpu_custom_call.1} parent=1 // pred_check_branch
      %37 = sbr.rel (0) target = $region13
    $region12: #{tpu_custom_call.1} parent=1 // pred_region
      _
    $region13: #{tpu_custom_call.1} parent=1 // pred_fallthru
      _
    // Predicated region
    $region14: #{tpu_custom_call.1} parent=1 // pred_check
      _
    $region15: #{tpu_custom_call.1} parent=1 // pred_check_branch
      %39 = sbr.rel (0) target = $region17
    $region16: #{tpu_custom_call.1} parent=1 // pred_region
      %s41 = ssub.s32 15360, 15360
      %42 = vsyncadd [#allocation7], %s41
      %s43 = sshll.u32 [#allocation6], 4
      %s44 = int_to_ptr.vmem [resolvable:$true] %s43
      %49 = dma.hbm_to_vmem [thread:$0]  %s3, 15360, %s44, [#allocation7], 128, 128, 8
    $region17: #{tpu_custom_call.1} parent=1 // pred_fallthru
      _
    // Predicated region
    $region18: #{tpu_custom_call.1} parent=1 // pred_check
      _
    $region19: #{tpu_custom_call.1} parent=1 // pred_check_branch
      %51 = sbr.rel (0) target = $region21
    $region20: #{tpu_custom_call.1} parent=1 // pred_region
      %s53 = ssub.s32 32768, 32768
      %54 = vsyncadd [#allocation7], %s53
      %s55 = sshll.u32 [#allocation8], 4
      %s56 = int_to_ptr.vmem [resolvable:$true] %s55
      %61 = dma.hbm_to_vmem [thread:$0]  %s4, 32768, %s56, [#allocation7], 128, 128, 8
    $region21: #{tpu_custom_call.1} parent=1 // pred_fallthru
      _
    // Predicated region
    $region22: #{tpu_custom_call.1} parent=1 // pred_check
      _
    $region23: #{tpu_custom_call.1} parent=1 // pred_check_branch
      %63 = sbr.rel (0) target = $region25
    $region24: #{tpu_custom_call.1} parent=1 // pred_region
      %s65 = ssub.s32 32, 32
      %66 = vsyncadd [#allocation10], %s65
      %s68 = sshll.u32 [#allocation9], 4
      %s69 = int_to_ptr.vmem [resolvable:$true] %s68
      %71 = dma.hbm_to_vmem [thread:$0]  %s5, 32, %s69, [#allocation10]
    $region25: #{tpu_custom_call.1} parent=1 // pred_fallthru
      _
    // Predicated region
    $region26: #{tpu_custom_call.1} parent=1 // pred_check
      _
    $region27: #{tpu_custom_call.1} parent=1 // pred_check_branch
      %73 = sbr.rel (0) target = $region29
    $region28: #{tpu_custom_call.1} parent=1 // pred_region
      _
    $region29: #{tpu_custom_call.1} parent=1 // pred_fallthru
      _
    // Predicated region
    $region30: #{tpu_custom_call.1} parent=1 // pred_check
      _
    $region31: #{tpu_custom_call.1} parent=1 // pred_check_branch
      %75 = sbr.rel (0) target = $region33
    $region32: #{tpu_custom_call.1} parent=1 // pred_region
      _
    $region33: #{tpu_custom_call.1} parent=1 // pred_fallthru
      _
    // Predicated region
    $region34: #{tpu_custom_call.1} parent=1 // pred_check
      _
    $region35: #{tpu_custom_call.1} parent=1 // pred_check_branch
      %77 = sbr.rel (0) target = $region37
    $region36: #{tpu_custom_call.1} parent=1 // pred_region
      _
    $region37: #{tpu_custom_call.1} parent=1 // pred_fallthru
      _
    // Predicated region
    $region38: #{tpu_custom_call.1} parent=1 // pred_check
      _
    $region39: #{tpu_custom_call.1} parent=1 // pred_check_branch
      %79 = sbr.rel (0) target = $region41
    $region40: #{tpu_custom_call.1} parent=1 // pred_region
      %s81 = ssub.s32 16, 16
      %82 = vsyncadd [#allocation10], %s81
      %s84 = sshll.u32 [#allocation11], 4
      %s85 = int_to_ptr.vmem [resolvable:$true] %s84
      %87 = dma.hbm_to_vmem [thread:$0]  %s9, 16, %s85, [#allocation10]
    $region41: #{tpu_custom_call.1} parent=1 // pred_fallthru
      _
    // Predicated region
    $region42: #{tpu_custom_call.1} parent=1 // pred_check
      _
    $region43: #{tpu_custom_call.1} parent=1 // pred_check_branch
      %89 = sbr.rel (0) target = $region45
    $region44: #{tpu_custom_call.1} parent=1 // pred_region
      _
    $region45: #{tpu_custom_call.1} parent=1 // pred_fallthru
      _
    // Predicated region
    $region46: #{tpu_custom_call.1} parent=1 // pred_check
      _
    $region47: #{tpu_custom_call.1} parent=1 // pred_check_branch
      %91 = sbr.rel (0) target = $region49
    $region48: #{tpu_custom_call.1} parent=1 // pred_region
      _
    $region49: #{tpu_custom_call.1} parent=1 // pred_fallthru
      _
    // Predicated region
    $region50: #{tpu_custom_call.1} parent=1 // pred_check
      _
    $region51: #{tpu_custom_call.1} parent=1 // pred_check_branch
      %93 = sbr.rel (0) target = $region53
    $region52: #{tpu_custom_call.1} parent=1 // pred_region
      %s95 = ssub.s32 512, 512
      %96 = vsyncadd [#allocation13], %s95
      %s97 = sshll.u32 [#allocation12], 4
      %s98 = int_to_ptr.vmem [resolvable:$true] %s97
      %103 = dma.hbm_to_vmem [thread:$0]  %s12, 512, %s98, [#allocation13], 128, 128, 8
    $region53: #{tpu_custom_call.1} parent=1 // pred_fallthru
      _
    // Predicated region
    $region54: #{tpu_custom_call.1} parent=1 // pred_check
      _
    $region55: #{tpu_custom_call.1} parent=1 // pred_check_branch
      %105 = sbr.rel (0) target = $region57
    $region56: #{tpu_custom_call.1} parent=1 // pred_region
      _
    $region57: #{tpu_custom_call.1} parent=1 // pred_fallthru
      _
    // Predicated region
    $region58: #{tpu_custom_call.1} parent=1 // pred_check
      _
    $region59: #{tpu_custom_call.1} parent=1 // pred_check_branch
      %107 = sbr.rel (0) target = $region61
    $region60: #{tpu_custom_call.1} parent=1 // pred_region
      %108 = dma.done [#allocation4], 512
    $region61: #{tpu_custom_call.1} parent=1 // pred_fallthru
      _
    // Predicated region
    $region62: #{tpu_custom_call.1} parent=1 // pred_check
      _
    $region63: #{tpu_custom_call.1} parent=1 // pred_check_branch
      %110 = sbr.rel (0) target = $region65
    $region64: #{tpu_custom_call.1} parent=1 // pred_region
      %111 = dma.done [#allocation7], 15360
    $region65: #{tpu_custom_call.1} parent=1 // pred_fallthru
      _
    // Predicated region
    $region66: #{tpu_custom_call.1} parent=1 // pred_check
      _
    $region67: #{tpu_custom_call.1} parent=1 // pred_check_branch
      %113 = sbr.rel (0) target = $region69
    $region68: #{tpu_custom_call.1} parent=1 // pred_region
      %114 = dma.done [#allocation7], 32768
    $region69: #{tpu_custom_call.1} parent=1 // pred_fallthru
      _
    // Predicated region
    $region70: #{tpu_custom_call.1} parent=1 // pred_check
      _
    $region71: #{tpu_custom_call.1} parent=1 // pred_check_branch
      %116 = sbr.rel (0) target = $region73
    $region72: #{tpu_custom_call.1} parent=1 // pred_region
      %117 = dma.done [#allocation10], 32
    $region73: #{tpu_custom_call.1} parent=1 // pred_fallthru
      _
    // Predicated region
    $region74: #{tpu_custom_call.1} parent=1 // pred_check
      _
    $region75: #{tpu_custom_call.1} parent=1 // pred_check_branch
      %119 = sbr.rel (0) target = $region77
    $region76: #{tpu_custom_call.1} parent=1 // pred_region
      %120 = dma.done [#allocation10], 16
    $region77: #{tpu_custom_call.1} parent=1 // pred_fallthru
      _
    // Predicated region
    $region78: #{tpu_custom_call.1} parent=1 // pred_check
      _
    $region79: #{tpu_custom_call.1} parent=1 // pred_check_branch
      %122 = sbr.rel (0) target = $region81
    $region80: #{tpu_custom_call.1} parent=1 // pred_region
      %123 = dma.done [#allocation13], 512
    $region81: #{tpu_custom_call.1} parent=1 // pred_fallthru
      _
    %p125 = scmp.eq.s32.totalorder 0, 0
    // Predicated region
    $region82: #{tpu_custom_call.1} parent=1 // pred_check
      %p126 = pneg %p125
    $region83: #{tpu_custom_call.1} parent=1 // pred_check_branch
      %128 = sbr.rel (%p126) target = $region85
    $region84: #{tpu_custom_call.1} parent=1 // pred_region
      %vm129 = vcmask 17408
      %130 = vst.msk [vmem:[#allocation2] sm:$0x3] %vm129, 0.0
    $region85: #{tpu_custom_call.1} parent=1 // pred_fallthru
      _
    %v131 = vld [vmem:[%s0] sm:$0x77]
    %v132 = vld [vmem:[%s0 + $0x8] sm:$0x77]
    %v133 = vld [vmem:[#allocation2] sm:$0x3]
    %v136 = vcombine.high %v131, %v131
    %v137 = vcombine.high %v132, %v132
    %vm140 = vcmask 1042432
    %v141 = vsel %vm140, %v131, 0.0
    %v142 = vsel %vm140, %v136, 0.0
    %v143 = vadd.f32 %v141, %v142
    %144 = vadd.xlane.f32.xlu0 %v143
    %v145 = vpop.xlane.xlu0 %144
    %v146 = vsel %vm140, %v132, 0.0
    %v147 = vsel %vm140, %v137, 0.0
    %v148 = vadd.f32 %v146, %v147
    %149 = vadd.xlane.f32.xlu0 %v148
    %v150 = vpop.xlane.xlu0 %149
    %v153 = vlaneseq
    %v154 = vand.u32 %v153, 127
    %v155 = vlaneseq
    %v156 = vshrl.u32 %v155, 7
    %v157 = vsub.s32 %v154, %v156
    %v158 = vrot.slane %v145, %v157
    %v159 = vlaneseq
    %v160 = vshrl.u32 %v159, 7
    %v161 = vsub.s32 %v154, %v160
    %v162 = vrot.slane %v150, %v161
    %vm163 = vcmask 1041409
    %v164 = vsel %vm163, %v162, %v158
    %v166 = vadd.f32 %v133, %v164
    %vm167 = vcmask 17408
    %168 = vst.msk [vmem:[#allocation2] sm:$0x3] %vm167, %v166
    // Predicated region
    $region86: #{tpu_custom_call.1} parent=1 // pred_check
      %p169 = pneg %p125
    $region87: #{tpu_custom_call.1} parent=1 // pred_check_branch
      %171 = sbr.rel (%p169) target = $region89
    $region88: #{tpu_custom_call.1} parent=1 // pred_region
      %v172 = vld [vmem:[#allocation2] sm:$0x3]
      %v173 = vld [vmem:[#allocation3] ss:$4 sm:$0xff]
      %175 = vset.pattern.permute.xlu0 0
      %176 = vperm.xlu0 %175, %v172
      %v177 = vpop.permute.xlu0 %176
      %v180 = vlaneseq
      %v181 = vshrl.u32 %v180, 7
      %v182 = vsub.s32 0, %v181
      %v183 = vrot.slane %v173, %v182
      %v184 = vlaneseq
      %v185 = vshrl.u32 %v184, 7
      %v186 = vsub.s32 1, %v185
      %v187 = vrot.slane %v173, %v186
      %v188 = vlaneseq
      %v189 = vshrl.u32 %v188, 7
      %v190 = vsub.s32 2, %v189
      %v191 = vrot.slane %v173, %v190
      %v192 = vlaneseq
      %v193 = vshrl.u32 %v192, 7
      %v194 = vsub.s32 3, %v193
      %v195 = vrot.slane %v173, %v194
      %v196 = vlaneseq
      %v197 = vshrl.u32 %v196, 7
      %v198 = vsub.s32 4, %v197
      %v199 = vrot.slane %v173, %v198
      %v200 = vlaneseq
      %v201 = vshrl.u32 %v200, 7
      %v202 = vsub.s32 5, %v201
      %v203 = vrot.slane %v173, %v202
      %v204 = vlaneseq
      %v205 = vshrl.u32 %v204, 7
      %v206 = vsub.s32 6, %v205
      %v207 = vrot.slane %v173, %v206
      %v208 = vlaneseq
      %v209 = vshrl.u32 %v208, 7
      %v210 = vsub.s32 7, %v209
      %v211 = vrot.slane %v173, %v210
      %v220 = vmul.f32 %v177, %v183
      %v221 = vmul.f32 %v177, %v187
      %v222 = vmul.f32 %v177, %v191
      %v223 = vmul.f32 %v177, %v195
      %v224 = vmul.f32 %v177, %v199
      %v225 = vmul.f32 %v177, %v203
      %v226 = vmul.f32 %v177, %v207
      %v227 = vmul.f32 %v177, %v211
      %v228 = vadd.f32 %v220, 0.0
      %v229 = vadd.f32 %v221, 0.0
      %v230 = vadd.f32 %v222, 0.0
      %v231 = vadd.f32 %v223, 0.0
      %v232 = vadd.f32 %v224, 0.0
      %v233 = vadd.f32 %v225, 0.0
      %v234 = vadd.f32 %v226, 0.0
      %v235 = vadd.f32 %v227, 0.0
      %s236 = scalar_lea.vmem [#allocation3], 1
      %v237 = vld [vmem:[%s236] ss:$4 sm:$0xff]
      %238 = vset.pattern.permute.xlu0 1
      %239 = vperm.xlu0 %238, %v172
      %v240 = vpop.permute.xlu0 %239
      %v243 = vlaneseq
      %v244 = vshrl.u32 %v243, 7
      %v245 = vsub.s32 0, %v244
      %v246 = vrot.slane %v237, %v245
      %v247 = vlaneseq
      %v248 = vshrl.u32 %v247, 7
      %v249 = vsub.s32 1, %v248
      %v250 = vrot.slane %v237, %v249
      %v251 = vlaneseq
      %v252 = vshrl.u32 %v251, 7
      %v253 = vsub.s32 2, %v252
      %v254 = vrot.slane %v237, %v253
      %v255 = vlaneseq
      %v256 = vshrl.u32 %v255, 7
      %v257 = vsub.s32 3, %v256
      %v258 = vrot.slane %v237, %v257
      %v259 = vlaneseq
      %v260 = vshrl.u32 %v259, 7
      %v261 = vsub.s32 4, %v260
      %v262 = vrot.slane %v237, %v261
      %v263 = vlaneseq
      %v264 = vshrl.u32 %v263, 7
      %v265 = vsub.s32 5, %v264
      %v266 = vrot.slane %v237, %v265
      %v267 = vlaneseq
      %v268 = vshrl.u32 %v267, 7
      %v269 = vsub.s32 6, %v268
      %v270 = vrot.slane %v237, %v269
      %v271 = vlaneseq
      %v272 = vshrl.u32 %v271, 7
      %v273 = vsub.s32 7, %v272
      %v274 = vrot.slane %v237, %v273
      %v283 = vmul.f32 %v240, %v246
      %v284 = vmul.f32 %v240, %v250
      %v285 = vmul.f32 %v240, %v254
      %v286 = vmul.f32 %v240, %v258
      %v287 = vmul.f32 %v240, %v262
      %v288 = vmul.f32 %v240, %v266
      %v289 = vmul.f32 %v240, %v270
      %v290 = vmul.f32 %v240, %v274
      %v291 = vadd.f32 %v228, %v283
      %v292 = vadd.f32 %v229, %v284
      %v293 = vadd.f32 %v230, %v285
      %v294 = vadd.f32 %v231, %v286
      %v295 = vadd.f32 %v232, %v287
      %v296 = vadd.f32 %v233, %v288
      %v297 = vadd.f32 %v234, %v289
      %v298 = vadd.f32 %v235, %v290
      %s299 = scalar_lea.vmem [#allocation3], 2
      %v300 = vld [vmem:[%s299] ss:$4 sm:$0xff]
      %301 = vset.pattern.permute.xlu0 2
      %302 = vperm.xlu0 %301, %v172
      %v303 = vpop.permute.xlu0 %302
      %v306 = vlaneseq
      %v307 = vshrl.u32 %v306, 7
      %v308 = vsub.s32 0, %v307
      %v309 = vrot.slane %v300, %v308
      %v310 = vlaneseq
      %v311 = vshrl.u32 %v310, 7
      %v312 = vsub.s32 1, %v311
      %v313 = vrot.slane %v300, %v312
      %v314 = vlaneseq
      %v315 = vshrl.u32 %v314, 7
      %v316 = vsub.s32 2, %v315
      %v317 = vrot.slane %v300, %v316
      %v318 = vlaneseq
      %v319 = vshrl.u32 %v318, 7
      %v320 = vsub.s32 3, %v319
      %v321 = vrot.slane %v300, %v320
      %v322 = vlaneseq
      %v323 = vshrl.u32 %v322, 7
      %v324 = vsub.s32 4, %v323
      %v325 = vrot.slane %v300, %v324
      %v326 = vlaneseq
      %v327 = vshrl.u32 %v326, 7
      %v328 = vsub.s32 5, %v327
      %v329 = vrot.slane %v300, %v328
      %v330 = vlaneseq
      %v331 = vshrl.u32 %v330, 7
      %v332 = vsub.s32 6, %v331
      %v333 = vrot.slane %v300, %v332
      %v334 = vlaneseq
      %v335 = vshrl.u32 %v334, 7
      %v336 = vsub.s32 7, %v335
      %v337 = vrot.slane %v300, %v336
      %v346 = vmul.f32 %v303, %v309
      %v347 = vmul.f32 %v303, %v313
      %v348 = vmul.f32 %v303, %v317
      %v349 = vmul.f32 %v303, %v321
      %v350 = vmul.f32 %v303, %v325
      %v351 = vmul.f32 %v303, %v329
      %v352 = vmul.f32 %v303, %v333
      %v353 = vmul.f32 %v303, %v337
      %v354 = vadd.f32 %v291, %v346
      %v355 = vadd.f32 %v292, %v347
      %v356 = vadd.f32 %v293, %v348
      %v357 = vadd.f32 %v294, %v349
      %v358 = vadd.f32 %v295, %v350
      %v359 = vadd.f32 %v296, %v351
      %v360 = vadd.f32 %v297, %v352
      %v361 = vadd.f32 %v298, %v353
      %v362 = vld [vmem:[%s2] ss:$4 sm:$0xff]
      %s363 = scalar_lea.vmem %s2, 32
      %v364 = vld [vmem:[%s363] ss:$4 sm:$0xff]
      %v367 = vlaneseq
      %v368 = vshrl.u32 %v367, 7
      %v369 = vsub.s32 0, %v368
      %v370 = vrot.slane %v362, %v369
      %v371 = vlaneseq
      %v372 = vshrl.u32 %v371, 7
      %v373 = vsub.s32 1, %v372
      %v374 = vrot.slane %v362, %v373
      %v375 = vlaneseq
      %v376 = vshrl.u32 %v375, 7
      %v377 = vsub.s32 2, %v376
      %v378 = vrot.slane %v362, %v377
      %v379 = vlaneseq
      %v380 = vshrl.u32 %v379, 7
      %v381 = vsub.s32 3, %v380
      %v382 = vrot.slane %v362, %v381
      %v383 = vlaneseq
      %v384 = vshrl.u32 %v383, 7
      %v385 = vsub.s32 4, %v384
      %v386 = vrot.slane %v362, %v385
      %v387 = vlaneseq
      %v388 = vshrl.u32 %v387, 7
      %v389 = vsub.s32 5, %v388
      %v390 = vrot.slane %v362, %v389
      %v391 = vlaneseq
      %v392 = vshrl.u32 %v391, 7
      %v393 = vsub.s32 6, %v392
      %v394 = vrot.slane %v362, %v393
      %v395 = vlaneseq
      %v396 = vshrl.u32 %v395, 7
      %v397 = vsub.s32 7, %v396
      %v398 = vrot.slane %v362, %v397
      %v399 = vlaneseq
      %v400 = vshrl.u32 %v399, 7
      %v401 = vsub.s32 0, %v400
      %v402 = vrot.slane %v364, %v401
      %v403 = vlaneseq
      %v404 = vshrl.u32 %v403, 7
      %v405 = vsub.s32 1, %v404
      %v406 = vrot.slane %v364, %v405
      %v407 = vlaneseq
      %v408 = vshrl.u32 %v407, 7
      %v409 = vsub.s32 2, %v408
      %v410 = vrot.slane %v364, %v409
      %v411 = vlaneseq
      %v412 = vshrl.u32 %v411, 7
      %v413 = vsub.s32 3, %v412
      %v414 = vrot.slane %v364, %v413
      %v415 = vlaneseq
      %v416 = vshrl.u32 %v415, 7
      %v417 = vsub.s32 4, %v416
      %v418 = vrot.slane %v364, %v417
      %v419 = vlaneseq
      %v420 = vshrl.u32 %v419, 7
      %v421 = vsub.s32 5, %v420
      %v422 = vrot.slane %v364, %v421
      %v423 = vlaneseq
      %v424 = vshrl.u32 %v423, 7
      %v425 = vsub.s32 6, %v424
      %v426 = vrot.slane %v364, %v425
      %v427 = vlaneseq
      %v428 = vshrl.u32 %v427, 7
      %v429 = vsub.s32 7, %v428
      %v430 = vrot.slane %v364, %v429
      %v447 = vmul.f32 %v177, %v370
      %v448 = vmul.f32 %v177, %v374
      %v449 = vmul.f32 %v177, %v378
      %v450 = vmul.f32 %v177, %v382
      %v451 = vmul.f32 %v177, %v386
      %v452 = vmul.f32 %v177, %v390
      %v453 = vmul.f32 %v177, %v394
      %v454 = vmul.f32 %v177, %v398
      %v455 = vmul.f32 %v177, %v402
      %v456 = vmul.f32 %v177, %v406
      %v457 = vmul.f32 %v177, %v410
      %v458 = vmul.f32 %v177, %v414
      %v459 = vmul.f32 %v177, %v418
      %v460 = vmul.f32 %v177, %v422
      %v461 = vmul.f32 %v177, %v426
      %v462 = vmul.f32 %v177, %v430
      %v463 = vadd.f32 %v447, 0.0
      %v464 = vadd.f32 %v448, 0.0
      %v465 = vadd.f32 %v449, 0.0
      %v466 = vadd.f32 %v450, 0.0
      %v467 = vadd.f32 %v451, 0.0
      %v468 = vadd.f32 %v452, 0.0
      %v469 = vadd.f32 %v453, 0.0
      %v470 = vadd.f32 %v454, 0.0
      %v471 = vadd.f32 %v455, 0.0
      %v472 = vadd.f32 %v456, 0.0
      %v473 = vadd.f32 %v457, 0.0
      %v474 = vadd.f32 %v458, 0.0
      %v475 = vadd.f32 %v459, 0.0
      %v476 = vadd.f32 %v460, 0.0
      %v477 = vadd.f32 %v461, 0.0
      %v478 = vadd.f32 %v462, 0.0
      %s479 = scalar_lea.vmem %s2, 1
      %v480 = vld [vmem:[%s479] ss:$4 sm:$0xff]
      %s481 = scalar_lea.vmem %s2, 33
      %v482 = vld [vmem:[%s481] ss:$4 sm:$0xff]
      %v485 = vlaneseq
      %v486 = vshrl.u32 %v485, 7
      %v487 = vsub.s32 0, %v486
      %v488 = vrot.slane %v480, %v487
      %v489 = vlaneseq
      %v490 = vshrl.u32 %v489, 7
      %v491 = vsub.s32 1, %v490
      %v492 = vrot.slane %v480, %v491
      %v493 = vlaneseq
      %v494 = vshrl.u32 %v493, 7
      %v495 = vsub.s32 2, %v494
      %v496 = vrot.slane %v480, %v495
      %v497 = vlaneseq
      %v498 = vshrl.u32 %v497, 7
      %v499 = vsub.s32 3, %v498
      %v500 = vrot.slane %v480, %v499
      %v501 = vlaneseq
      %v502 = vshrl.u32 %v501, 7
      %v503 = vsub.s32 4, %v502
      %v504 = vrot.slane %v480, %v503
      %v505 = vlaneseq
      %v506 = vshrl.u32 %v505, 7
      %v507 = vsub.s32 5, %v506
      %v508 = vrot.slane %v480, %v507
      %v509 = vlaneseq
      %v510 = vshrl.u32 %v509, 7
      %v511 = vsub.s32 6, %v510
      %v512 = vrot.slane %v480, %v511
      %v513 = vlaneseq
      %v514 = vshrl.u32 %v513, 7
      %v515 = vsub.s32 7, %v514
      %v516 = vrot.slane %v480, %v515
      %v517 = vlaneseq
      %v518 = vshrl.u32 %v517, 7
      %v519 = vsub.s32 0, %v518
      %v520 = vrot.slane %v482, %v519
      %v521 = vlaneseq
      %v522 = vshrl.u32 %v521, 7
      %v523 = vsub.s32 1, %v522
      %v524 = vrot.slane %v482, %v523
      %v525 = vlaneseq
      %v526 = vshrl.u32 %v525, 7
      %v527 = vsub.s32 2, %v526
      %v528 = vrot.slane %v482, %v527
      %v529 = vlaneseq
      %v530 = vshrl.u32 %v529, 7
      %v531 = vsub.s32 3, %v530
      %v532 = vrot.slane %v482, %v531
      %v533 = vlaneseq
      %v534 = vshrl.u32 %v533, 7
      %v535 = vsub.s32 4, %v534
      %v536 = vrot.slane %v482, %v535
      %v537 = vlaneseq
      %v538 = vshrl.u32 %v537, 7
      %v539 = vsub.s32 5, %v538
      %v540 = vrot.slane %v482, %v539
      %v541 = vlaneseq
      %v542 = vshrl.u32 %v541, 7
      %v543 = vsub.s32 6, %v542
      %v544 = vrot.slane %v482, %v543
      %v545 = vlaneseq
      %v546 = vshrl.u32 %v545, 7
      %v547 = vsub.s32 7, %v546
      %v548 = vrot.slane %v482, %v547
      %v565 = vmul.f32 %v240, %v488
      %v566 = vmul.f32 %v240, %v492
      %v567 = vmul.f32 %v240, %v496
      %v568 = vmul.f32 %v240, %v500
      %v569 = vmul.f32 %v240, %v504
      %v570 = vmul.f32 %v240, %v508
      %v571 = vmul.f32 %v240, %v512
      %v572 = vmul.f32 %v240, %v516
      %v573 = vmul.f32 %v240, %v520
      %v574 = vmul.f32 %v240, %v524
      %v575 = vmul.f32 %v240, %v528
      %v576 = vmul.f32 %v240, %v532
      %v577 = vmul.f32 %v240, %v536
      %v578 = vmul.f32 %v240, %v540
      %v579 = vmul.f32 %v240, %v544
      %v580 = vmul.f32 %v240, %v548
      %v581 = vadd.f32 %v463, %v565
      %v582 = vadd.f32 %v464, %v566
      %v583 = vadd.f32 %v465, %v567
      %v584 = vadd.f32 %v466, %v568
      %v585 = vadd.f32 %v467, %v569
      %v586 = vadd.f32 %v468, %v570
      %v587 = vadd.f32 %v469, %v571
      %v588 = vadd.f32 %v470, %v572
      %v589 = vadd.f32 %v471, %v573
      %v590 = vadd.f32 %v472, %v574
      %v591 = vadd.f32 %v473, %v575
      %v592 = vadd.f32 %v474, %v576
      %v593 = vadd.f32 %v475, %v577
      %v594 = vadd.f32 %v476, %v578
      %v595 = vadd.f32 %v477, %v579
      %v596 = vadd.f32 %v478, %v580
      %s597 = scalar_lea.vmem %s2, 2
      %v598 = vld [vmem:[%s597] ss:$4 sm:$0xff]
      %s599 = scalar_lea.vmem %s2, 34
      %v600 = vld [vmem:[%s599] ss:$4 sm:$0xff]
      %v603 = vlaneseq
      %v604 = vshrl.u32 %v603, 7
      %v605 = vsub.s32 0, %v604
      %v606 = vrot.slane %v598, %v605
      %v607 = vlaneseq
      %v608 = vshrl.u32 %v607, 7
      %v609 = vsub.s32 1, %v608
      %v610 = vrot.slane %v598, %v609
      %v611 = vlaneseq
      %v612 = vshrl.u32 %v611, 7
      %v613 = vsub.s32 2, %v612
      %v614 = vrot.slane %v598, %v613
      %v615 = vlaneseq
      %v616 = vshrl.u32 %v615, 7
      %v617 = vsub.s32 3, %v616
      %v618 = vrot.slane %v598, %v617
      %v619 = vlaneseq
      %v620 = vshrl.u32 %v619, 7
      %v621 = vsub.s32 4, %v620
      %v622 = vrot.slane %v598, %v621
      %v623 = vlaneseq
      %v624 = vshrl.u32 %v623, 7
      %v625 = vsub.s32 5, %v624
      %v626 = vrot.slane %v598, %v625
      %v627 = vlaneseq
      %v628 = vshrl.u32 %v627, 7
      %v629 = vsub.s32 6, %v628
      %v630 = vrot.slane %v598, %v629
      %v631 = vlaneseq
      %v632 = vshrl.u32 %v631, 7
      %v633 = vsub.s32 7, %v632
      %v634 = vrot.slane %v598, %v633
      %v635 = vlaneseq
      %v636 = vshrl.u32 %v635, 7
      %v637 = vsub.s32 0, %v636
      %v638 = vrot.slane %v600, %v637
      %v639 = vlaneseq
      %v640 = vshrl.u32 %v639, 7
      %v641 = vsub.s32 1, %v640
      %v642 = vrot.slane %v600, %v641
      %v643 = vlaneseq
      %v644 = vshrl.u32 %v643, 7
      %v645 = vsub.s32 2, %v644
      %v646 = vrot.slane %v600, %v645
      %v647 = vlaneseq
      %v648 = vshrl.u32 %v647, 7
      %v649 = vsub.s32 3, %v648
      %v650 = vrot.slane %v600, %v649
      %v651 = vlaneseq
      %v652 = vshrl.u32 %v651, 7
      %v653 = vsub.s32 4, %v652
      %v654 = vrot.slane %v600, %v653
      %v655 = vlaneseq
      %v656 = vshrl.u32 %v655, 7
      %v657 = vsub.s32 5, %v656
      %v658 = vrot.slane %v600, %v657
      %v659 = vlaneseq
      %v660 = vshrl.u32 %v659, 7
      %v661 = vsub.s32 6, %v660
      %v662 = vrot.slane %v600, %v661
      %v663 = vlaneseq
      %v664 = vshrl.u32 %v663, 7
      %v665 = vsub.s32 7, %v664
      %v666 = vrot.slane %v600, %v665
      %v683 = vmul.f32 %v303, %v606
      %v684 = vmul.f32 %v303, %v610
      %v685 = vmul.f32 %v303, %v614
      %v686 = vmul.f32 %v303, %v618
      %v687 = vmul.f32 %v303, %v622
      %v688 = vmul.f32 %v303, %v626
      %v689 = vmul.f32 %v303, %v630
      %v690 = vmul.f32 %v303, %v634
      %v691 = vmul.f32 %v303, %v638
      %v692 = vmul.f32 %v303, %v642
      %v693 = vmul.f32 %v303, %v646
      %v694 = vmul.f32 %v303, %v650
      %v695 = vmul.f32 %v303, %v654
      %v696 = vmul.f32 %v303, %v658
      %v697 = vmul.f32 %v303, %v662
      %v698 = vmul.f32 %v303, %v666
      %v699 = vadd.f32 %v581, %v683
      %v700 = vadd.f32 %v582, %v684
      %v701 = vadd.f32 %v583, %v685
      %v702 = vadd.f32 %v584, %v686
      %v703 = vadd.f32 %v585, %v687
      %v704 = vadd.f32 %v586, %v688
      %v705 = vadd.f32 %v587, %v689
      %v706 = vadd.f32 %v588, %v690
      %v707 = vadd.f32 %v589, %v691
      %v708 = vadd.f32 %v590, %v692
      %v709 = vadd.f32 %v591, %v693
      %v710 = vadd.f32 %v592, %v694
      %v711 = vadd.f32 %v593, %v695
      %v712 = vadd.f32 %v594, %v696
      %v713 = vadd.f32 %v595, %v697
      %v714 = vadd.f32 %v596, %v698
      %v715 = vpack.c.bf16 %v354, %v354
      %v716 = vpack.c.bf16 %v355, %v355
      %v717 = vpack.c.bf16 %v356, %v356
      %v718 = vpack.c.bf16 %v357, %v357
      %v719 = vpack.c.bf16 %v358, %v358
      %v720 = vpack.c.bf16 %v359, %v359
      %v721 = vpack.c.bf16 %v360, %v360
      %v722 = vpack.c.bf16 %v361, %v361
      %v723 = vpack.c.bf16 %v699, %v699
      %v724 = vpack.c.bf16 %v700, %v700
      %v725 = vpack.c.bf16 %v701, %v701
      %v726 = vpack.c.bf16 %v702, %v702
      %v727 = vpack.c.bf16 %v703, %v703
      %v728 = vpack.c.bf16 %v704, %v704
      %v729 = vpack.c.bf16 %v705, %v705
      %v730 = vpack.c.bf16 %v706, %v706
      %v731 = vpack.c.bf16 %v707, %v707
      %v732 = vpack.c.bf16 %v708, %v708
      %v733 = vpack.c.bf16 %v709, %v709
      %v734 = vpack.c.bf16 %v710, %v710
      %v735 = vpack.c.bf16 %v711, %v711
      %v736 = vpack.c.bf16 %v712, %v712
      %v737 = vpack.c.bf16 %v713, %v713
      %v738 = vpack.c.bf16 %v714, %v714
      %v739 = vld [vmem:[#allocation6] sm:$0xff]
      %v740 = vld [vmem:[#allocation6 + $0x8] sm:$0xff]
      %v741 = vld [vmem:[#allocation6 + $0x10] sm:$0xff]
      %v742 = vld [vmem:[#allocation6 + $0x18] sm:$0xff]
      %v743 = vld [vmem:[#allocation6 + $0x20] sm:$0xff]
      %v744 = vld [vmem:[#allocation6 + $0x28] sm:$0xff]
      %v745 = vld [vmem:[#allocation6 + $0x30] sm:$0xff]
      %v746 = vld [vmem:[#allocation6 + $0x38] sm:$0xff]
      %v747 = vld [vmem:[#allocation6 + $0x40] sm:$0xff]
      %v748 = vld [vmem:[#allocation6 + $0x48] sm:$0xff]
      %v749 = vld [vmem:[#allocation6 + $0x50] sm:$0xff]
      %v750 = vld [vmem:[#allocation6 + $0x58] sm:$0xff]
      %v751 = vld [vmem:[#allocation6 + $0x60] sm:$0xff]
      %v752 = vld [vmem:[#allocation6 + $0x68] sm:$0xff]
      %v753 = vld [vmem:[#allocation6 + $0x70] sm:$0xff]
      %v754 = vld [vmem:[#allocation6 + $0x78] sm:$0xff]
      %v755 = vld [vmem:[#allocation6 + $0x80] sm:$0xff]
      %v756 = vld [vmem:[#allocation6 + $0x88] sm:$0xff]
      %v757 = vld [vmem:[#allocation6 + $0x90] sm:$0xff]
      %v758 = vld [vmem:[#allocation6 + $0x98] sm:$0xff]
      %v759 = vld [vmem:[#allocation6 + $0xa0] sm:$0xff]
      %v760 = vld [vmem:[#allocation6 + $0xa8] sm:$0xff]
      %v761 = vld [vmem:[#allocation6 + $0xb0] sm:$0xff]
      %v762 = vld [vmem:[#allocation6 + $0xb8] sm:$0xff]
      %v763 = vld [vmem:[#allocation6 + $0xc0] sm:$0xff]
      %v764 = vld [vmem:[#allocation6 + $0xc8] sm:$0xff]
      %v765 = vld [vmem:[#allocation6 + $0xd0] sm:$0xff]
      %v766 = vld [vmem:[#allocation6 + $0xd8] sm:$0xff]
      %v767 = vld [vmem:[#allocation6 + $0xe0] sm:$0xff]
      %v768 = vld [vmem:[#allocation6 + $0xe8] sm:$0xff]
      %v769 = vld [vmem:[#allocation6 + $0xf0] sm:$0xff]
      %v770 = vld [vmem:[#allocation6 + $0xf8] sm:$0xff]
      %v771 = vld [vmem:[#allocation6 + $0x100] sm:$0xff]
      %v772 = vld [vmem:[#allocation6 + $0x108] sm:$0xff]
      %v773 = vld [vmem:[#allocation6 + $0x110] sm:$0xff]
      %v774 = vld [vmem:[#allocation6 + $0x118] sm:$0xff]
      %v775 = vld [vmem:[#allocation6 + $0x120] sm:$0xff]
      %v776 = vld [vmem:[#allocation6 + $0x128] sm:$0xff]
      %v777 = vld [vmem:[#allocation6 + $0x130] sm:$0xff]
      %v778 = vld [vmem:[#allocation6 + $0x138] sm:$0xff]
      %v779 = vld [vmem:[#allocation6 + $0x140] sm:$0xff]
      %v780 = vld [vmem:[#allocation6 + $0x148] sm:$0xff]
      %v781 = vld [vmem:[#allocation6 + $0x150] sm:$0xff]
      %v782 = vld [vmem:[#allocation6 + $0x158] sm:$0xff]
      %v783 = vld [vmem:[#allocation6 + $0x160] sm:$0xff]
      %v784 = vld [vmem:[#allocation6 + $0x168] sm:$0xff]
      %v785 = vld [vmem:[#allocation6 + $0x170] sm:$0xff]
      %v786 = vld [vmem:[#allocation6 + $0x178] sm:$0xff]
      %v787 = vld [vmem:[#allocation6 + $0x180] sm:$0xff]
      %v788 = vld [vmem:[#allocation6 + $0x188] sm:$0xff]
      %v789 = vld [vmem:[#allocation6 + $0x190] sm:$0xff]
      %v790 = vld [vmem:[#allocation6 + $0x198] sm:$0xff]
      %v791 = vld [vmem:[#allocation6 + $0x1a0] sm:$0xff]
      %v792 = vld [vmem:[#allocation6 + $0x1a8] sm:$0xff]
      %v793 = vld [vmem:[#allocation6 + $0x1b0] sm:$0xff]
      %v794 = vld [vmem:[#allocation6 + $0x1b8] sm:$0xff]
      %v795 = vld [vmem:[#allocation6 + $0x1c0] sm:$0xff]
      %v796 = vld [vmem:[#allocation6 + $0x1c8] sm:$0xff]
      %v797 = vld [vmem:[#allocation6 + $0x1d0] sm:$0xff]
      %v798 = vld [vmem:[#allocation6 + $0x1d8] sm:$0xff]
      %v799 = vld [vmem:[#allocation6 + $0x1e0] sm:$0xff]
      %v800 = vld [vmem:[#allocation6 + $0x1e8] sm:$0xff]
      %v801 = vld [vmem:[#allocation6 + $0x1f0] sm:$0xff]
      %v802 = vld [vmem:[#allocation6 + $0x1f8] sm:$0xff]
      %v803 = vld [vmem:[#allocation6 + $0x200] sm:$0xff]
      %v804 = vld [vmem:[#allocation6 + $0x208] sm:$0xff]
      %v805 = vld [vmem:[#allocation6 + $0x210] sm:$0xff]
      %v806 = vld [vmem:[#allocation6 + $0x218] sm:$0xff]
      %v807 = vld [vmem:[#allocation6 + $0x220] sm:$0xff]
      %v808 = vld [vmem:[#allocation6 + $0x228] sm:$0xff]
      %v809 = vld [vmem:[#allocation6 + $0x230] sm:$0xff]
      %v810 = vld [vmem:[#allocation6 + $0x238] sm:$0xff]
      %v811 = vld [vmem:[#allocation6 + $0x240] sm:$0xff]
      %v812 = vld [vmem:[#allocation6 + $0x248] sm:$0xff]
      %v813 = vld [vmem:[#allocation6 + $0x250] sm:$0xff]
      %v814 = vld [vmem:[#allocation6 + $0x258] sm:$0xff]
      %v815 = vld [vmem:[#allocation6 + $0x260] sm:$0xff]
      %v816 = vld [vmem:[#allocation6 + $0x268] sm:$0xff]
      %v817 = vld [vmem:[#allocation6 + $0x270] sm:$0xff]
      %v818 = vld [vmem:[#allocation6 + $0x278] sm:$0xff]
      %v819 = vld [vmem:[#allocation6 + $0x280] sm:$0xff]
      %v820 = vld [vmem:[#allocation6 + $0x288] sm:$0xff]
      %v821 = vld [vmem:[#allocation6 + $0x290] sm:$0xff]
      %v822 = vld [vmem:[#allocation6 + $0x298] sm:$0xff]
      %v823 = vld [vmem:[#allocation6 + $0x2a0] sm:$0xff]
      %v824 = vld [vmem:[#allocation6 + $0x2a8] sm:$0xff]
      %v825 = vld [vmem:[#allocation6 + $0x2b0] sm:$0xff]
      %v826 = vld [vmem:[#allocation6 + $0x2b8] sm:$0xff]
      %v827 = vld [vmem:[#allocation6 + $0x2c0] sm:$0xff]
      %v828 = vld [vmem:[#allocation6 + $0x2c8] sm:$0xff]
      %v829 = vld [vmem:[#allocation6 + $0x2d0] sm:$0xff]
      %v830 = vld [vmem:[#allocation6 + $0x2d8] sm:$0xff]
      %v831 = vld [vmem:[#allocation6 + $0x2e0] sm:$0xff]
      %v832 = vld [vmem:[#allocation6 + $0x2e8] sm:$0xff]
      %v833 = vld [vmem:[#allocation6 + $0x2f0] sm:$0xff]
      %v834 = vld [vmem:[#allocation6 + $0x2f8] sm:$0xff]
      %v835 = vld [vmem:[#allocation6 + $0x300] sm:$0xff]
      %v836 = vld [vmem:[#allocation6 + $0x308] sm:$0xff]
      %v837 = vld [vmem:[#allocation6 + $0x310] sm:$0xff]
      %v838 = vld [vmem:[#allocation6 + $0x318] sm:$0xff]
      %v839 = vld [vmem:[#allocation6 + $0x320] sm:$0xff]
      %v840 = vld [vmem:[#allocation6 + $0x328] sm:$0xff]
      %v841 = vld [vmem:[#allocation6 + $0x330] sm:$0xff]
      %v842 = vld [vmem:[#allocation6 + $0x338] sm:$0xff]
      %v843 = vld [vmem:[#allocation6 + $0x340] sm:$0xff]
      %v844 = vld [vmem:[#allocation6 + $0x348] sm:$0xff]
      %v845 = vld [vmem:[#allocation6 + $0x350] sm:$0xff]
      %v846 = vld [vmem:[#allocation6 + $0x358] sm:$0xff]
      %v847 = vld [vmem:[#allocation6 + $0x360] sm:$0xff]
      %v848 = vld [vmem:[#allocation6 + $0x368] sm:$0xff]
      %v849 = vld [vmem:[#allocation6 + $0x370] sm:$0xff]
      %v850 = vld [vmem:[#allocation6 + $0x378] sm:$0xff]
      %v851 = vld [vmem:[#allocation6 + $0x380] sm:$0xff]
      %v852 = vld [vmem:[#allocation6 + $0x388] sm:$0xff]
      %v853 = vld [vmem:[#allocation6 + $0x390] sm:$0xff]
      %v854 = vld [vmem:[#allocation6 + $0x398] sm:$0xff]
      %v855 = vld [vmem:[#allocation6 + $0x3a0] sm:$0xff]
      %v856 = vld [vmem:[#allocation6 + $0x3a8] sm:$0xff]
      %v857 = vld [vmem:[#allocation6 + $0x3b0] sm:$0xff]
      %v858 = vld [vmem:[#allocation6 + $0x3b8] sm:$0xff]
      %v859 = vld [vmem:[#allocation8] sm:$0xff]
      %v860 = vld [vmem:[#allocation8 + $0x8] sm:$0xff]
      %v861 = vld [vmem:[#allocation8 + $0x10] sm:$0xff]
      %v862 = vld [vmem:[#allocation8 + $0x18] sm:$0xff]
      %v863 = vld [vmem:[#allocation8 + $0x20] sm:$0xff]
      %v864 = vld [vmem:[#allocation8 + $0x28] sm:$0xff]
      %v865 = vld [vmem:[#allocation8 + $0x30] sm:$0xff]
      %v866 = vld [vmem:[#allocation8 + $0x38] sm:$0xff]
      %v867 = vld [vmem:[#allocation8 + $0x40] sm:$0xff]
      %v868 = vld [vmem:[#allocation8 + $0x48] sm:$0xff]
      %v869 = vld [vmem:[#allocation8 + $0x50] sm:$0xff]
      %v870 = vld [vmem:[#allocation8 + $0x58] sm:$0xff]
      %v871 = vld [vmem:[#allocation8 + $0x60] sm:$0xff]
      %v872 = vld [vmem:[#allocation8 + $0x68] sm:$0xff]
      %v873 = vld [vmem:[#allocation8 + $0x70] sm:$0xff]
      %v874 = vld [vmem:[#allocation8 + $0x78] sm:$0xff]
      %v875 = vld [vmem:[#allocation8 + $0x80] sm:$0xff]
      %v876 = vld [vmem:[#allocation8 + $0x88] sm:$0xff]
      %v877 = vld [vmem:[#allocation8 + $0x90] sm:$0xff]
      %v878 = vld [vmem:[#allocation8 + $0x98] sm:$0xff]
      %v879 = vld [vmem:[#allocation8 + $0xa0] sm:$0xff]
      %v880 = vld [vmem:[#allocation8 + $0xa8] sm:$0xff]
      %v881 = vld [vmem:[#allocation8 + $0xb0] sm:$0xff]
      %v882 = vld [vmem:[#allocation8 + $0xb8] sm:$0xff]
      %v883 = vld [vmem:[#allocation8 + $0xc0] sm:$0xff]
      %v884 = vld [vmem:[#allocation8 + $0xc8] sm:$0xff]
      %v885 = vld [vmem:[#allocation8 + $0xd0] sm:$0xff]
      %v886 = vld [vmem:[#allocation8 + $0xd8] sm:$0xff]
      %v887 = vld [vmem:[#allocation8 + $0xe0] sm:$0xff]
      %v888 = vld [vmem:[#allocation8 + $0xe8] sm:$0xff]
      %v889 = vld [vmem:[#allocation8 + $0xf0] sm:$0xff]
      %v890 = vld [vmem:[#allocation8 + $0xf8] sm:$0xff]
      %v891 = vld [vmem:[#allocation8 + $0x100] sm:$0xff]
      %v892 = vld [vmem:[#allocation8 + $0x108] sm:$0xff]
      %v893 = vld [vmem:[#allocation8 + $0x110] sm:$0xff]
      %v894 = vld [vmem:[#allocation8 + $0x118] sm:$0xff]
      %v895 = vld [vmem:[#allocation8 + $0x120] sm:$0xff]
      %v896 = vld [vmem:[#allocation8 + $0x128] sm:$0xff]
      %v897 = vld [vmem:[#allocation8 + $0x130] sm:$0xff]
      %v898 = vld [vmem:[#allocation8 + $0x138] sm:$0xff]
      %v899 = vld [vmem:[#allocation8 + $0x140] sm:$0xff]
      %v900 = vld [vmem:[#allocation8 + $0x148] sm:$0xff]
      %v901 = vld [vmem:[#allocation8 + $0x150] sm:$0xff]
      %v902 = vld [vmem:[#allocation8 + $0x158] sm:$0xff]
      %v903 = vld [vmem:[#allocation8 + $0x160] sm:$0xff]
      %v904 = vld [vmem:[#allocation8 + $0x168] sm:$0xff]
      %v905 = vld [vmem:[#allocation8 + $0x170] sm:$0xff]
      %v906 = vld [vmem:[#allocation8 + $0x178] sm:$0xff]
      %v907 = vld [vmem:[#allocation8 + $0x180] sm:$0xff]
      %v908 = vld [vmem:[#allocation8 + $0x188] sm:$0xff]
      %v909 = vld [vmem:[#allocation8 + $0x190] sm:$0xff]
      %v910 = vld [vmem:[#allocation8 + $0x198] sm:$0xff]
      %v911 = vld [vmem:[#allocation8 + $0x1a0] sm:$0xff]
      %v912 = vld [vmem:[#allocation8 + $0x1a8] sm:$0xff]
      %v913 = vld [vmem:[#allocation8 + $0x1b0] sm:$0xff]
      %v914 = vld [vmem:[#allocation8 + $0x1b8] sm:$0xff]
      %v915 = vld [vmem:[#allocation8 + $0x1c0] sm:$0xff]
      %v916 = vld [vmem:[#allocation8 + $0x1c8] sm:$0xff]
      %v917 = vld [vmem:[#allocation8 + $0x1d0] sm:$0xff]
      %v918 = vld [vmem:[#allocation8 + $0x1d8] sm:$0xff]
      %v919 = vld [vmem:[#allocation8 + $0x1e0] sm:$0xff]
      %v920 = vld [vmem:[#allocation8 + $0x1e8] sm:$0xff]
      %v921 = vld [vmem:[#allocation8 + $0x1f0] sm:$0xff]
      %v922 = vld [vmem:[#allocation8 + $0x1f8] sm:$0xff]
      %v923 = vld [vmem:[#allocation8 + $0x200] sm:$0xff]
      %v924 = vld [vmem:[#allocation8 + $0x208] sm:$0xff]
      %v925 = vld [vmem:[#allocation8 + $0x210] sm:$0xff]
      %v926 = vld [vmem:[#allocation8 + $0x218] sm:$0xff]
      %v927 = vld [vmem:[#allocation8 + $0x220] sm:$0xff]
      %v928 = vld [vmem:[#allocation8 + $0x228] sm:$0xff]
      %v929 = vld [vmem:[#allocation8 + $0x230] sm:$0xff]
      %v930 = vld [vmem:[#allocation8 + $0x238] sm:$0xff]
      %v931 = vld [vmem:[#allocation8 + $0x240] sm:$0xff]
      %v932 = vld [vmem:[#allocation8 + $0x248] sm:$0xff]
      %v933 = vld [vmem:[#allocation8 + $0x250] sm:$0xff]
      %v934 = vld [vmem:[#allocation8 + $0x258] sm:$0xff]
      %v935 = vld [vmem:[#allocation8 + $0x260] sm:$0xff]
      %v936 = vld [vmem:[#allocation8 + $0x268] sm:$0xff]
      %v937 = vld [vmem:[#allocation8 + $0x270] sm:$0xff]
      %v938 = vld [vmem:[#allocation8 + $0x278] sm:$0xff]
      %v939 = vld [vmem:[#allocation8 + $0x280] sm:$0xff]
      %v940 = vld [vmem:[#allocation8 + $0x288] sm:$0xff]
      %v941 = vld [vmem:[#allocation8 + $0x290] sm:$0xff]
      %v942 = vld [vmem:[#allocation8 + $0x298] sm:$0xff]
      %v943 = vld [vmem:[#allocation8 + $0x2a0] sm:$0xff]
      %v944 = vld [vmem:[#allocation8 + $0x2a8] sm:$0xff]
      %v945 = vld [vmem:[#allocation8 + $0x2b0] sm:$0xff]
      %v946 = vld [vmem:[#allocation8 + $0x2b8] sm:$0xff]
      %v947 = vld [vmem:[#allocation8 + $0x2c0] sm:$0xff]
      %v948 = vld [vmem:[#allocation8 + $0x2c8] sm:$0xff]
      %v949 = vld [vmem:[#allocation8 + $0x2d0] sm:$0xff]
      %v950 = vld [vmem:[#allocation8 + $0x2d8] sm:$0xff]
      %v951 = vld [vmem:[#allocation8 + $0x2e0] sm:$0xff]
      %v952 = vld [vmem:[#allocation8 + $0x2e8] sm:$0xff]
      %v953 = vld [vmem:[#allocation8 + $0x2f0] sm:$0xff]
      %v954 = vld [vmem:[#allocation8 + $0x2f8] sm:$0xff]
      %v955 = vld [vmem:[#allocation8 + $0x300] sm:$0xff]
      %v956 = vld [vmem:[#allocation8 + $0x308] sm:$0xff]
      %v957 = vld [vmem:[#allocation8 + $0x310] sm:$0xff]
      %v958 = vld [vmem:[#allocation8 + $0x318] sm:$0xff]
      %v959 = vld [vmem:[#allocation8 + $0x320] sm:$0xff]
      %v960 = vld [vmem:[#allocation8 + $0x328] sm:$0xff]
      %v961 = vld [vmem:[#allocation8 + $0x330] sm:$0xff]
      %v962 = vld [vmem:[#allocation8 + $0x338] sm:$0xff]
      %v963 = vld [vmem:[#allocation8 + $0x340] sm:$0xff]
      %v964 = vld [vmem:[#allocation8 + $0x348] sm:$0xff]
      %v965 = vld [vmem:[#allocation8 + $0x350] sm:$0xff]
      %v966 = vld [vmem:[#allocation8 + $0x358] sm:$0xff]
      %v967 = vld [vmem:[#allocation8 + $0x360] sm:$0xff]
      %v968 = vld [vmem:[#allocation8 + $0x368] sm:$0xff]
      %v969 = vld [vmem:[#allocation8 + $0x370] sm:$0xff]
      %v970 = vld [vmem:[#allocation8 + $0x378] sm:$0xff]
      %v971 = vld [vmem:[#allocation8 + $0x380] sm:$0xff]
      %v972 = vld [vmem:[#allocation8 + $0x388] sm:$0xff]
      %v973 = vld [vmem:[#allocation8 + $0x390] sm:$0xff]
      %v974 = vld [vmem:[#allocation8 + $0x398] sm:$0xff]
      %v975 = vld [vmem:[#allocation8 + $0x3a0] sm:$0xff]
      %v976 = vld [vmem:[#allocation8 + $0x3a8] sm:$0xff]
      %v977 = vld [vmem:[#allocation8 + $0x3b0] sm:$0xff]
      %v978 = vld [vmem:[#allocation8 + $0x3b8] sm:$0xff]
      %v979 = vld [vmem:[#allocation8 + $0x3c0] sm:$0xff]
      %v980 = vld [vmem:[#allocation8 + $0x3c8] sm:$0xff]
      %v981 = vld [vmem:[#allocation8 + $0x3d0] sm:$0xff]
      %v982 = vld [vmem:[#allocation8 + $0x3d8] sm:$0xff]
      %v983 = vld [vmem:[#allocation8 + $0x3e0] sm:$0xff]
      %v984 = vld [vmem:[#allocation8 + $0x3e8] sm:$0xff]
      %v985 = vld [vmem:[#allocation8 + $0x3f0] sm:$0xff]
      %v986 = vld [vmem:[#allocation8 + $0x3f8] sm:$0xff]
      %v987 = vld [vmem:[#allocation8 + $0x400] sm:$0xff]
      %v988 = vld [vmem:[#allocation8 + $0x408] sm:$0xff]
      %v989 = vld [vmem:[#allocation8 + $0x410] sm:$0xff]
      %v990 = vld [vmem:[#allocation8 + $0x418] sm:$0xff]
      %v991 = vld [vmem:[#allocation8 + $0x420] sm:$0xff]
      %v992 = vld [vmem:[#allocation8 + $0x428] sm:$0xff]
      %v993 = vld [vmem:[#allocation8 + $0x430] sm:$0xff]
      %v994 = vld [vmem:[#allocation8 + $0x438] sm:$0xff]
      %v995 = vld [vmem:[#allocation8 + $0x440] sm:$0xff]
      %v996 = vld [vmem:[#allocation8 + $0x448] sm:$0xff]
      %v997 = vld [vmem:[#allocation8 + $0x450] sm:$0xff]
      %v998 = vld [vmem:[#allocation8 + $0x458] sm:$0xff]
      %v999 = vld [vmem:[#allocation8 + $0x460] sm:$0xff]
      %v1000 = vld [vmem:[#allocation8 + $0x468] sm:$0xff]
      %v1001 = vld [vmem:[#allocation8 + $0x470] sm:$0xff]
      %v1002 = vld [vmem:[#allocation8 + $0x478] sm:$0xff]
      %v1003 = vld [vmem:[#allocation8 + $0x480] sm:$0xff]
      %v1004 = vld [vmem:[#allocation8 + $0x488] sm:$0xff]
      %v1005 = vld [vmem:[#allocation8 + $0x490] sm:$0xff]
      %v1006 = vld [vmem:[#allocation8 + $0x498] sm:$0xff]
      %v1007 = vld [vmem:[#allocation8 + $0x4a0] sm:$0xff]
      %v1008 = vld [vmem:[#allocation8 + $0x4a8] sm:$0xff]
      %v1009 = vld [vmem:[#allocation8 + $0x4b0] sm:$0xff]
      %v1010 = vld [vmem:[#allocation8 + $0x4b8] sm:$0xff]
      %v1011 = vld [vmem:[#allocation8 + $0x4c0] sm:$0xff]
      %v1012 = vld [vmem:[#allocation8 + $0x4c8] sm:$0xff]
      %v1013 = vld [vmem:[#allocation8 + $0x4d0] sm:$0xff]
      %v1014 = vld [vmem:[#allocation8 + $0x4d8] sm:$0xff]
      %v1015 = vld [vmem:[#allocation8 + $0x4e0] sm:$0xff]
      %v1016 = vld [vmem:[#allocation8 + $0x4e8] sm:$0xff]
      %v1017 = vld [vmem:[#allocation8 + $0x4f0] sm:$0xff]
      %v1018 = vld [vmem:[#allocation8 + $0x4f8] sm:$0xff]
      %v1019 = vld [vmem:[#allocation8 + $0x500] sm:$0xff]
      %v1020 = vld [vmem:[#allocation8 + $0x508] sm:$0xff]
      %v1021 = vld [vmem:[#allocation8 + $0x510] sm:$0xff]
      %v1022 = vld [vmem:[#allocation8 + $0x518] sm:$0xff]
      %v1023 = vld [vmem:[#allocation8 + $0x520] sm:$0xff]
      %v1024 = vld [vmem:[#allocation8 + $0x528] sm:$0xff]
      %v1025 = vld [vmem:[#allocation8 + $0x530] sm:$0xff]
      %v1026 = vld [vmem:[#allocation8 + $0x538] sm:$0xff]
      %v1027 = vld [vmem:[#allocation8 + $0x540] sm:$0xff]
      %v1028 = vld [vmem:[#allocation8 + $0x548] sm:$0xff]
      %v1029 = vld [vmem:[#allocation8 + $0x550] sm:$0xff]
      %v1030 = vld [vmem:[#allocation8 + $0x558] sm:$0xff]
      %v1031 = vld [vmem:[#allocation8 + $0x560] sm:$0xff]
      %v1032 = vld [vmem:[#allocation8 + $0x568] sm:$0xff]
      %v1033 = vld [vmem:[#allocation8 + $0x570] sm:$0xff]
      %v1034 = vld [vmem:[#allocation8 + $0x578] sm:$0xff]
      %v1035 = vld [vmem:[#allocation8 + $0x580] sm:$0xff]
      %v1036 = vld [vmem:[#allocation8 + $0x588] sm:$0xff]
      %v1037 = vld [vmem:[#allocation8 + $0x590] sm:$0xff]
      %v1038 = vld [vmem:[#allocation8 + $0x598] sm:$0xff]
      %v1039 = vld [vmem:[#allocation8 + $0x5a0] sm:$0xff]
      %v1040 = vld [vmem:[#allocation8 + $0x5a8] sm:$0xff]
      %v1041 = vld [vmem:[#allocation8 + $0x5b0] sm:$0xff]
      %v1042 = vld [vmem:[#allocation8 + $0x5b8] sm:$0xff]
      %v1043 = vld [vmem:[#allocation8 + $0x5c0] sm:$0xff]
      %v1044 = vld [vmem:[#allocation8 + $0x5c8] sm:$0xff]
      %v1045 = vld [vmem:[#allocation8 + $0x5d0] sm:$0xff]
      %v1046 = vld [vmem:[#allocation8 + $0x5d8] sm:$0xff]
      %v1047 = vld [vmem:[#allocation8 + $0x5e0] sm:$0xff]
      %v1048 = vld [vmem:[#allocation8 + $0x5e8] sm:$0xff]
      %v1049 = vld [vmem:[#allocation8 + $0x5f0] sm:$0xff]
      %v1050 = vld [vmem:[#allocation8 + $0x5f8] sm:$0xff]
      %v1051 = vld [vmem:[#allocation8 + $0x600] sm:$0xff]
      %v1052 = vld [vmem:[#allocation8 + $0x608] sm:$0xff]
      %v1053 = vld [vmem:[#allocation8 + $0x610] sm:$0xff]
      %v1054 = vld [vmem:[#allocation8 + $0x618] sm:$0xff]
      %v1055 = vld [vmem:[#allocation8 + $0x620] sm:$0xff]
      %v1056 = vld [vmem:[#allocation8 + $0x628] sm:$0xff]
      %v1057 = vld [vmem:[#allocation8 + $0x630] sm:$0xff]
      %v1058 = vld [vmem:[#allocation8 + $0x638] sm:$0xff]
      %v1059 = vld [vmem:[#allocation8 + $0x640] sm:$0xff]
      %v1060 = vld [vmem:[#allocation8 + $0x648] sm:$0xff]
      %v1061 = vld [vmem:[#allocation8 + $0x650] sm:$0xff]
      %v1062 = vld [vmem:[#allocation8 + $0x658] sm:$0xff]
      %v1063 = vld [vmem:[#allocation8 + $0x660] sm:$0xff]
      %v1064 = vld [vmem:[#allocation8 + $0x668] sm:$0xff]
      %v1065 = vld [vmem:[#allocation8 + $0x670] sm:$0xff]
      %v1066 = vld [vmem:[#allocation8 + $0x678] sm:$0xff]
      %v1067 = vld [vmem:[#allocation8 + $0x680] sm:$0xff]
      %v1068 = vld [vmem:[#allocation8 + $0x688] sm:$0xff]
      %v1069 = vld [vmem:[#allocation8 + $0x690] sm:$0xff]
      %v1070 = vld [vmem:[#allocation8 + $0x698] sm:$0xff]
      %v1071 = vld [vmem:[#allocation8 + $0x6a0] sm:$0xff]
      %v1072 = vld [vmem:[#allocation8 + $0x6a8] sm:$0xff]
      %v1073 = vld [vmem:[#allocation8 + $0x6b0] sm:$0xff]
      %v1074 = vld [vmem:[#allocation8 + $0x6b8] sm:$0xff]
      %v1075 = vld [vmem:[#allocation8 + $0x6c0] sm:$0xff]
      %v1076 = vld [vmem:[#allocation8 + $0x6c8] sm:$0xff]
      %v1077 = vld [vmem:[#allocation8 + $0x6d0] sm:$0xff]
      %v1078 = vld [vmem:[#allocation8 + $0x6d8] sm:$0xff]
      %v1079 = vld [vmem:[#allocation8 + $0x6e0] sm:$0xff]
      %v1080 = vld [vmem:[#allocation8 + $0x6e8] sm:$0xff]
      %v1081 = vld [vmem:[#allocation8 + $0x6f0] sm:$0xff]
      %v1082 = vld [vmem:[#allocation8 + $0x6f8] sm:$0xff]
      %v1083 = vld [vmem:[#allocation8 + $0x700] sm:$0xff]
      %v1084 = vld [vmem:[#allocation8 + $0x708] sm:$0xff]
      %v1085 = vld [vmem:[#allocation8 + $0x710] sm:$0xff]
      %v1086 = vld [vmem:[#allocation8 + $0x718] sm:$0xff]
      %v1087 = vld [vmem:[#allocation8 + $0x720] sm:$0xff]
      %v1088 = vld [vmem:[#allocation8 + $0x728] sm:$0xff]
      %v1089 = vld [vmem:[#allocation8 + $0x730] sm:$0xff]
      %v1090 = vld [vmem:[#allocation8 + $0x738] sm:$0xff]
      %v1091 = vld [vmem:[#allocation8 + $0x740] sm:$0xff]
      %v1092 = vld [vmem:[#allocation8 + $0x748] sm:$0xff]
      %v1093 = vld [vmem:[#allocation8 + $0x750] sm:$0xff]
      %v1094 = vld [vmem:[#allocation8 + $0x758] sm:$0xff]
      %v1095 = vld [vmem:[#allocation8 + $0x760] sm:$0xff]
      %v1096 = vld [vmem:[#allocation8 + $0x768] sm:$0xff]
      %v1097 = vld [vmem:[#allocation8 + $0x770] sm:$0xff]
      %v1098 = vld [vmem:[#allocation8 + $0x778] sm:$0xff]
      %v1099 = vld [vmem:[#allocation8 + $0x780] sm:$0xff]
      %v1100 = vld [vmem:[#allocation8 + $0x788] sm:$0xff]
      %v1101 = vld [vmem:[#allocation8 + $0x790] sm:$0xff]
      %v1102 = vld [vmem:[#allocation8 + $0x798] sm:$0xff]
      %v1103 = vld [vmem:[#allocation8 + $0x7a0] sm:$0xff]
      %v1104 = vld [vmem:[#allocation8 + $0x7a8] sm:$0xff]
      %v1105 = vld [vmem:[#allocation8 + $0x7b0] sm:$0xff]
      %v1106 = vld [vmem:[#allocation8 + $0x7b8] sm:$0xff]
      %v1107 = vld [vmem:[#allocation8 + $0x7c0] sm:$0xff]
      %v1108 = vld [vmem:[#allocation8 + $0x7c8] sm:$0xff]
      %v1109 = vld [vmem:[#allocation8 + $0x7d0] sm:$0xff]
      %v1110 = vld [vmem:[#allocation8 + $0x7d8] sm:$0xff]
      %v1111 = vld [vmem:[#allocation8 + $0x7e0] sm:$0xff]
      %v1112 = vld [vmem:[#allocation8 + $0x7e8] sm:$0xff]
      %v1113 = vld [vmem:[#allocation8 + $0x7f0] sm:$0xff]
      %v1114 = vld [vmem:[#allocation8 + $0x7f8] sm:$0xff]
      %v1371 = vunpack.c.l.b16 %v859
      %v1372 = vunpack.c.h.b16 %v859
      %v1373 = vunpack.c.l.b16 %v860
      %v1374 = vunpack.c.h.b16 %v860
      %v1375 = vunpack.c.l.b16 %v861
      %v1376 = vunpack.c.h.b16 %v861
      %v1377 = vunpack.c.l.b16 %v862
      %v1378 = vunpack.c.h.b16 %v862
      %v1379 = vunpack.c.l.b16 %v863
      %v1380 = vunpack.c.h.b16 %v863
      %v1381 = vunpack.c.l.b16 %v864
      %v1382 = vunpack.c.h.b16 %v864
      %v1383 = vunpack.c.l.b16 %v865
      %v1384 = vunpack.c.h.b16 %v865
      %v1385 = vunpack.c.l.b16 %v866
      %v1386 = vunpack.c.h.b16 %v866
      %v1387 = vunpack.c.l.b16 %v867
      %v1388 = vunpack.c.h.b16 %v867
      %v1389 = vunpack.c.l.b16 %v868
      %v1390 = vunpack.c.h.b16 %v868
      %v1391 = vunpack.c.l.b16 %v869
      %v1392 = vunpack.c.h.b16 %v869
      %v1393 = vunpack.c.l.b16 %v870
      %v1394 = vunpack.c.h.b16 %v870
      %v1395 = vunpack.c.l.b16 %v871
      %v1396 = vunpack.c.h.b16 %v871
      %v1397 = vunpack.c.l.b16 %v872
      %v1398 = vunpack.c.h.b16 %v872
      %v1399 = vunpack.c.l.b16 %v873
      %v1400 = vunpack.c.h.b16 %v873
      %v1401 = vunpack.c.l.b16 %v874
      %v1402 = vunpack.c.h.b16 %v874
      %v1403 = vunpack.c.l.b16 %v875
      %v1404 = vunpack.c.h.b16 %v875
      %v1405 = vunpack.c.l.b16 %v876
      %v1406 = vunpack.c.h.b16 %v876
      %v1407 = vunpack.c.l.b16 %v877
      %v1408 = vunpack.c.h.b16 %v877
      %v1409 = vunpack.c.l.b16 %v878
      %v1410 = vunpack.c.h.b16 %v878
      %v1411 = vunpack.c.l.b16 %v879
      %v1412 = vunpack.c.h.b16 %v879
      %v1413 = vunpack.c.l.b16 %v880
      %v1414 = vunpack.c.h.b16 %v880
      %v1415 = vunpack.c.l.b16 %v881
      %v1416 = vunpack.c.h.b16 %v881
      %v1417 = vunpack.c.l.b16 %v882
      %v1418 = vunpack.c.h.b16 %v882
      %v1419 = vunpack.c.l.b16 %v883
      %v1420 = vunpack.c.h.b16 %v883
      %v1421 = vunpack.c.l.b16 %v884
      %v1422 = vunpack.c.h.b16 %v884
      %v1423 = vunpack.c.l.b16 %v885
      %v1424 = vunpack.c.h.b16 %v885
      %v1425 = vunpack.c.l.b16 %v886
      %v1426 = vunpack.c.h.b16 %v886
      %v1427 = vunpack.c.l.b16 %v887
      %v1428 = vunpack.c.h.b16 %v887
      %v1429 = vunpack.c.l.b16 %v888
      %v1430 = vunpack.c.h.b16 %v888
      %v1431 = vunpack.c.l.b16 %v889
      %v1432 = vunpack.c.h.b16 %v889
      %v1433 = vunpack.c.l.b16 %v890
      %v1434 = vunpack.c.h.b16 %v890
      %v1435 = vunpack.c.l.b16 %v891
      %v1436 = vunpack.c.h.b16 %v891
      %v1437 = vunpack.c.l.b16 %v892
      %v1438 = vunpack.c.h.b16 %v892
      %v1439 = vunpack.c.l.b16 %v893
      %v1440 = vunpack.c.h.b16 %v893
      %v1441 = vunpack.c.l.b16 %v894
      %v1442 = vunpack.c.h.b16 %v894
      %v1443 = vunpack.c.l.b16 %v895
      %v1444 = vunpack.c.h.b16 %v895
      %v1445 = vunpack.c.l.b16 %v896
      %v1446 = vunpack.c.h.b16 %v896
      %v1447 = vunpack.c.l.b16 %v897
      %v1448 = vunpack.c.h.b16 %v897
      %v1449 = vunpack.c.l.b16 %v898
      %v1450 = vunpack.c.h.b16 %v898
      %v1451 = vunpack.c.l.b16 %v899
      %v1452 = vunpack.c.h.b16 %v899
      %v1453 = vunpack.c.l.b16 %v900
      %v1454 = vunpack.c.h.b16 %v900
      %v1455 = vunpack.c.l.b16 %v901
      %v1456 = vunpack.c.h.b16 %v901
      %v1457 = vunpack.c.l.b16 %v902
      %v1458 = vunpack.c.h.b16 %v902
      %v1459 = vunpack.c.l.b16 %v903
      %v1460 = vunpack.c.h.b16 %v903
      %v1461 = vunpack.c.l.b16 %v904
      %v1462 = vunpack.c.h.b16 %v904
      %v1463 = vunpack.c.l.b16 %v905
      %v1464 = vunpack.c.h.b16 %v905
      %v1465 = vunpack.c.l.b16 %v906
      %v1466 = vunpack.c.h.b16 %v906
      %v1467 = vunpack.c.l.b16 %v907
      %v1468 = vunpack.c.h.b16 %v907
      %v1469 = vunpack.c.l.b16 %v908
      %v1470 = vunpack.c.h.b16 %v908
      %v1471 = vunpack.c.l.b16 %v909
      %v1472 = vunpack.c.h.b16 %v909
      %v1473 = vunpack.c.l.b16 %v910
      %v1474 = vunpack.c.h.b16 %v910
      %v1475 = vunpack.c.l.b16 %v911
      %v1476 = vunpack.c.h.b16 %v911
      %v1477 = vunpack.c.l.b16 %v912
      %v1478 = vunpack.c.h.b16 %v912
      %v1479 = vunpack.c.l.b16 %v913
      %v1480 = vunpack.c.h.b16 %v913
      %v1481 = vunpack.c.l.b16 %v914
      %v1482 = vunpack.c.h.b16 %v914
      %v1483 = vunpack.c.l.b16 %v915
      %v1484 = vunpack.c.h.b16 %v915
      %v1485 = vunpack.c.l.b16 %v916
      %v1486 = vunpack.c.h.b16 %v916
      %v1487 = vunpack.c.l.b16 %v917
      %v1488 = vunpack.c.h.b16 %v917
      %v1489 = vunpack.c.l.b16 %v918
      %v1490 = vunpack.c.h.b16 %v918
      %v1491 = vunpack.c.l.b16 %v919
      %v1492 = vunpack.c.h.b16 %v919
      %v1493 = vunpack.c.l.b16 %v920
      %v1494 = vunpack.c.h.b16 %v920
      %v1495 = vunpack.c.l.b16 %v921
      %v1496 = vunpack.c.h.b16 %v921
      %v1497 = vunpack.c.l.b16 %v922
      %v1498 = vunpack.c.h.b16 %v922
      %v1499 = vunpack.c.l.b16 %v923
      %v1500 = vunpack.c.h.b16 %v923
      %v1501 = vunpack.c.l.b16 %v924
      %v1502 = vunpack.c.h.b16 %v924
      %v1503 = vunpack.c.l.b16 %v925
      %v1504 = vunpack.c.h.b16 %v925
      %v1505 = vunpack.c.l.b16 %v926
      %v1506 = vunpack.c.h.b16 %v926
      %v1507 = vunpack.c.l.b16 %v927
      %v1508 = vunpack.c.h.b16 %v927
      %v1509 = vunpack.c.l.b16 %v928
      %v1510 = vunpack.c.h.b16 %v928
      %v1511 = vunpack.c.l.b16 %v929
      %v1512 = vunpack.c.h.b16 %v929
      %v1513 = vunpack.c.l.b16 %v930
      %v1514 = vunpack.c.h.b16 %v930
      %v1515 = vunpack.c.l.b16 %v931
      %v1516 = vunpack.c.h.b16 %v931
      %v1517 = vunpack.c.l.b16 %v932
      %v1518 = vunpack.c.h.b16 %v932
      %v1519 = vunpack.c.l.b16 %v933
      %v1520 = vunpack.c.h.b16 %v933
      %v1521 = vunpack.c.l.b16 %v934
      %v1522 = vunpack.c.h.b16 %v934
      %v1523 = vunpack.c.l.b16 %v935
      %v1524 = vunpack.c.h.b16 %v935
      %v1525 = vunpack.c.l.b16 %v936
      %v1526 = vunpack.c.h.b16 %v936
      %v1527 = vunpack.c.l.b16 %v937
      %v1528 = vunpack.c.h.b16 %v937
      %v1529 = vunpack.c.l.b16 %v938
      %v1530 = vunpack.c.h.b16 %v938
      %v1531 = vunpack.c.l.b16 %v939
      %v1532 = vunpack.c.h.b16 %v939
      %v1533 = vunpack.c.l.b16 %v940
      %v1534 = vunpack.c.h.b16 %v940
      %v1535 = vunpack.c.l.b16 %v941
      %v1536 = vunpack.c.h.b16 %v941
      %v1537 = vunpack.c.l.b16 %v942
      %v1538 = vunpack.c.h.b16 %v942
      %v1539 = vunpack.c.l.b16 %v943
      %v1540 = vunpack.c.h.b16 %v943
      %v1541 = vunpack.c.l.b16 %v944
      %v1542 = vunpack.c.h.b16 %v944
      %v1543 = vunpack.c.l.b16 %v945
      %v1544 = vunpack.c.h.b16 %v945
      %v1545 = vunpack.c.l.b16 %v946
      %v1546 = vunpack.c.h.b16 %v946
      %v1547 = vunpack.c.l.b16 %v947
      %v1548 = vunpack.c.h.b16 %v947
      %v1549 = vunpack.c.l.b16 %v948
      %v1550 = vunpack.c.h.b16 %v948
      %v1551 = vunpack.c.l.b16 %v949
      %v1552 = vunpack.c.h.b16 %v949
      %v1553 = vunpack.c.l.b16 %v950
      %v1554 = vunpack.c.h.b16 %v950
      %v1555 = vunpack.c.l.b16 %v951
      %v1556 = vunpack.c.h.b16 %v951
      %v1557 = vunpack.c.l.b16 %v952
      %v1558 = vunpack.c.h.b16 %v952
      %v1559 = vunpack.c.l.b16 %v953
      %v1560 = vunpack.c.h.b16 %v953
      %v1561 = vunpack.c.l.b16 %v954
      %v1562 = vunpack.c.h.b16 %v954
      %v1563 = vunpack.c.l.b16 %v955
      %v1564 = vunpack.c.h.b16 %v955
      %v1565 = vunpack.c.l.b16 %v956
      %v1566 = vunpack.c.h.b16 %v956
      %v1567 = vunpack.c.l.b16 %v957
      %v1568 = vunpack.c.h.b16 %v957
      %v1569 = vunpack.c.l.b16 %v958
      %v1570 = vunpack.c.h.b16 %v958
      %v1571 = vunpack.c.l.b16 %v959
      %v1572 = vunpack.c.h.b16 %v959
      %v1573 = vunpack.c.l.b16 %v960
      %v1574 = vunpack.c.h.b16 %v960
      %v1575 = vunpack.c.l.b16 %v961
      %v1576 = vunpack.c.h.b16 %v961
      %v1577 = vunpack.c.l.b16 %v962
      %v1578 = vunpack.c.h.b16 %v962
      %v1579 = vunpack.c.l.b16 %v963
      %v1580 = vunpack.c.h.b16 %v963
      %v1581 = vunpack.c.l.b16 %v964
      %v1582 = vunpack.c.h.b16 %v964
      %v1583 = vunpack.c.l.b16 %v965
      %v1584 = vunpack.c.h.b16 %v965
      %v1585 = vunpack.c.l.b16 %v966
      %v1586 = vunpack.c.h.b16 %v966
      %v1587 = vunpack.c.l.b16 %v967
      %v1588 = vunpack.c.h.b16 %v967
      %v1589 = vunpack.c.l.b16 %v968
      %v1590 = vunpack.c.h.b16 %v968
      %v1591 = vunpack.c.l.b16 %v969
      %v1592 = vunpack.c.h.b16 %v969
      %v1593 = vunpack.c.l.b16 %v970
      %v1594 = vunpack.c.h.b16 %v970
      %v1595 = vunpack.c.l.b16 %v971
      %v1596 = vunpack.c.h.b16 %v971
      %v1597 = vunpack.c.l.b16 %v972
      %v1598 = vunpack.c.h.b16 %v972
      %v1599 = vunpack.c.l.b16 %v973
      %v1600 = vunpack.c.h.b16 %v973
      %v1601 = vunpack.c.l.b16 %v974
      %v1602 = vunpack.c.h.b16 %v974
      %v1603 = vunpack.c.l.b16 %v975
      %v1604 = vunpack.c.h.b16 %v975
      %v1605 = vunpack.c.l.b16 %v976
      %v1606 = vunpack.c.h.b16 %v976
      %v1607 = vunpack.c.l.b16 %v977
      %v1608 = vunpack.c.h.b16 %v977
      %v1609 = vunpack.c.l.b16 %v978
      %v1610 = vunpack.c.h.b16 %v978
      %v1611 = vunpack.c.l.b16 %v979
      %v1612 = vunpack.c.h.b16 %v979
      %v1613 = vunpack.c.l.b16 %v980
      %v1614 = vunpack.c.h.b16 %v980
      %v1615 = vunpack.c.l.b16 %v981
      %v1616 = vunpack.c.h.b16 %v981
      %v1617 = vunpack.c.l.b16 %v982
      %v1618 = vunpack.c.h.b16 %v982
      %v1619 = vunpack.c.l.b16 %v983
      %v1620 = vunpack.c.h.b16 %v983
      %v1621 = vunpack.c.l.b16 %v984
      %v1622 = vunpack.c.h.b16 %v984
      %v1623 = vunpack.c.l.b16 %v985
      %v1624 = vunpack.c.h.b16 %v985
      %v1625 = vunpack.c.l.b16 %v986
      %v1626 = vunpack.c.h.b16 %v986
      %v1627 = vunpack.c.l.b16 %v987
      %v1628 = vunpack.c.h.b16 %v987
      %v1629 = vunpack.c.l.b16 %v988
      %v1630 = vunpack.c.h.b16 %v988
      %v1631 = vunpack.c.l.b16 %v989
      %v1632 = vunpack.c.h.b16 %v989
      %v1633 = vunpack.c.l.b16 %v990
      %v1634 = vunpack.c.h.b16 %v990
      %v1635 = vunpack.c.l.b16 %v991
      %v1636 = vunpack.c.h.b16 %v991
      %v1637 = vunpack.c.l.b16 %v992
      %v1638 = vunpack.c.h.b16 %v992
      %v1639 = vunpack.c.l.b16 %v993
      %v1640 = vunpack.c.h.b16 %v993
      %v1641 = vunpack.c.l.b16 %v994
      %v1642 = vunpack.c.h.b16 %v994
      %v1643 = vunpack.c.l.b16 %v995
      %v1644 = vunpack.c.h.b16 %v995
      %v1645 = vunpack.c.l.b16 %v996
      %v1646 = vunpack.c.h.b16 %v996
      %v1647 = vunpack.c.l.b16 %v997
      %v1648 = vunpack.c.h.b16 %v997
      %v1649 = vunpack.c.l.b16 %v998
      %v1650 = vunpack.c.h.b16 %v998
      %v1651 = vunpack.c.l.b16 %v999
      %v1652 = vunpack.c.h.b16 %v999
      %v1653 = vunpack.c.l.b16 %v1000
      %v1654 = vunpack.c.h.b16 %v1000
      %v1655 = vunpack.c.l.b16 %v1001
      %v1656 = vunpack.c.h.b16 %v1001
      %v1657 = vunpack.c.l.b16 %v1002
      %v1658 = vunpack.c.h.b16 %v1002
      %v1659 = vunpack.c.l.b16 %v1003
      %v1660 = vunpack.c.h.b16 %v1003
      %v1661 = vunpack.c.l.b16 %v1004
      %v1662 = vunpack.c.h.b16 %v1004
      %v1663 = vunpack.c.l.b16 %v1005
      %v1664 = vunpack.c.h.b16 %v1005
      %v1665 = vunpack.c.l.b16 %v1006
      %v1666 = vunpack.c.h.b16 %v1006
      %v1667 = vunpack.c.l.b16 %v1007
      %v1668 = vunpack.c.h.b16 %v1007
      %v1669 = vunpack.c.l.b16 %v1008
      %v1670 = vunpack.c.h.b16 %v1008
      %v1671 = vunpack.c.l.b16 %v1009
      %v1672 = vunpack.c.h.b16 %v1009
      %v1673 = vunpack.c.l.b16 %v1010
      %v1674 = vunpack.c.h.b16 %v1010
      %v1675 = vunpack.c.l.b16 %v1011
      %v1676 = vunpack.c.h.b16 %v1011
      %v1677 = vunpack.c.l.b16 %v1012
      %v1678 = vunpack.c.h.b16 %v1012
      %v1679 = vunpack.c.l.b16 %v1013
      %v1680 = vunpack.c.h.b16 %v1013
      %v1681 = vunpack.c.l.b16 %v1014
      %v1682 = vunpack.c.h.b16 %v1014
      %v1683 = vunpack.c.l.b16 %v1015
      %v1684 = vunpack.c.h.b16 %v1015
      %v1685 = vunpack.c.l.b16 %v1016
      %v1686 = vunpack.c.h.b16 %v1016
      %v1687 = vunpack.c.l.b16 %v1017
      %v1688 = vunpack.c.h.b16 %v1017
      %v1689 = vunpack.c.l.b16 %v1018
      %v1690 = vunpack.c.h.b16 %v1018
      %v1691 = vunpack.c.l.b16 %v1019
      %v1692 = vunpack.c.h.b16 %v1019
      %v1693 = vunpack.c.l.b16 %v1020
      %v1694 = vunpack.c.h.b16 %v1020
      %v1695 = vunpack.c.l.b16 %v1021
      %v1696 = vunpack.c.h.b16 %v1021
      %v1697 = vunpack.c.l.b16 %v1022
      %v1698 = vunpack.c.h.b16 %v1022
      %v1699 = vunpack.c.l.b16 %v1023
      %v1700 = vunpack.c.h.b16 %v1023
      %v1701 = vunpack.c.l.b16 %v1024
      %v1702 = vunpack.c.h.b16 %v1024
      %v1703 = vunpack.c.l.b16 %v1025
      %v1704 = vunpack.c.h.b16 %v1025
      %v1705 = vunpack.c.l.b16 %v1026
      %v1706 = vunpack.c.h.b16 %v1026
      %v1707 = vunpack.c.l.b16 %v1027
      %v1708 = vunpack.c.h.b16 %v1027
      %v1709 = vunpack.c.l.b16 %v1028
      %v1710 = vunpack.c.h.b16 %v1028
      %v1711 = vunpack.c.l.b16 %v1029
      %v1712 = vunpack.c.h.b16 %v1029
      %v1713 = vunpack.c.l.b16 %v1030
      %v1714 = vunpack.c.h.b16 %v1030
      %v1715 = vunpack.c.l.b16 %v1031
      %v1716 = vunpack.c.h.b16 %v1031
      %v1717 = vunpack.c.l.b16 %v1032
      %v1718 = vunpack.c.h.b16 %v1032
      %v1719 = vunpack.c.l.b16 %v1033
      %v1720 = vunpack.c.h.b16 %v1033
      %v1721 = vunpack.c.l.b16 %v1034
      %v1722 = vunpack.c.h.b16 %v1034
      %v1723 = vunpack.c.l.b16 %v1035
      %v1724 = vunpack.c.h.b16 %v1035
      %v1725 = vunpack.c.l.b16 %v1036
      %v1726 = vunpack.c.h.b16 %v1036
      %v1727 = vunpack.c.l.b16 %v1037
      %v1728 = vunpack.c.h.b16 %v1037
      %v1729 = vunpack.c.l.b16 %v1038
      %v1730 = vunpack.c.h.b16 %v1038
      %v1731 = vunpack.c.l.b16 %v1039
      %v1732 = vunpack.c.h.b16 %v1039
      %v1733 = vunpack.c.l.b16 %v1040
      %v1734 = vunpack.c.h.b16 %v1040
      %v1735 = vunpack.c.l.b16 %v1041
      %v1736 = vunpack.c.h.b16 %v1041
      %v1737 = vunpack.c.l.b16 %v1042
      %v1738 = vunpack.c.h.b16 %v1042
      %v1739 = vunpack.c.l.b16 %v1043
      %v1740 = vunpack.c.h.b16 %v1043
      %v1741 = vunpack.c.l.b16 %v1044
      %v1742 = vunpack.c.h.b16 %v1044
      %v1743 = vunpack.c.l.b16 %v1045
      %v1744 = vunpack.c.h.b16 %v1045
      %v1745 = vunpack.c.l.b16 %v1046
      %v1746 = vunpack.c.h.b16 %v1046
      %v1747 = vunpack.c.l.b16 %v1047
      %v1748 = vunpack.c.h.b16 %v1047
      %v1749 = vunpack.c.l.b16 %v1048
      %v1750 = vunpack.c.h.b16 %v1048
      %v1751 = vunpack.c.l.b16 %v1049
      %v1752 = vunpack.c.h.b16 %v1049
      %v1753 = vunpack.c.l.b16 %v1050
      %v1754 = vunpack.c.h.b16 %v1050
      %v1755 = vunpack.c.l.b16 %v1051
      %v1756 = vunpack.c.h.b16 %v1051
      %v1757 = vunpack.c.l.b16 %v1052
      %v1758 = vunpack.c.h.b16 %v1052
      %v1759 = vunpack.c.l.b16 %v1053
      %v1760 = vunpack.c.h.b16 %v1053
      %v1761 = vunpack.c.l.b16 %v1054
      %v1762 = vunpack.c.h.b16 %v1054
      %v1763 = vunpack.c.l.b16 %v1055
      %v1764 = vunpack.c.h.b16 %v1055
      %v1765 = vunpack.c.l.b16 %v1056
      %v1766 = vunpack.c.h.b16 %v1056
      %v1767 = vunpack.c.l.b16 %v1057
      %v1768 = vunpack.c.h.b16 %v1057
      %v1769 = vunpack.c.l.b16 %v1058
      %v1770 = vunpack.c.h.b16 %v1058
      %v1771 = vunpack.c.l.b16 %v1059
      %v1772 = vunpack.c.h.b16 %v1059
      %v1773 = vunpack.c.l.b16 %v1060
      %v1774 = vunpack.c.h.b16 %v1060
      %v1775 = vunpack.c.l.b16 %v1061
      %v1776 = vunpack.c.h.b16 %v1061
      %v1777 = vunpack.c.l.b16 %v1062
      %v1778 = vunpack.c.h.b16 %v1062
      %v1779 = vunpack.c.l.b16 %v1063
      %v1780 = vunpack.c.h.b16 %v1063
      %v1781 = vunpack.c.l.b16 %v1064
      %v1782 = vunpack.c.h.b16 %v1064
      %v1783 = vunpack.c.l.b16 %v1065
      %v1784 = vunpack.c.h.b16 %v1065
      %v1785 = vunpack.c.l.b16 %v1066
      %v1786 = vunpack.c.h.b16 %v1066
      %v1787 = vunpack.c.l.b16 %v1067
      %v1788 = vunpack.c.h.b16 %v1067
      %v1789 = vunpack.c.l.b16 %v1068
      %v1790 = vunpack.c.h.b16 %v1068
      %v1791 = vunpack.c.l.b16 %v1069
      %v1792 = vunpack.c.h.b16 %v1069
      %v1793 = vunpack.c.l.b16 %v1070
      %v1794 = vunpack.c.h.b16 %v1070
      %v1795 = vunpack.c.l.b16 %v1071
      %v1796 = vunpack.c.h.b16 %v1071
      %v1797 = vunpack.c.l.b16 %v1072
      %v1798 = vunpack.c.h.b16 %v1072
      %v1799 = vunpack.c.l.b16 %v1073
      %v1800 = vunpack.c.h.b16 %v1073
      %v1801 = vunpack.c.l.b16 %v1074
      %v1802 = vunpack.c.h.b16 %v1074
      %v1803 = vunpack.c.l.b16 %v1075
      %v1804 = vunpack.c.h.b16 %v1075
      %v1805 = vunpack.c.l.b16 %v1076
      %v1806 = vunpack.c.h.b16 %v1076
      %v1807 = vunpack.c.l.b16 %v1077
      %v1808 = vunpack.c.h.b16 %v1077
      %v1809 = vunpack.c.l.b16 %v1078
      %v1810 = vunpack.c.h.b16 %v1078
      %v1811 = vunpack.c.l.b16 %v1079
      %v1812 = vunpack.c.h.b16 %v1079
      %v1813 = vunpack.c.l.b16 %v1080
      %v1814 = vunpack.c.h.b16 %v1080
      %v1815 = vunpack.c.l.b16 %v1081
      %v1816 = vunpack.c.h.b16 %v1081
      %v1817 = vunpack.c.l.b16 %v1082
      %v1818 = vunpack.c.h.b16 %v1082
      %v1819 = vunpack.c.l.b16 %v1083
      %v1820 = vunpack.c.h.b16 %v1083
      %v1821 = vunpack.c.l.b16 %v1084
      %v1822 = vunpack.c.h.b16 %v1084
      %v1823 = vunpack.c.l.b16 %v1085
      %v1824 = vunpack.c.h.b16 %v1085
      %v1825 = vunpack.c.l.b16 %v1086
      %v1826 = vunpack.c.h.b16 %v1086
      %v1827 = vunpack.c.l.b16 %v1087
      %v1828 = vunpack.c.h.b16 %v1087
      %v1829 = vunpack.c.l.b16 %v1088
      %v1830 = vunpack.c.h.b16 %v1088
      %v1831 = vunpack.c.l.b16 %v1089
      %v1832 = vunpack.c.h.b16 %v1089
      %v1833 = vunpack.c.l.b16 %v1090
      %v1834 = vunpack.c.h.b16 %v1090
      %v1835 = vunpack.c.l.b16 %v1091
      %v1836 = vunpack.c.h.b16 %v1091
      %v1837 = vunpack.c.l.b16 %v1092
      %v1838 = vunpack.c.h.b16 %v1092
      %v1839 = vunpack.c.l.b16 %v1093
      %v1840 = vunpack.c.h.b16 %v1093
      %v1841 = vunpack.c.l.b16 %v1094
      %v1842 = vunpack.c.h.b16 %v1094
      %v1843 = vunpack.c.l.b16 %v1095
      %v1844 = vunpack.c.h.b16 %v1095
      %v1845 = vunpack.c.l.b16 %v1096
      %v1846 = vunpack.c.h.b16 %v1096
      %v1847 = vunpack.c.l.b16 %v1097
      %v1848 = vunpack.c.h.b16 %v1097
      %v1849 = vunpack.c.l.b16 %v1098
      %v1850 = vunpack.c.h.b16 %v1098
      %v1851 = vunpack.c.l.b16 %v1099
      %v1852 = vunpack.c.h.b16 %v1099
      %v1853 = vunpack.c.l.b16 %v1100
      %v1854 = vunpack.c.h.b16 %v1100
      %v1855 = vunpack.c.l.b16 %v1101
      %v1856 = vunpack.c.h.b16 %v1101
      %v1857 = vunpack.c.l.b16 %v1102
      %v1858 = vunpack.c.h.b16 %v1102
      %v1859 = vunpack.c.l.b16 %v1103
      %v1860 = vunpack.c.h.b16 %v1103
      %v1861 = vunpack.c.l.b16 %v1104
      %v1862 = vunpack.c.h.b16 %v1104
      %v1863 = vunpack.c.l.b16 %v1105
      %v1864 = vunpack.c.h.b16 %v1105
      %v1865 = vunpack.c.l.b16 %v1106
      %v1866 = vunpack.c.h.b16 %v1106
      %v1867 = vunpack.c.l.b16 %v1107
      %v1868 = vunpack.c.h.b16 %v1107
      %v1869 = vunpack.c.l.b16 %v1108
      %v1870 = vunpack.c.h.b16 %v1108
      %v1871 = vunpack.c.l.b16 %v1109
      %v1872 = vunpack.c.h.b16 %v1109
      %v1873 = vunpack.c.l.b16 %v1110
      %v1874 = vunpack.c.h.b16 %v1110
      %v1875 = vunpack.c.l.b16 %v1111
      %v1876 = vunpack.c.h.b16 %v1111
      %v1877 = vunpack.c.l.b16 %v1112
      %v1878 = vunpack.c.h.b16 %v1112
      %v1879 = vunpack.c.l.b16 %v1113
      %v1880 = vunpack.c.h.b16 %v1113
      %v1881 = vunpack.c.l.b16 %v1114
      %v1882 = vunpack.c.h.b16 %v1114
      %v1883 = vpack.c.b16 %v1373, %v1371
      %v1884 = vpack.c.b16 %v1374, %v1372
      %v1885 = vpack.c.b16 %v1377, %v1375
      %v1886 = vpack.c.b16 %v1378, %v1376
      %v1887 = vpack.c.b16 %v1381, %v1379
      %v1888 = vpack.c.b16 %v1382, %v1380
      %v1889 = vpack.c.b16 %v1385, %v1383
      %v1890 = vpack.c.b16 %v1386, %v1384
      %v1891 = vpack.c.b16 %v1389, %v1387
      %v1892 = vpack.c.b16 %v1390, %v1388
      %v1893 = vpack.c.b16 %v1393, %v1391
      %v1894 = vpack.c.b16 %v1394, %v1392
      %v1895 = vpack.c.b16 %v1397, %v1395
      %v1896 = vpack.c.b16 %v1398, %v1396
      %v1897 = vpack.c.b16 %v1401, %v1399
      %v1898 = vpack.c.b16 %v1402, %v1400
      %v1899 = vpack.c.b16 %v1405, %v1403
      %v1900 = vpack.c.b16 %v1406, %v1404
      %v1901 = vpack.c.b16 %v1409, %v1407
      %v1902 = vpack.c.b16 %v1410, %v1408
      %v1903 = vpack.c.b16 %v1413, %v1411
      %v1904 = vpack.c.b16 %v1414, %v1412
      %v1905 = vpack.c.b16 %v1417, %v1415
      %v1906 = vpack.c.b16 %v1418, %v1416
      %v1907 = vpack.c.b16 %v1421, %v1419
      %v1908 = vpack.c.b16 %v1422, %v1420
      %v1909 = vpack.c.b16 %v1425, %v1423
      %v1910 = vpack.c.b16 %v1426, %v1424
      %v1911 = vpack.c.b16 %v1429, %v1427
      %v1912 = vpack.c.b16 %v1430, %v1428
      %v1913 = vpack.c.b16 %v1433, %v1431
      %v1914 = vpack.c.b16 %v1434, %v1432
      %v1915 = vpack.c.b16 %v1437, %v1435
      %v1916 = vpack.c.b16 %v1438, %v1436
      %v1917 = vpack.c.b16 %v1441, %v1439
      %v1918 = vpack.c.b16 %v1442, %v1440
      %v1919 = vpack.c.b16 %v1445, %v1443
      %v1920 = vpack.c.b16 %v1446, %v1444
      %v1921 = vpack.c.b16 %v1449, %v1447
      %v1922 = vpack.c.b16 %v1450, %v1448
      %v1923 = vpack.c.b16 %v1453, %v1451
      %v1924 = vpack.c.b16 %v1454, %v1452
      %v1925 = vpack.c.b16 %v1457, %v1455
      %v1926 = vpack.c.b16 %v1458, %v1456
      %v1927 = vpack.c.b16 %v1461, %v1459
      %v1928 = vpack.c.b16 %v1462, %v1460
      %v1929 = vpack.c.b16 %v1465, %v1463
      %v1930 = vpack.c.b16 %v1466, %v1464
      %v1931 = vpack.c.b16 %v1469, %v1467
      %v1932 = vpack.c.b16 %v1470, %v1468
      %v1933 = vpack.c.b16 %v1473, %v1471
      %v1934 = vpack.c.b16 %v1474, %v1472
      %v1935 = vpack.c.b16 %v1477, %v1475
      %v1936 = vpack.c.b16 %v1478, %v1476
      %v1937 = vpack.c.b16 %v1481, %v1479
      %v1938 = vpack.c.b16 %v1482, %v1480
      %v1939 = vpack.c.b16 %v1485, %v1483
      %v1940 = vpack.c.b16 %v1486, %v1484
      %v1941 = vpack.c.b16 %v1489, %v1487
      %v1942 = vpack.c.b16 %v1490, %v1488
      %v1943 = vpack.c.b16 %v1493, %v1491
      %v1944 = vpack.c.b16 %v1494, %v1492
      %v1945 = vpack.c.b16 %v1497, %v1495
      %v1946 = vpack.c.b16 %v1498, %v1496
      %v1947 = vpack.c.b16 %v1501, %v1499
      %v1948 = vpack.c.b16 %v1502, %v1500
      %v1949 = vpack.c.b16 %v1505, %v1503
      %v1950 = vpack.c.b16 %v1506, %v1504
      %v1951 = vpack.c.b16 %v1509, %v1507
      %v1952 = vpack.c.b16 %v1510, %v1508
      %v1953 = vpack.c.b16 %v1513, %v1511
      %v1954 = vpack.c.b16 %v1514, %v1512
      %v1955 = vpack.c.b16 %v1517, %v1515
      %v1956 = vpack.c.b16 %v1518, %v1516
      %v1957 = vpack.c.b16 %v1521, %v1519
      %v1958 = vpack.c.b16 %v1522, %v1520
      %v1959 = vpack.c.b16 %v1525, %v1523
      %v1960 = vpack.c.b16 %v1526, %v1524
      %v1961 = vpack.c.b16 %v1529, %v1527
      %v1962 = vpack.c.b16 %v1530, %v1528
      %v1963 = vpack.c.b16 %v1533, %v1531
      %v1964 = vpack.c.b16 %v1534, %v1532
      %v1965 = vpack.c.b16 %v1537, %v1535
      %v1966 = vpack.c.b16 %v1538, %v1536
      %v1967 = vpack.c.b16 %v1541, %v1539
      %v1968 = vpack.c.b16 %v1542, %v1540
      %v1969 = vpack.c.b16 %v1545, %v1543
      %v1970 = vpack.c.b16 %v1546, %v1544
      %v1971 = vpack.c.b16 %v1549, %v1547
      %v1972 = vpack.c.b16 %v1550, %v1548
      %v1973 = vpack.c.b16 %v1553, %v1551
      %v1974 = vpack.c.b16 %v1554, %v1552
      %v1975 = vpack.c.b16 %v1557, %v1555
      %v1976 = vpack.c.b16 %v1558, %v1556
      %v1977 = vpack.c.b16 %v1561, %v1559
      %v1978 = vpack.c.b16 %v1562, %v1560
      %v1979 = vpack.c.b16 %v1565, %v1563
      %v1980 = vpack.c.b16 %v1566, %v1564
      %v1981 = vpack.c.b16 %v1569, %v1567
      %v1982 = vpack.c.b16 %v1570, %v1568
      %v1983 = vpack.c.b16 %v1573, %v1571
      %v1984 = vpack.c.b16 %v1574, %v1572
      %v1985 = vpack.c.b16 %v1577, %v1575
      %v1986 = vpack.c.b16 %v1578, %v1576
      %v1987 = vpack.c.b16 %v1581, %v1579
      %v1988 = vpack.c.b16 %v1582, %v1580
      %v1989 = vpack.c.b16 %v1585, %v1583
      %v1990 = vpack.c.b16 %v1586, %v1584
      %v1991 = vpack.c.b16 %v1589, %v1587
      %v1992 = vpack.c.b16 %v1590, %v1588
      %v1993 = vpack.c.b16 %v1593, %v1591
      %v1994 = vpack.c.b16 %v1594, %v1592
      %v1995 = vpack.c.b16 %v1597, %v1595
      %v1996 = vpack.c.b16 %v1598, %v1596
      %v1997 = vpack.c.b16 %v1601, %v1599
      %v1998 = vpack.c.b16 %v1602, %v1600
      %v1999 = vpack.c.b16 %v1605, %v1603
      %v2000 = vpack.c.b16 %v1606, %v1604
      %v2001 = vpack.c.b16 %v1609, %v1607
      %v2002 = vpack.c.b16 %v1610, %v1608
      %v2003 = vpack.c.b16 %v1613, %v1611
      %v2004 = vpack.c.b16 %v1614, %v1612
      %v2005 = vpack.c.b16 %v1617, %v1615
      %v2006 = vpack.c.b16 %v1618, %v1616
      %v2007 = vpack.c.b16 %v1621, %v1619
      %v2008 = vpack.c.b16 %v1622, %v1620
      %v2009 = vpack.c.b16 %v1625, %v1623
      %v2010 = vpack.c.b16 %v1626, %v1624
      %v2011 = vpack.c.b16 %v1629, %v1627
      %v2012 = vpack.c.b16 %v1630, %v1628
      %v2013 = vpack.c.b16 %v1633, %v1631
      %v2014 = vpack.c.b16 %v1634, %v1632
      %v2015 = vpack.c.b16 %v1637, %v1635
      %v2016 = vpack.c.b16 %v1638, %v1636
      %v2017 = vpack.c.b16 %v1641, %v1639
      %v2018 = vpack.c.b16 %v1642, %v1640
      %v2019 = vpack.c.b16 %v1645, %v1643
      %v2020 = vpack.c.b16 %v1646, %v1644
      %v2021 = vpack.c.b16 %v1649, %v1647
      %v2022 = vpack.c.b16 %v1650, %v1648
      %v2023 = vpack.c.b16 %v1653, %v1651
      %v2024 = vpack.c.b16 %v1654, %v1652
      %v2025 = vpack.c.b16 %v1657, %v1655
      %v2026 = vpack.c.b16 %v1658, %v1656
      %v2027 = vpack.c.b16 %v1661, %v1659
      %v2028 = vpack.c.b16 %v1662, %v1660
      %v2029 = vpack.c.b16 %v1665, %v1663
      %v2030 = vpack.c.b16 %v1666, %v1664
      %v2031 = vpack.c.b16 %v1669, %v1667
      %v2032 = vpack.c.b16 %v1670, %v1668
      %v2033 = vpack.c.b16 %v1673, %v1671
      %v2034 = vpack.c.b16 %v1674, %v1672
      %v2035 = vpack.c.b16 %v1677, %v1675
      %v2036 = vpack.c.b16 %v1678, %v1676
      %v2037 = vpack.c.b16 %v1681, %v1679
      %v2038 = vpack.c.b16 %v1682, %v1680
      %v2039 = vpack.c.b16 %v1685, %v1683
      %v2040 = vpack.c.b16 %v1686, %v1684
      %v2041 = vpack.c.b16 %v1689, %v1687
      %v2042 = vpack.c.b16 %v1690, %v1688
      %v2043 = vpack.c.b16 %v1693, %v1691
      %v2044 = vpack.c.b16 %v1694, %v1692
      %v2045 = vpack.c.b16 %v1697, %v1695
      %v2046 = vpack.c.b16 %v1698, %v1696
      %v2047 = vpack.c.b16 %v1701, %v1699
      %v2048 = vpack.c.b16 %v1702, %v1700
      %v2049 = vpack.c.b16 %v1705, %v1703
      %v2050 = vpack.c.b16 %v1706, %v1704
      %v2051 = vpack.c.b16 %v1709, %v1707
      %v2052 = vpack.c.b16 %v1710, %v1708
      %v2053 = vpack.c.b16 %v1713, %v1711
      %v2054 = vpack.c.b16 %v1714, %v1712
      %v2055 = vpack.c.b16 %v1717, %v1715
      %v2056 = vpack.c.b16 %v1718, %v1716
      %v2057 = vpack.c.b16 %v1721, %v1719
      %v2058 = vpack.c.b16 %v1722, %v1720
      %v2059 = vpack.c.b16 %v1725, %v1723
      %v2060 = vpack.c.b16 %v1726, %v1724
      %v2061 = vpack.c.b16 %v1729, %v1727
      %v2062 = vpack.c.b16 %v1730, %v1728
      %v2063 = vpack.c.b16 %v1733, %v1731
      %v2064 = vpack.c.b16 %v1734, %v1732
      %v2065 = vpack.c.b16 %v1737, %v1735
      %v2066 = vpack.c.b16 %v1738, %v1736
      %v2067 = vpack.c.b16 %v1741, %v1739
      %v2068 = vpack.c.b16 %v1742, %v1740
      %v2069 = vpack.c.b16 %v1745, %v1743
      %v2070 = vpack.c.b16 %v1746, %v1744
      %v2071 = vpack.c.b16 %v1749, %v1747
      %v2072 = vpack.c.b16 %v1750, %v1748
      %v2073 = vpack.c.b16 %v1753, %v1751
      %v2074 = vpack.c.b16 %v1754, %v1752
      %v2075 = vpack.c.b16 %v1757, %v1755
      %v2076 = vpack.c.b16 %v1758, %v1756
      %v2077 = vpack.c.b16 %v1761, %v1759
      %v2078 = vpack.c.b16 %v1762, %v1760
      %v2079 = vpack.c.b16 %v1765, %v1763
      %v2080 = vpack.c.b16 %v1766, %v1764
      %v2081 = vpack.c.b16 %v1769, %v1767
      %v2082 = vpack.c.b16 %v1770, %v1768
      %v2083 = vpack.c.b16 %v1773, %v1771
      %v2084 = vpack.c.b16 %v1774, %v1772
      %v2085 = vpack.c.b16 %v1777, %v1775
      %v2086 = vpack.c.b16 %v1778, %v1776
      %v2087 = vpack.c.b16 %v1781, %v1779
      %v2088 = vpack.c.b16 %v1782, %v1780
      %v2089 = vpack.c.b16 %v1785, %v1783
      %v2090 = vpack.c.b16 %v1786, %v1784
      %v2091 = vpack.c.b16 %v1789, %v1787
      %v2092 = vpack.c.b16 %v1790, %v1788
      %v2093 = vpack.c.b16 %v1793, %v1791
      %v2094 = vpack.c.b16 %v1794, %v1792
      %v2095 = vpack.c.b16 %v1797, %v1795
      %v2096 = vpack.c.b16 %v1798, %v1796
      %v2097 = vpack.c.b16 %v1801, %v1799
      %v2098 = vpack.c.b16 %v1802, %v1800
      %v2099 = vpack.c.b16 %v1805, %v1803
      %v2100 = vpack.c.b16 %v1806, %v1804
      %v2101 = vpack.c.b16 %v1809, %v1807
      %v2102 = vpack.c.b16 %v1810, %v1808
      %v2103 = vpack.c.b16 %v1813, %v1811
      %v2104 = vpack.c.b16 %v1814, %v1812
      %v2105 = vpack.c.b16 %v1817, %v1815
      %v2106 = vpack.c.b16 %v1818, %v1816
      %v2107 = vpack.c.b16 %v1821, %v1819
      %v2108 = vpack.c.b16 %v1822, %v1820
      %v2109 = vpack.c.b16 %v1825, %v1823
      %v2110 = vpack.c.b16 %v1826, %v1824
      %v2111 = vpack.c.b16 %v1829, %v1827
      %v2112 = vpack.c.b16 %v1830, %v1828
      %v2113 = vpack.c.b16 %v1833, %v1831
      %v2114 = vpack.c.b16 %v1834, %v1832
      %v2115 = vpack.c.b16 %v1837, %v1835
      %v2116 = vpack.c.b16 %v1838, %v1836
      %v2117 = vpack.c.b16 %v1841, %v1839
      %v2118 = vpack.c.b16 %v1842, %v1840
      %v2119 = vpack.c.b16 %v1845, %v1843
      %v2120 = vpack.c.b16 %v1846, %v1844
      %v2121 = vpack.c.b16 %v1849, %v1847
      %v2122 = vpack.c.b16 %v1850, %v1848
      %v2123 = vpack.c.b16 %v1853, %v1851
      %v2124 = vpack.c.b16 %v1854, %v1852
      %v2125 = vpack.c.b16 %v1857, %v1855
      %v2126 = vpack.c.b16 %v1858, %v1856
      %v2127 = vpack.c.b16 %v1861, %v1859
      %v2128 = vpack.c.b16 %v1862, %v1860
      %v2129 = vpack.c.b16 %v1865, %v1863
      %v2130 = vpack.c.b16 %v1866, %v1864
      %v2131 = vpack.c.b16 %v1869, %v1867
      %v2132 = vpack.c.b16 %v1870, %v1868
      %v2133 = vpack.c.b16 %v1873, %v1871
      %v2134 = vpack.c.b16 %v1874, %v1872
      %v2135 = vpack.c.b16 %v1877, %v1875
      %v2136 = vpack.c.b16 %v1878, %v1876
      %v2137 = vpack.c.b16 %v1881, %v1879
      %v2138 = vpack.c.b16 %v1882, %v1880
      %2395 = vmatprep.subr.bf16.mxu0 %v1884
      %2396 = vmatpush1.bf16.msra.mxu0 %v1883
      %2397 = vmatprep.subr.bf16.mxu0 %v1886
      %2398 = vmatpush1.bf16.msra.mxu0 %v1885
      %2399 = vmatprep.subr.bf16.mxu0 %v1888
      %2400 = vmatpush1.bf16.msra.mxu0 %v1887
      %2401 = vmatprep.subr.bf16.mxu0 %v1890
      %2402 = vmatpush1.bf16.msra.mxu0 %v1889
      %2403 = vmatprep.subr.bf16.mxu0 %v1892
      %2404 = vmatpush1.bf16.msra.mxu0 %v1891
      %2405 = vmatprep.subr.bf16.mxu0 %v1894
      %2406 = vmatpush1.bf16.msra.mxu0 %v1893
      %2407 = vmatprep.subr.bf16.mxu0 %v1896
      %2408 = vmatpush1.bf16.msra.mxu0 %v1895
      %2409 = vmatprep.subr.bf16.mxu0 %v1898
      %2410 = vmatpush1.bf16.msra.mxu0 %v1897
      %2411 = vmatprep.subr.bf16.mxu0 %v1900
      %2412 = vmatpush1.bf16.msra.mxu0 %v1899
      %2413 = vmatprep.subr.bf16.mxu0 %v1902
      %2414 = vmatpush1.bf16.msra.mxu0 %v1901
      %2415 = vmatprep.subr.bf16.mxu0 %v1904
      %2416 = vmatpush1.bf16.msra.mxu0 %v1903
      %2417 = vmatprep.subr.bf16.mxu0 %v1906
      %2418 = vmatpush1.bf16.msra.mxu0 %v1905
      %2419 = vmatprep.subr.bf16.mxu0 %v1908
      %2420 = vmatpush1.bf16.msra.mxu0 %v1907
      %2421 = vmatprep.subr.bf16.mxu0 %v1910
      %2422 = vmatpush1.bf16.msra.mxu0 %v1909
      %2423 = vmatprep.subr.bf16.mxu0 %v1912
      %2424 = vmatpush1.bf16.msra.mxu0 %v1911
      %2425 = vmatprep.subr.bf16.mxu0 %v1914
      %2426 = vmatpush1.bf16.msra.mxu0 %v1913
      %2427 = vmatprep.mubr.bf16.mxu0 %v724
      %2428 = vmatmul.mubr.bf16.gmra.mrb[0].mxu0 %v723
      %v2429 = vpop.f32.mrb[0].mxu0
      %v2430 = vadd.f32 0.0, %v2429
      %v2431 = vpop.f32.mrb[0].mxu0
      %v2432 = vadd.f32 0.0, %v2431
      %v2433 = vpop.f32.mrb[0].mxu0
      %v2434 = vpop.f32.mrb[0].mxu0
      %2435 = vdwg.mxu0
      %2436 = vmatprep.subr.bf16.mxu0 %v1916
      %2437 = vmatpush1.bf16.msra.mxu0 %v1915
      %2438 = vmatprep.subr.bf16.mxu0 %v1918
      %2439 = vmatpush1.bf16.msra.mxu0 %v1917
      %2440 = vmatprep.subr.bf16.mxu0 %v1920
      %2441 = vmatpush1.bf16.msra.mxu0 %v1919
      %2442 = vmatprep.subr.bf16.mxu0 %v1922
      %2443 = vmatpush1.bf16.msra.mxu0 %v1921
      %2444 = vmatprep.subr.bf16.mxu0 %v1924
      %2445 = vmatpush1.bf16.msra.mxu0 %v1923
      %2446 = vmatprep.subr.bf16.mxu0 %v1926
      %2447 = vmatpush1.bf16.msra.mxu0 %v1925
      %2448 = vmatprep.subr.bf16.mxu0 %v1928
      %2449 = vmatpush1.bf16.msra.mxu0 %v1927
      %2450 = vmatprep.subr.bf16.mxu0 %v1930
      %2451 = vmatpush1.bf16.msra.mxu0 %v1929
      %2452 = vmatprep.subr.bf16.mxu0 %v1932
      %2453 = vmatpush1.bf16.msra.mxu0 %v1931
      %2454 = vmatprep.subr.bf16.mxu0 %v1934
      %2455 = vmatpush1.bf16.msra.mxu0 %v1933
      %2456 = vmatprep.subr.bf16.mxu0 %v1936
      %2457 = vmatpush1.bf16.msra.mxu0 %v1935
      %2458 = vmatprep.subr.bf16.mxu0 %v1938
      %2459 = vmatpush1.bf16.msra.mxu0 %v1937
      %2460 = vmatprep.subr.bf16.mxu0 %v1940
      %2461 = vmatpush1.bf16.msra.mxu0 %v1939
      %2462 = vmatprep.subr.bf16.mxu0 %v1942
      %2463 = vmatpush1.bf16.msra.mxu0 %v1941
      %2464 = vmatprep.subr.bf16.mxu0 %v1944
      %2465 = vmatpush1.bf16.msra.mxu0 %v1943
      %2466 = vmatprep.subr.bf16.mxu0 %v1946
      %2467 = vmatpush1.bf16.msra.mxu0 %v1945
      %2468 = vmatprep.mubr.bf16.mxu0 %v726
      %2469 = vmatmul.mubr.bf16.gmra.mrb[0].mxu0 %v725
      %v2470 = vpop.f32.mrb[0].mxu0
      %v2471 = vadd.f32 %v2430, %v2470
      %v2472 = vpop.f32.mrb[0].mxu0
      %v2473 = vadd.f32 %v2432, %v2472
      %v2474 = vpop.f32.mrb[0].mxu0
      %v2475 = vpop.f32.mrb[0].mxu0
      %2476 = vdwg.mxu0
      %2477 = vmatprep.subr.bf16.mxu0 %v1948
      %2478 = vmatpush1.bf16.msra.mxu0 %v1947
      %2479 = vmatprep.subr.bf16.mxu0 %v1950
      %2480 = vmatpush1.bf16.msra.mxu0 %v1949
      %2481 = vmatprep.subr.bf16.mxu0 %v1952
      %2482 = vmatpush1.bf16.msra.mxu0 %v1951
      %2483 = vmatprep.subr.bf16.mxu0 %v1954
      %2484 = vmatpush1.bf16.msra.mxu0 %v1953
      %2485 = vmatprep.subr.bf16.mxu0 %v1956
      %2486 = vmatpush1.bf16.msra.mxu0 %v1955
      %2487 = vmatprep.subr.bf16.mxu0 %v1958
      %2488 = vmatpush1.bf16.msra.mxu0 %v1957
      %2489 = vmatprep.subr.bf16.mxu0 %v1960
      %2490 = vmatpush1.bf16.msra.mxu0 %v1959
      %2491 = vmatprep.subr.bf16.mxu0 %v1962
      %2492 = vmatpush1.bf16.msra.mxu0 %v1961
      %2493 = vmatprep.subr.bf16.mxu0 %v1964
      %2494 = vmatpush1.bf16.msra.mxu0 %v1963
      %2495 = vmatprep.subr.bf16.mxu0 %v1966
      %2496 = vmatpush1.bf16.msra.mxu0 %v1965
      %2497 = vmatprep.subr.bf16.mxu0 %v1968
      %2498 = vmatpush1.bf16.msra.mxu0 %v1967
      %2499 = vmatprep.subr.bf16.mxu0 %v1970
      %2500 = vmatpush1.bf16.msra.mxu0 %v1969
      %2501 = vmatprep.subr.bf16.mxu0 %v1972
      %2502 = vmatpush1.bf16.msra.mxu0 %v1971
      %2503 = vmatprep.subr.bf16.mxu0 %v1974
      %2504 = vmatpush1.bf16.msra.mxu0 %v1973
      %2505 = vmatprep.subr.bf16.mxu0 %v1976
      %2506 = vmatpush1.bf16.msra.mxu0 %v1975
      %2507 = vmatprep.subr.bf16.mxu0 %v1978
      %2508 = vmatpush1.bf16.msra.mxu0 %v1977
      %2509 = vmatprep.mubr.bf16.mxu0 %v728
      %2510 = vmatmul.mubr.bf16.gmra.mrb[0].mxu0 %v727
      %v2511 = vpop.f32.mrb[0].mxu0
      %v2512 = vadd.f32 %v2471, %v2511
      %v2513 = vpop.f32.mrb[0].mxu0
      %v2514 = vadd.f32 %v2473, %v2513
      %v2515 = vpop.f32.mrb[0].mxu0
      %v2516 = vpop.f32.mrb[0].mxu0
      %2517 = vdwg.mxu0
      %2518 = vmatprep.subr.bf16.mxu0 %v1980
      %2519 = vmatpush1.bf16.msra.mxu0 %v1979
      %2520 = vmatprep.subr.bf16.mxu0 %v1982
      %2521 = vmatpush1.bf16.msra.mxu0 %v1981
      %2522 = vmatprep.subr.bf16.mxu0 %v1984
      %2523 = vmatpush1.bf16.msra.mxu0 %v1983
      %2524 = vmatprep.subr.bf16.mxu0 %v1986
      %2525 = vmatpush1.bf16.msra.mxu0 %v1985
      %2526 = vmatprep.subr.bf16.mxu0 %v1988
      %2527 = vmatpush1.bf16.msra.mxu0 %v1987
      %2528 = vmatprep.subr.bf16.mxu0 %v1990
      %2529 = vmatpush1.bf16.msra.mxu0 %v1989
      %2530 = vmatprep.subr.bf16.mxu0 %v1992
      %2531 = vmatpush1.bf16.msra.mxu0 %v1991
      %2532 = vmatprep.subr.bf16.mxu0 %v1994
      %2533 = vmatpush1.bf16.msra.mxu0 %v1993
      %2534 = vmatprep.subr.bf16.mxu0 %v1996
      %2535 = vmatpush1.bf16.msra.mxu0 %v1995
      %2536 = vmatprep.subr.bf16.mxu0 %v1998
      %2537 = vmatpush1.bf16.msra.mxu0 %v1997
      %2538 = vmatprep.subr.bf16.mxu0 %v2000
      %2539 = vmatpush1.bf16.msra.mxu0 %v1999
      %2540 = vmatprep.subr.bf16.mxu0 %v2002
      %2541 = vmatpush1.bf16.msra.mxu0 %v2001
      %2542 = vmatprep.subr.bf16.mxu0 %v2004
      %2543 = vmatpush1.bf16.msra.mxu0 %v2003
      %2544 = vmatprep.subr.bf16.mxu0 %v2006
      %2545 = vmatpush1.bf16.msra.mxu0 %v2005
      %2546 = vmatprep.subr.bf16.mxu0 %v2008
      %2547 = vmatpush1.bf16.msra.mxu0 %v2007
      %2548 = vmatprep.subr.bf16.mxu0 %v2010
      %2549 = vmatpush1.bf16.msra.mxu0 %v2009
      %2550 = vmatprep.mubr.bf16.mxu0 %v730
      %2551 = vmatmul.mubr.bf16.gmra.mrb[0].mxu0 %v729
      %v2552 = vpop.f32.mrb[0].mxu0
      %v2553 = vadd.f32 %v2512, %v2552
      %v2554 = vpop.f32.mrb[0].mxu0
      %v2555 = vadd.f32 %v2514, %v2554
      %v2556 = vpop.f32.mrb[0].mxu0
      %v2557 = vpop.f32.mrb[0].mxu0
      %2558 = vdwg.mxu0
      %2559 = vmatprep.subr.bf16.mxu0 %v2012
      %2560 = vmatpush1.bf16.msra.mxu0 %v2011
      %2561 = vmatprep.subr.bf16.mxu0 %v2014
      %2562 = vmatpush1.bf16.msra.mxu0 %v2013
      %2563 = vmatprep.subr.bf16.mxu0 %v2016
      %2564 = vmatpush1.bf16.msra.mxu0 %v2015
      %2565 = vmatprep.subr.bf16.mxu0 %v2018
      %2566 = vmatpush1.bf16.msra.mxu0 %v2017
      %2567 = vmatprep.subr.bf16.mxu0 %v2020
      %2568 = vmatpush1.bf16.msra.mxu0 %v2019
      %2569 = vmatprep.subr.bf16.mxu0 %v2022
      %2570 = vmatpush1.bf16.msra.mxu0 %v2021
      %2571 = vmatprep.subr.bf16.mxu0 %v2024
      %2572 = vmatpush1.bf16.msra.mxu0 %v2023
      %2573 = vmatprep.subr.bf16.mxu0 %v2026
      %2574 = vmatpush1.bf16.msra.mxu0 %v2025
      %2575 = vmatprep.subr.bf16.mxu0 %v2028
      %2576 = vmatpush1.bf16.msra.mxu0 %v2027
      %2577 = vmatprep.subr.bf16.mxu0 %v2030
      %2578 = vmatpush1.bf16.msra.mxu0 %v2029
      %2579 = vmatprep.subr.bf16.mxu0 %v2032
      %2580 = vmatpush1.bf16.msra.mxu0 %v2031
      %2581 = vmatprep.subr.bf16.mxu0 %v2034
      %2582 = vmatpush1.bf16.msra.mxu0 %v2033
      %2583 = vmatprep.subr.bf16.mxu0 %v2036
      %2584 = vmatpush1.bf16.msra.mxu0 %v2035
      %2585 = vmatprep.subr.bf16.mxu0 %v2038
      %2586 = vmatpush1.bf16.msra.mxu0 %v2037
      %2587 = vmatprep.subr.bf16.mxu0 %v2040
      %2588 = vmatpush1.bf16.msra.mxu0 %v2039
      %2589 = vmatprep.subr.bf16.mxu0 %v2042
      %2590 = vmatpush1.bf16.msra.mxu0 %v2041
      %2591 = vmatprep.mubr.bf16.mxu0 %v732
      %2592 = vmatmul.mubr.bf16.gmra.mrb[0].mxu0 %v731
      %v2593 = vpop.f32.mrb[0].mxu0
      %v2594 = vadd.f32 %v2553, %v2593
      %v2595 = vpop.f32.mrb[0].mxu0
      %v2596 = vadd.f32 %v2555, %v2595
      %v2597 = vpop.f32.mrb[0].mxu0
      %v2598 = vpop.f32.mrb[0].mxu0
      %2599 = vdwg.mxu0
      %2600 = vmatprep.subr.bf16.mxu0 %v2044
      %2601 = vmatpush1.bf16.msra.mxu0 %v2043
      %2602 = vmatprep.subr.bf16.mxu0 %v2046
      %2603 = vmatpush1.bf16.msra.mxu0 %v2045
      %2604 = vmatprep.subr.bf16.mxu0 %v2048
      %2605 = vmatpush1.bf16.msra.mxu0 %v2047
      %2606 = vmatprep.subr.bf16.mxu0 %v2050
      %2607 = vmatpush1.bf16.msra.mxu0 %v2049
      %2608 = vmatprep.subr.bf16.mxu0 %v2052
      %2609 = vmatpush1.bf16.msra.mxu0 %v2051
      %2610 = vmatprep.subr.bf16.mxu0 %v2054
      %2611 = vmatpush1.bf16.msra.mxu0 %v2053
      %2612 = vmatprep.subr.bf16.mxu0 %v2056
      %2613 = vmatpush1.bf16.msra.mxu0 %v2055
      %2614 = vmatprep.subr.bf16.mxu0 %v2058
      %2615 = vmatpush1.bf16.msra.mxu0 %v2057
      %2616 = vmatprep.subr.bf16.mxu0 %v2060
      %2617 = vmatpush1.bf16.msra.mxu0 %v2059
      %2618 = vmatprep.subr.bf16.mxu0 %v2062
      %2619 = vmatpush1.bf16.msra.mxu0 %v2061
      %2620 = vmatprep.subr.bf16.mxu0 %v2064
      %2621 = vmatpush1.bf16.msra.mxu0 %v2063
      %2622 = vmatprep.subr.bf16.mxu0 %v2066
      %2623 = vmatpush1.bf16.msra.mxu0 %v2065
      %2624 = vmatprep.subr.bf16.mxu0 %v2068
      %2625 = vmatpush1.bf16.msra.mxu0 %v2067
      %2626 = vmatprep.subr.bf16.mxu0 %v2070
      %2627 = vmatpush1.bf16.msra.mxu0 %v2069
      %2628 = vmatprep.subr.bf16.mxu0 %v2072
      %2629 = vmatpush1.bf16.msra.mxu0 %v2071
      %2630 = vmatprep.subr.bf16.mxu0 %v2074
      %2631 = vmatpush1.bf16.msra.mxu0 %v2073
      %2632 = vmatprep.mubr.bf16.mxu0 %v734
      %2633 = vmatmul.mubr.bf16.gmra.mrb[0].mxu0 %v733
      %v2634 = vpop.f32.mrb[0].mxu0
      %v2635 = vadd.f32 %v2594, %v2634
      %v2636 = vpop.f32.mrb[0].mxu0
      %v2637 = vadd.f32 %v2596, %v2636
      %v2638 = vpop.f32.mrb[0].mxu0
      %v2639 = vpop.f32.mrb[0].mxu0
      %2640 = vdwg.mxu0
      %2641 = vmatprep.subr.bf16.mxu0 %v2076
      %2642 = vmatpush1.bf16.msra.mxu0 %v2075
      %2643 = vmatprep.subr.bf16.mxu0 %v2078
      %2644 = vmatpush1.bf16.msra.mxu0 %v2077
      %2645 = vmatprep.subr.bf16.mxu0 %v2080
      %2646 = vmatpush1.bf16.msra.mxu0 %v2079
      %2647 = vmatprep.subr.bf16.mxu0 %v2082
      %2648 = vmatpush1.bf16.msra.mxu0 %v2081
      %2649 = vmatprep.subr.bf16.mxu0 %v2084
      %2650 = vmatpush1.bf16.msra.mxu0 %v2083
      %2651 = vmatprep.subr.bf16.mxu0 %v2086
      %2652 = vmatpush1.bf16.msra.mxu0 %v2085
      %2653 = vmatprep.subr.bf16.mxu0 %v2088
      %2654 = vmatpush1.bf16.msra.mxu0 %v2087
      %2655 = vmatprep.subr.bf16.mxu0 %v2090
      %2656 = vmatpush1.bf16.msra.mxu0 %v2089
      %2657 = vmatprep.subr.bf16.mxu0 %v2092
      %2658 = vmatpush1.bf16.msra.mxu0 %v2091
      %2659 = vmatprep.subr.bf16.mxu0 %v2094
      %2660 = vmatpush1.bf16.msra.mxu0 %v2093
      %2661 = vmatprep.subr.bf16.mxu0 %v2096
      %2662 = vmatpush1.bf16.msra.mxu0 %v2095
      %2663 = vmatprep.subr.bf16.mxu0 %v2098
      %2664 = vmatpush1.bf16.msra.mxu0 %v2097
      %2665 = vmatprep.subr.bf16.mxu0 %v2100
      %2666 = vmatpush1.bf16.msra.mxu0 %v2099
      %2667 = vmatprep.subr.bf16.mxu0 %v2102
      %2668 = vmatpush1.bf16.msra.mxu0 %v2101
      %2669 = vmatprep.subr.bf16.mxu0 %v2104
      %2670 = vmatpush1.bf16.msra.mxu0 %v2103
      %2671 = vmatprep.subr.bf16.mxu0 %v2106
      %2672 = vmatpush1.bf16.msra.mxu0 %v2105
      %2673 = vmatprep.mubr.bf16.mxu0 %v736
      %2674 = vmatmul.mubr.bf16.gmra.mrb[0].mxu0 %v735
      %v2675 = vpop.f32.mrb[0].mxu0
      %v2676 = vadd.f32 %v2635, %v2675
      %v2677 = vpop.f32.mrb[0].mxu0
      %v2678 = vadd.f32 %v2637, %v2677
      %v2679 = vpop.f32.mrb[0].mxu0
      %v2680 = vpop.f32.mrb[0].mxu0
      %2681 = vdwg.mxu0
      %2682 = vmatprep.subr.bf16.mxu0 %v2108
      %2683 = vmatpush1.bf16.msra.mxu0 %v2107
      %2684 = vmatprep.subr.bf16.mxu0 %v2110
      %2685 = vmatpush1.bf16.msra.mxu0 %v2109
      %2686 = vmatprep.subr.bf16.mxu0 %v2112
      %2687 = vmatpush1.bf16.msra.mxu0 %v2111
      %2688 = vmatprep.subr.bf16.mxu0 %v2114
      %2689 = vmatpush1.bf16.msra.mxu0 %v2113
      %2690 = vmatprep.subr.bf16.mxu0 %v2116
      %2691 = vmatpush1.bf16.msra.mxu0 %v2115
      %2692 = vmatprep.subr.bf16.mxu0 %v2118
      %2693 = vmatpush1.bf16.msra.mxu0 %v2117
      %2694 = vmatprep.subr.bf16.mxu0 %v2120
      %2695 = vmatpush1.bf16.msra.mxu0 %v2119
      %2696 = vmatprep.subr.bf16.mxu0 %v2122
      %2697 = vmatpush1.bf16.msra.mxu0 %v2121
      %2698 = vmatprep.subr.bf16.mxu0 %v2124
      %2699 = vmatpush1.bf16.msra.mxu0 %v2123
      %2700 = vmatprep.subr.bf16.mxu0 %v2126
      %2701 = vmatpush1.bf16.msra.mxu0 %v2125
      %2702 = vmatprep.subr.bf16.mxu0 %v2128
      %2703 = vmatpush1.bf16.msra.mxu0 %v2127
      %2704 = vmatprep.subr.bf16.mxu0 %v2130
      %2705 = vmatpush1.bf16.msra.mxu0 %v2129
      %2706 = vmatprep.subr.bf16.mxu0 %v2132
      %2707 = vmatpush1.bf16.msra.mxu0 %v2131
      %2708 = vmatprep.subr.bf16.mxu0 %v2134
      %2709 = vmatpush1.bf16.msra.mxu0 %v2133
      %2710 = vmatprep.subr.bf16.mxu0 %v2136
      %2711 = vmatpush1.bf16.msra.mxu0 %v2135
      %2712 = vmatprep.subr.bf16.mxu0 %v2138
      %2713 = vmatpush1.bf16.msra.mxu0 %v2137
      %2714 = vmatprep.mubr.bf16.mxu0 %v738
      %2715 = vmatmul.mubr.bf16.gmra.mrb[0].mxu0 %v737
      %v2716 = vpop.f32.mrb[0].mxu0
      %v2717 = vadd.f32 %v2676, %v2716
      %v2718 = vpop.f32.mrb[0].mxu0
      %v2719 = vadd.f32 %v2678, %v2718
      %v2720 = vpop.f32.mrb[0].mxu0
      %v2721 = vpop.f32.mrb[0].mxu0
      %2722 = vdwg.mxu0
      %v2843 = vunpack.c.l.b16 %v739
      %v2844 = vunpack.c.h.b16 %v739
      %v2845 = vunpack.c.l.b16 %v740
      %v2846 = vunpack.c.h.b16 %v740
      %v2847 = vunpack.c.l.b16 %v741
      %v2848 = vunpack.c.h.b16 %v741
      %v2849 = vunpack.c.l.b16 %v742
      %v2850 = vunpack.c.h.b16 %v742
      %v2851 = vunpack.c.l.b16 %v743
      %v2852 = vunpack.c.h.b16 %v743
      %v2853 = vunpack.c.l.b16 %v744
      %v2854 = vunpack.c.h.b16 %v744
      %v2855 = vunpack.c.l.b16 %v745
      %v2856 = vunpack.c.h.b16 %v745
      %v2857 = vunpack.c.l.b16 %v746
      %v2858 = vunpack.c.h.b16 %v746
      %v2859 = vunpack.c.l.b16 %v747
      %v2860 = vunpack.c.h.b16 %v747
      %v2861 = vunpack.c.l.b16 %v748
      %v2862 = vunpack.c.h.b16 %v748
      %v2863 = vunpack.c.l.b16 %v749
      %v2864 = vunpack.c.h.b16 %v749
      %v2865 = vunpack.c.l.b16 %v750
      %v2866 = vunpack.c.h.b16 %v750
      %v2867 = vunpack.c.l.b16 %v751
      %v2868 = vunpack.c.h.b16 %v751
      %v2869 = vunpack.c.l.b16 %v752
      %v2870 = vunpack.c.h.b16 %v752
      %v2871 = vunpack.c.l.b16 %v753
      %v2872 = vunpack.c.h.b16 %v753
      %v2873 = vunpack.c.l.b16 %v754
      %v2874 = vunpack.c.h.b16 %v754
      %v2875 = vunpack.c.l.b16 %v755
      %v2876 = vunpack.c.h.b16 %v755
      %v2877 = vunpack.c.l.b16 %v756
      %v2878 = vunpack.c.h.b16 %v756
      %v2879 = vunpack.c.l.b16 %v757
      %v2880 = vunpack.c.h.b16 %v757
      %v2881 = vunpack.c.l.b16 %v758
      %v2882 = vunpack.c.h.b16 %v758
      %v2883 = vunpack.c.l.b16 %v759
      %v2884 = vunpack.c.h.b16 %v759
      %v2885 = vunpack.c.l.b16 %v760
      %v2886 = vunpack.c.h.b16 %v760
      %v2887 = vunpack.c.l.b16 %v761
      %v2888 = vunpack.c.h.b16 %v761
      %v2889 = vunpack.c.l.b16 %v762
      %v2890 = vunpack.c.h.b16 %v762
      %v2891 = vunpack.c.l.b16 %v763
      %v2892 = vunpack.c.h.b16 %v763
      %v2893 = vunpack.c.l.b16 %v764
      %v2894 = vunpack.c.h.b16 %v764
      %v2895 = vunpack.c.l.b16 %v765
      %v2896 = vunpack.c.h.b16 %v765
      %v2897 = vunpack.c.l.b16 %v766
      %v2898 = vunpack.c.h.b16 %v766
      %v2899 = vunpack.c.l.b16 %v767
      %v2900 = vunpack.c.h.b16 %v767
      %v2901 = vunpack.c.l.b16 %v768
      %v2902 = vunpack.c.h.b16 %v768
      %v2903 = vunpack.c.l.b16 %v769
      %v2904 = vunpack.c.h.b16 %v769
      %v2905 = vunpack.c.l.b16 %v770
      %v2906 = vunpack.c.h.b16 %v770
      %v2907 = vunpack.c.l.b16 %v771
      %v2908 = vunpack.c.h.b16 %v771
      %v2909 = vunpack.c.l.b16 %v772
      %v2910 = vunpack.c.h.b16 %v772
      %v2911 = vunpack.c.l.b16 %v773
      %v2912 = vunpack.c.h.b16 %v773
      %v2913 = vunpack.c.l.b16 %v774
      %v2914 = vunpack.c.h.b16 %v774
      %v2915 = vunpack.c.l.b16 %v775
      %v2916 = vunpack.c.h.b16 %v775
      %v2917 = vunpack.c.l.b16 %v776
      %v2918 = vunpack.c.h.b16 %v776
      %v2919 = vunpack.c.l.b16 %v777
      %v2920 = vunpack.c.h.b16 %v777
      %v2921 = vunpack.c.l.b16 %v778
      %v2922 = vunpack.c.h.b16 %v778
      %v2923 = vunpack.c.l.b16 %v779
      %v2924 = vunpack.c.h.b16 %v779
      %v2925 = vunpack.c.l.b16 %v780
      %v2926 = vunpack.c.h.b16 %v780
      %v2927 = vunpack.c.l.b16 %v781
      %v2928 = vunpack.c.h.b16 %v781
      %v2929 = vunpack.c.l.b16 %v782
      %v2930 = vunpack.c.h.b16 %v782
      %v2931 = vunpack.c.l.b16 %v783
      %v2932 = vunpack.c.h.b16 %v783
      %v2933 = vunpack.c.l.b16 %v784
      %v2934 = vunpack.c.h.b16 %v784
      %v2935 = vunpack.c.l.b16 %v785
      %v2936 = vunpack.c.h.b16 %v785
      %v2937 = vunpack.c.l.b16 %v786
      %v2938 = vunpack.c.h.b16 %v786
      %v2939 = vunpack.c.l.b16 %v787
      %v2940 = vunpack.c.h.b16 %v787
      %v2941 = vunpack.c.l.b16 %v788
      %v2942 = vunpack.c.h.b16 %v788
      %v2943 = vunpack.c.l.b16 %v789
      %v2944 = vunpack.c.h.b16 %v789
      %v2945 = vunpack.c.l.b16 %v790
      %v2946 = vunpack.c.h.b16 %v790
      %v2947 = vunpack.c.l.b16 %v791
      %v2948 = vunpack.c.h.b16 %v791
      %v2949 = vunpack.c.l.b16 %v792
      %v2950 = vunpack.c.h.b16 %v792
      %v2951 = vunpack.c.l.b16 %v793
      %v2952 = vunpack.c.h.b16 %v793
      %v2953 = vunpack.c.l.b16 %v794
      %v2954 = vunpack.c.h.b16 %v794
      %v2955 = vunpack.c.l.b16 %v795
      %v2956 = vunpack.c.h.b16 %v795
      %v2957 = vunpack.c.l.b16 %v796
      %v2958 = vunpack.c.h.b16 %v796
      %v2959 = vunpack.c.l.b16 %v797
      %v2960 = vunpack.c.h.b16 %v797
      %v2961 = vunpack.c.l.b16 %v798
      %v2962 = vunpack.c.h.b16 %v798
      %v2963 = vunpack.c.l.b16 %v799
      %v2964 = vunpack.c.h.b16 %v799
      %v2965 = vunpack.c.l.b16 %v800
      %v2966 = vunpack.c.h.b16 %v800
      %v2967 = vunpack.c.l.b16 %v801
      %v2968 = vunpack.c.h.b16 %v801
      %v2969 = vunpack.c.l.b16 %v802
      %v2970 = vunpack.c.h.b16 %v802
      %v2971 = vunpack.c.l.b16 %v803
      %v2972 = vunpack.c.h.b16 %v803
      %v2973 = vunpack.c.l.b16 %v804
      %v2974 = vunpack.c.h.b16 %v804
      %v2975 = vunpack.c.l.b16 %v805
      %v2976 = vunpack.c.h.b16 %v805
      %v2977 = vunpack.c.l.b16 %v806
      %v2978 = vunpack.c.h.b16 %v806
      %v2979 = vunpack.c.l.b16 %v807
      %v2980 = vunpack.c.h.b16 %v807
      %v2981 = vunpack.c.l.b16 %v808
      %v2982 = vunpack.c.h.b16 %v808
      %v2983 = vunpack.c.l.b16 %v809
      %v2984 = vunpack.c.h.b16 %v809
      %v2985 = vunpack.c.l.b16 %v810
      %v2986 = vunpack.c.h.b16 %v810
      %v2987 = vunpack.c.l.b16 %v811
      %v2988 = vunpack.c.h.b16 %v811
      %v2989 = vunpack.c.l.b16 %v812
      %v2990 = vunpack.c.h.b16 %v812
      %v2991 = vunpack.c.l.b16 %v813
      %v2992 = vunpack.c.h.b16 %v813
      %v2993 = vunpack.c.l.b16 %v814
      %v2994 = vunpack.c.h.b16 %v814
      %v2995 = vunpack.c.l.b16 %v815
      %v2996 = vunpack.c.h.b16 %v815
      %v2997 = vunpack.c.l.b16 %v816
      %v2998 = vunpack.c.h.b16 %v816
      %v2999 = vunpack.c.l.b16 %v817
      %v3000 = vunpack.c.h.b16 %v817
      %v3001 = vunpack.c.l.b16 %v818
      %v3002 = vunpack.c.h.b16 %v818
      %v3003 = vunpack.c.l.b16 %v819
      %v3004 = vunpack.c.h.b16 %v819
      %v3005 = vunpack.c.l.b16 %v820
      %v3006 = vunpack.c.h.b16 %v820
      %v3007 = vunpack.c.l.b16 %v821
      %v3008 = vunpack.c.h.b16 %v821
      %v3009 = vunpack.c.l.b16 %v822
      %v3010 = vunpack.c.h.b16 %v822
      %v3011 = vunpack.c.l.b16 %v823
      %v3012 = vunpack.c.h.b16 %v823
      %v3013 = vunpack.c.l.b16 %v824
      %v3014 = vunpack.c.h.b16 %v824
      %v3015 = vunpack.c.l.b16 %v825
      %v3016 = vunpack.c.h.b16 %v825
      %v3017 = vunpack.c.l.b16 %v826
      %v3018 = vunpack.c.h.b16 %v826
      %v3019 = vunpack.c.l.b16 %v827
      %v3020 = vunpack.c.h.b16 %v827
      %v3021 = vunpack.c.l.b16 %v828
      %v3022 = vunpack.c.h.b16 %v828
      %v3023 = vunpack.c.l.b16 %v829
      %v3024 = vunpack.c.h.b16 %v829
      %v3025 = vunpack.c.l.b16 %v830
      %v3026 = vunpack.c.h.b16 %v830
      %v3027 = vunpack.c.l.b16 %v831
      %v3028 = vunpack.c.h.b16 %v831
      %v3029 = vunpack.c.l.b16 %v832
      %v3030 = vunpack.c.h.b16 %v832
      %v3031 = vunpack.c.l.b16 %v833
      %v3032 = vunpack.c.h.b16 %v833
      %v3033 = vunpack.c.l.b16 %v834
      %v3034 = vunpack.c.h.b16 %v834
      %v3035 = vunpack.c.l.b16 %v835
      %v3036 = vunpack.c.h.b16 %v835
      %v3037 = vunpack.c.l.b16 %v836
      %v3038 = vunpack.c.h.b16 %v836
      %v3039 = vunpack.c.l.b16 %v837
      %v3040 = vunpack.c.h.b16 %v837
      %v3041 = vunpack.c.l.b16 %v838
      %v3042 = vunpack.c.h.b16 %v838
      %v3043 = vunpack.c.l.b16 %v839
      %v3044 = vunpack.c.h.b16 %v839
      %v3045 = vunpack.c.l.b16 %v840
      %v3046 = vunpack.c.h.b16 %v840
      %v3047 = vunpack.c.l.b16 %v841
      %v3048 = vunpack.c.h.b16 %v841
      %v3049 = vunpack.c.l.b16 %v842
      %v3050 = vunpack.c.h.b16 %v842
      %v3051 = vunpack.c.l.b16 %v843
      %v3052 = vunpack.c.h.b16 %v843
      %v3053 = vunpack.c.l.b16 %v844
      %v3054 = vunpack.c.h.b16 %v844
      %v3055 = vunpack.c.l.b16 %v845
      %v3056 = vunpack.c.h.b16 %v845
      %v3057 = vunpack.c.l.b16 %v846
      %v3058 = vunpack.c.h.b16 %v846
      %v3059 = vunpack.c.l.b16 %v847
      %v3060 = vunpack.c.h.b16 %v847
      %v3061 = vunpack.c.l.b16 %v848
      %v3062 = vunpack.c.h.b16 %v848
      %v3063 = vunpack.c.l.b16 %v849
      %v3064 = vunpack.c.h.b16 %v849
      %v3065 = vunpack.c.l.b16 %v850
      %v3066 = vunpack.c.h.b16 %v850
      %v3067 = vunpack.c.l.b16 %v851
      %v3068 = vunpack.c.h.b16 %v851
      %v3069 = vunpack.c.l.b16 %v852
      %v3070 = vunpack.c.h.b16 %v852
      %v3071 = vunpack.c.l.b16 %v853
      %v3072 = vunpack.c.h.b16 %v853
      %v3073 = vunpack.c.l.b16 %v854
      %v3074 = vunpack.c.h.b16 %v854
      %v3075 = vunpack.c.l.b16 %v855
      %v3076 = vunpack.c.h.b16 %v855
      %v3077 = vunpack.c.l.b16 %v856
      %v3078 = vunpack.c.h.b16 %v856
      %v3079 = vunpack.c.l.b16 %v857
      %v3080 = vunpack.c.h.b16 %v857
      %v3081 = vunpack.c.l.b16 %v858
      %v3082 = vunpack.c.h.b16 %v858
      %v3083 = vpack.c.b16 %v2845, %v2843
      %v3084 = vpack.c.b16 %v2846, %v2844
      %v3085 = vpack.c.b16 %v2849, %v2847
      %v3086 = vpack.c.b16 %v2850, %v2848
      %v3087 = vpack.c.b16 %v2853, %v2851
      %v3088 = vpack.c.b16 %v2854, %v2852
      %v3089 = vpack.c.b16 %v2857, %v2855
      %v3090 = vpack.c.b16 %v2858, %v2856
      %v3091 = vpack.c.b16 %v2861, %v2859
      %v3092 = vpack.c.b16 %v2862, %v2860
      %v3093 = vpack.c.b16 %v2865, %v2863
      %v3094 = vpack.c.b16 %v2866, %v2864
      %v3095 = vpack.c.b16 %v2869, %v2867
      %v3096 = vpack.c.b16 %v2870, %v2868
      %v3097 = vpack.c.b16 %v2873, %v2871
      %v3098 = vpack.c.b16 %v2874, %v2872
      %v3099 = vpack.c.b16 %v2877, %v2875
      %v3100 = vpack.c.b16 %v2878, %v2876
      %v3101 = vpack.c.b16 %v2881, %v2879
      %v3102 = vpack.c.b16 %v2882, %v2880
      %v3103 = vpack.c.b16 %v2885, %v2883
      %v3104 = vpack.c.b16 %v2886, %v2884
      %v3105 = vpack.c.b16 %v2889, %v2887
      %v3106 = vpack.c.b16 %v2890, %v2888
      %v3107 = vpack.c.b16 %v2893, %v2891
      %v3108 = vpack.c.b16 %v2894, %v2892
      %v3109 = vpack.c.b16 %v2897, %v2895
      %v3110 = vpack.c.b16 %v2898, %v2896
      %v3111 = vpack.c.b16 %v2901, %v2899
      %v3112 = vpack.c.b16 %v2902, %v2900
      %v3113 = vpack.c.b16 %v2905, %v2903
      %v3114 = vpack.c.b16 %v2906, %v2904
      %v3115 = vpack.c.b16 %v2909, %v2907
      %v3116 = vpack.c.b16 %v2910, %v2908
      %v3117 = vpack.c.b16 %v2913, %v2911
      %v3118 = vpack.c.b16 %v2914, %v2912
      %v3119 = vpack.c.b16 %v2917, %v2915
      %v3120 = vpack.c.b16 %v2918, %v2916
      %v3121 = vpack.c.b16 %v2921, %v2919
      %v3122 = vpack.c.b16 %v2922, %v2920
      %v3123 = vpack.c.b16 %v2925, %v2923
      %v3124 = vpack.c.b16 %v2926, %v2924
      %v3125 = vpack.c.b16 %v2929, %v2927
      %v3126 = vpack.c.b16 %v2930, %v2928
      %v3127 = vpack.c.b16 %v2933, %v2931
      %v3128 = vpack.c.b16 %v2934, %v2932
      %v3129 = vpack.c.b16 %v2937, %v2935
      %v3130 = vpack.c.b16 %v2938, %v2936
      %v3131 = vpack.c.b16 %v2941, %v2939
      %v3132 = vpack.c.b16 %v2942, %v2940
      %v3133 = vpack.c.b16 %v2945, %v2943
      %v3134 = vpack.c.b16 %v2946, %v2944
      %v3135 = vpack.c.b16 %v2949, %v2947
      %v3136 = vpack.c.b16 %v2950, %v2948
      %v3137 = vpack.c.b16 %v2953, %v2951
      %v3138 = vpack.c.b16 %v2954, %v2952
      %v3139 = vpack.c.b16 %v2957, %v2955
      %v3140 = vpack.c.b16 %v2958, %v2956
      %v3141 = vpack.c.b16 %v2961, %v2959
      %v3142 = vpack.c.b16 %v2962, %v2960
      %v3143 = vpack.c.b16 %v2965, %v2963
      %v3144 = vpack.c.b16 %v2966, %v2964
      %v3145 = vpack.c.b16 %v2969, %v2967
      %v3146 = vpack.c.b16 %v2970, %v2968
      %v3147 = vpack.c.b16 %v2973, %v2971
      %v3148 = vpack.c.b16 %v2974, %v2972
      %v3149 = vpack.c.b16 %v2977, %v2975
      %v3150 = vpack.c.b16 %v2978, %v2976
      %v3151 = vpack.c.b16 %v2981, %v2979
      %v3152 = vpack.c.b16 %v2982, %v2980
      %v3153 = vpack.c.b16 %v2985, %v2983
      %v3154 = vpack.c.b16 %v2986, %v2984
      %v3155 = vpack.c.b16 %v2989, %v2987
      %v3156 = vpack.c.b16 %v2990, %v2988
      %v3157 = vpack.c.b16 %v2993, %v2991
      %v3158 = vpack.c.b16 %v2994, %v2992
      %v3159 = vpack.c.b16 %v2997, %v2995
      %v3160 = vpack.c.b16 %v2998, %v2996
      %v3161 = vpack.c.b16 %v3001, %v2999
      %v3162 = vpack.c.b16 %v3002, %v3000
      %v3163 = vpack.c.b16 %v3005, %v3003
      %v3164 = vpack.c.b16 %v3006, %v3004
      %v3165 = vpack.c.b16 %v3009, %v3007
      %v3166 = vpack.c.b16 %v3010, %v3008
      %v3167 = vpack.c.b16 %v3013, %v3011
      %v3168 = vpack.c.b16 %v3014, %v3012
      %v3169 = vpack.c.b16 %v3017, %v3015
      %v3170 = vpack.c.b16 %v3018, %v3016
      %v3171 = vpack.c.b16 %v3021, %v3019
      %v3172 = vpack.c.b16 %v3022, %v3020
      %v3173 = vpack.c.b16 %v3025, %v3023
      %v3174 = vpack.c.b16 %v3026, %v3024
      %v3175 = vpack.c.b16 %v3029, %v3027
      %v3176 = vpack.c.b16 %v3030, %v3028
      %v3177 = vpack.c.b16 %v3033, %v3031
      %v3178 = vpack.c.b16 %v3034, %v3032
      %v3179 = vpack.c.b16 %v3037, %v3035
      %v3180 = vpack.c.b16 %v3038, %v3036
      %v3181 = vpack.c.b16 %v3041, %v3039
      %v3182 = vpack.c.b16 %v3042, %v3040
      %v3183 = vpack.c.b16 %v3045, %v3043
      %v3184 = vpack.c.b16 %v3046, %v3044
      %v3185 = vpack.c.b16 %v3049, %v3047
      %v3186 = vpack.c.b16 %v3050, %v3048
      %v3187 = vpack.c.b16 %v3053, %v3051
      %v3188 = vpack.c.b16 %v3054, %v3052
      %v3189 = vpack.c.b16 %v3057, %v3055
      %v3190 = vpack.c.b16 %v3058, %v3056
      %v3191 = vpack.c.b16 %v3061, %v3059
      %v3192 = vpack.c.b16 %v3062, %v3060
      %v3193 = vpack.c.b16 %v3065, %v3063
      %v3194 = vpack.c.b16 %v3066, %v3064
      %v3195 = vpack.c.b16 %v3069, %v3067
      %v3196 = vpack.c.b16 %v3070, %v3068
      %v3197 = vpack.c.b16 %v3073, %v3071
      %v3198 = vpack.c.b16 %v3074, %v3072
      %v3199 = vpack.c.b16 %v3077, %v3075
      %v3200 = vpack.c.b16 %v3078, %v3076
      %v3201 = vpack.c.b16 %v3081, %v3079
      %v3202 = vpack.c.b16 %v3082, %v3080
      %vm3323 = vcmask 523264
      %v3325 = vsel %vm3323, %v722, 0
      %3327 = vmatprep.subr.bf16.mxu0 %v3084
      %3328 = vmatpush1.bf16.msra.mxu0 %v3083
      %3329 = vmatprep.subr.bf16.mxu0 %v3086
      %3330 = vmatpush1.bf16.msra.mxu0 %v3085
      %3331 = vmatprep.subr.bf16.mxu0 %v3088
      %3332 = vmatpush1.bf16.msra.mxu0 %v3087
      %3333 = vmatprep.subr.bf16.mxu0 %v3090
      %3334 = vmatpush1.bf16.msra.mxu0 %v3089
      %3335 = vmatprep.subr.bf16.mxu0 %v3092
      %3336 = vmatpush1.bf16.msra.mxu0 %v3091
      %3337 = vmatprep.subr.bf16.mxu0 %v3094
      %3338 = vmatpush1.bf16.msra.mxu0 %v3093
      %3339 = vmatprep.subr.bf16.mxu0 %v3096
      %3340 = vmatpush1.bf16.msra.mxu0 %v3095
      %3341 = vmatprep.subr.bf16.mxu0 %v3098
      %3342 = vmatpush1.bf16.msra.mxu0 %v3097
      %3343 = vmatprep.subr.bf16.mxu0 %v3100
      %3344 = vmatpush1.bf16.msra.mxu0 %v3099
      %3345 = vmatprep.subr.bf16.mxu0 %v3102
      %3346 = vmatpush1.bf16.msra.mxu0 %v3101
      %3347 = vmatprep.subr.bf16.mxu0 %v3104
      %3348 = vmatpush1.bf16.msra.mxu0 %v3103
      %3349 = vmatprep.subr.bf16.mxu0 %v3106
      %3350 = vmatpush1.bf16.msra.mxu0 %v3105
      %3351 = vmatprep.subr.bf16.mxu0 %v3108
      %3352 = vmatpush1.bf16.msra.mxu0 %v3107
      %3353 = vmatprep.subr.bf16.mxu0 %v3110
      %3354 = vmatpush1.bf16.msra.mxu0 %v3109
      %3355 = vmatprep.subr.bf16.mxu0 %v3112
      %3356 = vmatpush1.bf16.msra.mxu0 %v3111
      %3357 = vmatprep.subr.bf16.mxu0 %v3114
      %3358 = vmatpush1.bf16.msra.mxu0 %v3113
      %3359 = vmatprep.mubr.bf16.mxu0 %v716
      %3360 = vmatmul.mubr.bf16.gmra.mrb[0].mxu0 %v715
      %v3361 = vpop.f32.mrb[0].mxu0
      %v3362 = vadd.f32 %v2717, %v3361
      %v3363 = vpop.f32.mrb[0].mxu0
      %v3364 = vadd.f32 %v2719, %v3363
      %v3365 = vpop.f32.mrb[0].mxu0
      %v3366 = vpop.f32.mrb[0].mxu0
      %3367 = vdwg.mxu0
      %3368 = vmatprep.subr.bf16.mxu0 %v3116
      %3369 = vmatpush1.bf16.msra.mxu0 %v3115
      %3370 = vmatprep.subr.bf16.mxu0 %v3118
      %3371 = vmatpush1.bf16.msra.mxu0 %v3117
      %3372 = vmatprep.subr.bf16.mxu0 %v3120
      %3373 = vmatpush1.bf16.msra.mxu0 %v3119
      %3374 = vmatprep.subr.bf16.mxu0 %v3122
      %3375 = vmatpush1.bf16.msra.mxu0 %v3121
      %3376 = vmatprep.subr.bf16.mxu0 %v3124
      %3377 = vmatpush1.bf16.msra.mxu0 %v3123
      %3378 = vmatprep.subr.bf16.mxu0 %v3126
      %3379 = vmatpush1.bf16.msra.mxu0 %v3125
      %3380 = vmatprep.subr.bf16.mxu0 %v3128
      %3381 = vmatpush1.bf16.msra.mxu0 %v3127
      %3382 = vmatprep.subr.bf16.mxu0 %v3130
      %3383 = vmatpush1.bf16.msra.mxu0 %v3129
      %3384 = vmatprep.subr.bf16.mxu0 %v3132
      %3385 = vmatpush1.bf16.msra.mxu0 %v3131
      %3386 = vmatprep.subr.bf16.mxu0 %v3134
      %3387 = vmatpush1.bf16.msra.mxu0 %v3133
      %3388 = vmatprep.subr.bf16.mxu0 %v3136
      %3389 = vmatpush1.bf16.msra.mxu0 %v3135
      %3390 = vmatprep.subr.bf16.mxu0 %v3138
      %3391 = vmatpush1.bf16.msra.mxu0 %v3137
      %3392 = vmatprep.subr.bf16.mxu0 %v3140
      %3393 = vmatpush1.bf16.msra.mxu0 %v3139
      %3394 = vmatprep.subr.bf16.mxu0 %v3142
      %3395 = vmatpush1.bf16.msra.mxu0 %v3141
      %3396 = vmatprep.subr.bf16.mxu0 %v3144
      %3397 = vmatpush1.bf16.msra.mxu0 %v3143
      %3398 = vmatprep.subr.bf16.mxu0 %v3146
      %3399 = vmatpush1.bf16.msra.mxu0 %v3145
      %3400 = vmatprep.mubr.bf16.mxu0 %v718
      %3401 = vmatmul.mubr.bf16.gmra.mrb[0].mxu0 %v717
      %v3402 = vpop.f32.mrb[0].mxu0
      %v3403 = vadd.f32 %v3362, %v3402
      %v3404 = vpop.f32.mrb[0].mxu0
      %v3405 = vadd.f32 %v3364, %v3404
      %v3406 = vpop.f32.mrb[0].mxu0
      %v3407 = vpop.f32.mrb[0].mxu0
      %3408 = vdwg.mxu0
      %3409 = vmatprep.subr.bf16.mxu0 %v3148
      %3410 = vmatpush1.bf16.msra.mxu0 %v3147
      %3411 = vmatprep.subr.bf16.mxu0 %v3150
      %3412 = vmatpush1.bf16.msra.mxu0 %v3149
      %3413 = vmatprep.subr.bf16.mxu0 %v3152
      %3414 = vmatpush1.bf16.msra.mxu0 %v3151
      %3415 = vmatprep.subr.bf16.mxu0 %v3154
      %3416 = vmatpush1.bf16.msra.mxu0 %v3153
      %3417 = vmatprep.subr.bf16.mxu0 %v3156
      %3418 = vmatpush1.bf16.msra.mxu0 %v3155
      %3419 = vmatprep.subr.bf16.mxu0 %v3158
      %3420 = vmatpush1.bf16.msra.mxu0 %v3157
      %3421 = vmatprep.subr.bf16.mxu0 %v3160
      %3422 = vmatpush1.bf16.msra.mxu0 %v3159
      %3423 = vmatprep.subr.bf16.mxu0 %v3162
      %3424 = vmatpush1.bf16.msra.mxu0 %v3161
      %3425 = vmatprep.subr.bf16.mxu0 %v3164
      %3426 = vmatpush1.bf16.msra.mxu0 %v3163
      %3427 = vmatprep.subr.bf16.mxu0 %v3166
      %3428 = vmatpush1.bf16.msra.mxu0 %v3165
      %3429 = vmatprep.subr.bf16.mxu0 %v3168
      %3430 = vmatpush1.bf16.msra.mxu0 %v3167
      %3431 = vmatprep.subr.bf16.mxu0 %v3170
      %3432 = vmatpush1.bf16.msra.mxu0 %v3169
      %3433 = vmatprep.subr.bf16.mxu0 %v3172
      %3434 = vmatpush1.bf16.msra.mxu0 %v3171
      %3435 = vmatprep.subr.bf16.mxu0 %v3174
      %3436 = vmatpush1.bf16.msra.mxu0 %v3173
      %3437 = vmatprep.subr.bf16.mxu0 %v3176
      %3438 = vmatpush1.bf16.msra.mxu0 %v3175
      %3439 = vmatprep.subr.bf16.mxu0 %v3178
      %3440 = vmatpush1.bf16.msra.mxu0 %v3177
      %3441 = vmatprep.mubr.bf16.mxu0 %v720
      %3442 = vmatmul.mubr.bf16.gmra.mrb[0].mxu0 %v719
      %v3443 = vpop.f32.mrb[0].mxu0
      %v3444 = vadd.f32 %v3403, %v3443
      %v3445 = vpop.f32.mrb[0].mxu0
      %v3446 = vadd.f32 %v3405, %v3445
      %v3447 = vpop.f32.mrb[0].mxu0
      %v3448 = vpop.f32.mrb[0].mxu0
      %3449 = vdwg.mxu0
      %3450 = vmatprep.subr.bf16.mxu0 %v3180
      %3451 = vmatpush1.bf16.msra.mxu0 %v3179
      %3452 = vmatprep.subr.bf16.mxu0 %v3182
      %3453 = vmatpush1.bf16.msra.mxu0 %v3181
      %3454 = vmatprep.subr.bf16.mxu0 %v3184
      %3455 = vmatpush1.bf16.msra.mxu0 %v3183
      %3456 = vmatprep.subr.bf16.mxu0 %v3186
      %3457 = vmatpush1.bf16.msra.mxu0 %v3185
      %3458 = vmatprep.subr.bf16.mxu0 %v3188
      %3459 = vmatpush1.bf16.msra.mxu0 %v3187
      %3460 = vmatprep.subr.bf16.mxu0 %v3190
      %3461 = vmatpush1.bf16.msra.mxu0 %v3189
      %3462 = vmatprep.subr.bf16.mxu0 %v3192
      %3463 = vmatpush1.bf16.msra.mxu0 %v3191
      %3464 = vmatprep.subr.bf16.mxu0 %v3194
      %3465 = vmatpush1.bf16.msra.mxu0 %v3193
      %3466 = vmatprep.subr.bf16.mxu0 %v3196
      %3467 = vmatpush1.bf16.msra.mxu0 %v3195
      %3468 = vmatprep.subr.bf16.mxu0 %v3198
      %3469 = vmatpush1.bf16.msra.mxu0 %v3197
      %3470 = vmatprep.subr.bf16.mxu0 %v3200
      %3471 = vmatpush1.bf16.msra.mxu0 %v3199
      %3472 = vmatprep.subr.bf16.mxu0 %v3202
      %3473 = vmatpush1.bf16.msra.mxu0 %v3201
      %3474 = vmatprep.subr.bf16.mxu0 0
      %3475 = vmatpush1.bf16.msra.mxu0 0
      %3476 = vmatprep.subr.bf16.mxu0 0
      %3477 = vmatpush1.bf16.msra.mxu0 0
      %3478 = vmatprep.subr.bf16.mxu0 0
      %3479 = vmatpush1.bf16.msra.mxu0 0
      %3480 = vmatprep.subr.bf16.mxu0 0
      %3481 = vmatpush1.bf16.msra.mxu0 0
      %3482 = vmatprep.mubr.bf16.mxu0 %v3325
      %3483 = vmatmul.mubr.bf16.gmra.mrb[0].mxu0 %v721
      %v3484 = vpop.f32.mrb[0].mxu0
      %v3485 = vadd.f32 %v3444, %v3484
      %v3486 = vpop.f32.mrb[0].mxu0
      %v3487 = vadd.f32 %v3446, %v3486
      %v3488 = vpop.f32.mrb[0].mxu0
      %v3489 = vpop.f32.mrb[0].mxu0
      %3490 = vdwg.mxu0
      %v3491 = vld [vmem:[#allocation9] sm:$0x3]
      %v3493 = vlaneseq
      %v3494 = vshrl.u32 %v3493, 7
      %v3495 = vsub.s32 0, %v3494
      %v3496 = vrot.slane %v3491, %v3495
      %v3497 = vlaneseq
      %v3498 = vshrl.u32 %v3497, 7
      %v3499 = vsub.s32 1, %v3498
      %v3500 = vrot.slane %v3491, %v3499
      %v3503 = vadd.f32 %v3485, %v3496
      %v3504 = vadd.f32 %v3487, %v3500
      %v3505 = vmax.f32 %v3503, 0.0
      %v3506 = vmax.f32 %v3504, 0.0
      %v3507 = vpack.c.bf16 %v3505, %v3505
      %v3508 = vpack.c.bf16 %v3506, %v3506
      %v3509 = vld [vmem:[%s6] sm:$0xf]
      %v3510 = vld [vmem:[%s6 + $0x4] sm:$0xf]
      %v3511 = vld [vmem:[%s6 + $0x8] sm:$0xf]
      %v3512 = vld [vmem:[%s6 + $0xc] sm:$0xf]
      %v3513 = vld [vmem:[%s6 + $0x10] sm:$0xf]
      %v3514 = vld [vmem:[%s6 + $0x14] sm:$0xf]
      %v3515 = vld [vmem:[%s6 + $0x18] sm:$0xf]
      %v3516 = vld [vmem:[%s6 + $0x1c] sm:$0xf]
      %v3517 = vld [vmem:[%s6 + $0x20] sm:$0xf]
      %v3518 = vld [vmem:[%s6 + $0x24] sm:$0xf]
      %v3519 = vld [vmem:[%s6 + $0x28] sm:$0xf]
      %v3520 = vld [vmem:[%s6 + $0x2c] sm:$0xf]
      %v3521 = vld [vmem:[%s6 + $0x30] sm:$0xf]
      %v3522 = vld [vmem:[%s6 + $0x34] sm:$0xf]
      %v3523 = vld [vmem:[%s6 + $0x38] sm:$0xf]
      %v3524 = vld [vmem:[%s6 + $0x3c] sm:$0xf]
      %v3525 = vld [vmem:[%s6 + $0x40] sm:$0xf]
      %v3526 = vld [vmem:[%s6 + $0x44] sm:$0xf]
      %v3527 = vld [vmem:[%s6 + $0x48] sm:$0xf]
      %v3528 = vld [vmem:[%s6 + $0x4c] sm:$0xf]
      %v3529 = vld [vmem:[%s6 + $0x50] sm:$0xf]
      %v3530 = vld [vmem:[%s6 + $0x54] sm:$0xf]
      %v3531 = vld [vmem:[%s6 + $0x58] sm:$0xf]
      %v3532 = vld [vmem:[%s6 + $0x5c] sm:$0xf]
      %v3533 = vld [vmem:[%s6 + $0x60] sm:$0xf]
      %v3534 = vld [vmem:[%s6 + $0x64] sm:$0xf]
      %v3535 = vld [vmem:[%s6 + $0x68] sm:$0xf]
      %v3536 = vld [vmem:[%s6 + $0x6c] sm:$0xf]
      %v3537 = vld [vmem:[%s6 + $0x70] sm:$0xf]
      %v3538 = vld [vmem:[%s6 + $0x74] sm:$0xf]
      %v3539 = vld [vmem:[%s6 + $0x78] sm:$0xf]
      %v3540 = vld [vmem:[%s6 + $0x7c] sm:$0xf]
      %v3541 = vld [vmem:[%s7] sm:$0x1]
      %v3543 = vlaneseq
      %v3544 = vshrl.u32 %v3543, 7
      %v3545 = vsub.s32 0, %v3544
      %v3546 = vrot.slane %v3541, %v3545
      %v3580 = vunpack.c.l.b16 %v3509
      %v3581 = vunpack.c.l.b16 %v3510
      %v3582 = vunpack.c.l.b16 %v3511
      %v3583 = vunpack.c.l.b16 %v3512
      %v3584 = vunpack.c.l.b16 %v3513
      %v3585 = vunpack.c.l.b16 %v3514
      %v3586 = vunpack.c.l.b16 %v3515
      %v3587 = vunpack.c.l.b16 %v3516
      %v3588 = vunpack.c.l.b16 %v3517
      %v3589 = vunpack.c.l.b16 %v3518
      %v3590 = vunpack.c.l.b16 %v3519
      %v3591 = vunpack.c.l.b16 %v3520
      %v3592 = vunpack.c.l.b16 %v3521
      %v3593 = vunpack.c.l.b16 %v3522
      %v3594 = vunpack.c.l.b16 %v3523
      %v3595 = vunpack.c.l.b16 %v3524
      %v3596 = vunpack.c.l.b16 %v3525
      %v3597 = vunpack.c.l.b16 %v3526
      %v3598 = vunpack.c.l.b16 %v3527
      %v3599 = vunpack.c.l.b16 %v3528
      %v3600 = vunpack.c.l.b16 %v3529
      %v3601 = vunpack.c.l.b16 %v3530
      %v3602 = vunpack.c.l.b16 %v3531
      %v3603 = vunpack.c.l.b16 %v3532
      %v3604 = vunpack.c.l.b16 %v3533
      %v3605 = vunpack.c.l.b16 %v3534
      %v3606 = vunpack.c.l.b16 %v3535
      %v3607 = vunpack.c.l.b16 %v3536
      %v3608 = vunpack.c.l.b16 %v3537
      %v3609 = vunpack.c.l.b16 %v3538
      %v3610 = vunpack.c.l.b16 %v3539
      %v3611 = vunpack.c.l.b16 %v3540
      %v3612 = vpack.c.b16 %v3581, %v3580
      %v3613 = vpack.c.b16 %v3583, %v3582
      %v3614 = vpack.c.b16 %v3585, %v3584
      %v3615 = vpack.c.b16 %v3587, %v3586
      %v3616 = vpack.c.b16 %v3589, %v3588
      %v3617 = vpack.c.b16 %v3591, %v3590
      %v3618 = vpack.c.b16 %v3593, %v3592
      %v3619 = vpack.c.b16 %v3595, %v3594
      %v3620 = vpack.c.b16 %v3597, %v3596
      %v3621 = vpack.c.b16 %v3599, %v3598
      %v3622 = vpack.c.b16 %v3601, %v3600
      %v3623 = vpack.c.b16 %v3603, %v3602
      %v3624 = vpack.c.b16 %v3605, %v3604
      %v3625 = vpack.c.b16 %v3607, %v3606
      %v3626 = vpack.c.b16 %v3609, %v3608
      %v3627 = vpack.c.b16 %v3611, %v3610
      %3644 = vmatprep.subr.bf16.mxu0 0
      %3645 = vmatpush1.bf16.msra.mxu0 %v3612
      %3646 = vmatprep.subr.bf16.mxu0 0
      %3647 = vmatpush1.bf16.msra.mxu0 %v3613
      %3648 = vmatprep.subr.bf16.mxu0 0
      %3649 = vmatpush1.bf16.msra.mxu0 %v3614
      %3650 = vmatprep.subr.bf16.mxu0 0
      %3651 = vmatpush1.bf16.msra.mxu0 %v3615
      %3652 = vmatprep.subr.bf16.mxu0 0
      %3653 = vmatpush1.bf16.msra.mxu0 %v3616
      %3654 = vmatprep.subr.bf16.mxu0 0
      %3655 = vmatpush1.bf16.msra.mxu0 %v3617
      %3656 = vmatprep.subr.bf16.mxu0 0
      %3657 = vmatpush1.bf16.msra.mxu0 %v3618
      %3658 = vmatprep.subr.bf16.mxu0 0
      %3659 = vmatpush1.bf16.msra.mxu0 %v3619
      %3660 = vmatprep.subr.bf16.mxu0 0
      %3661 = vmatpush1.bf16.msra.mxu0 %v3620
      %3662 = vmatprep.subr.bf16.mxu0 0
      %3663 = vmatpush1.bf16.msra.mxu0 %v3621
      %3664 = vmatprep.subr.bf16.mxu0 0
      %3665 = vmatpush1.bf16.msra.mxu0 %v3622
      %3666 = vmatprep.subr.bf16.mxu0 0
      %3667 = vmatpush1.bf16.msra.mxu0 %v3623
      %3668 = vmatprep.subr.bf16.mxu0 0
      %3669 = vmatpush1.bf16.msra.mxu0 %v3624
      %3670 = vmatprep.subr.bf16.mxu0 0
      %3671 = vmatpush1.bf16.msra.mxu0 %v3625
      %3672 = vmatprep.subr.bf16.mxu0 0
      %3673 = vmatpush1.bf16.msra.mxu0 %v3626
      %3674 = vmatprep.subr.bf16.mxu0 0
      %3675 = vmatpush1.bf16.msra.mxu0 %v3627
      %3676 = vmatprep.mubr.bf16.mxu0 %v3508
      %3677 = vmatmul.mubr.bf16.gmra.mrb[0].mxu0 %v3507
      %v3678 = vpop.f32.mrb[0].mxu0
      %v3679 = vadd.f32 %v3546, %v3678
      %v3680 = vpop.f32.mrb[0].mxu0
      %v3681 = vpop.f32.mrb[0].mxu0
      %v3682 = vpop.f32.mrb[0].mxu0
      %3683 = vdwg.mxu0
      %v3684 = vmax.f32 %v3679, 0.0
      %v3685 = vpack.c.bf16 %v3684, %v3684
      %v3686 = vld [vmem:[%s8] sm:$0xf]
      %v3687 = vld [vmem:[%s8 + $0x4] sm:$0xf]
      %v3688 = vld [vmem:[%s8 + $0x8] sm:$0xf]
      %v3689 = vld [vmem:[%s8 + $0xc] sm:$0xf]
      %v3690 = vld [vmem:[%s8 + $0x10] sm:$0xf]
      %v3691 = vld [vmem:[%s8 + $0x14] sm:$0xf]
      %v3692 = vld [vmem:[%s8 + $0x18] sm:$0xf]
      %v3693 = vld [vmem:[%s8 + $0x1c] sm:$0xf]
      %v3694 = vld [vmem:[%s8 + $0x20] sm:$0xf]
      %v3695 = vld [vmem:[%s8 + $0x24] sm:$0xf]
      %v3696 = vld [vmem:[%s8 + $0x28] sm:$0xf]
      %v3697 = vld [vmem:[%s8 + $0x2c] sm:$0xf]
      %v3698 = vld [vmem:[%s8 + $0x30] sm:$0xf]
      %v3699 = vld [vmem:[%s8 + $0x34] sm:$0xf]
      %v3700 = vld [vmem:[%s8 + $0x38] sm:$0xf]
      %v3701 = vld [vmem:[%s8 + $0x3c] sm:$0xf]
      %v3702 = vld [vmem:[#allocation11] sm:$0x1]
      %v3704 = vlaneseq
      %v3705 = vshrl.u32 %v3704, 7
      %v3706 = vsub.s32 0, %v3705
      %v3707 = vrot.slane %v3702, %v3706
      %v3725 = vunpack.c.l.b16 %v3686
      %v3726 = vunpack.c.l.b16 %v3687
      %v3727 = vunpack.c.l.b16 %v3688
      %v3728 = vunpack.c.l.b16 %v3689
      %v3729 = vunpack.c.l.b16 %v3690
      %v3730 = vunpack.c.l.b16 %v3691
      %v3731 = vunpack.c.l.b16 %v3692
      %v3732 = vunpack.c.l.b16 %v3693
      %v3733 = vunpack.c.l.b16 %v3694
      %v3734 = vunpack.c.l.b16 %v3695
      %v3735 = vunpack.c.l.b16 %v3696
      %v3736 = vunpack.c.l.b16 %v3697
      %v3737 = vunpack.c.l.b16 %v3698
      %v3738 = vunpack.c.l.b16 %v3699
      %v3739 = vunpack.c.l.b16 %v3700
      %v3740 = vunpack.c.l.b16 %v3701
      %v3741 = vpack.c.b16 %v3726, %v3725
      %v3742 = vpack.c.b16 %v3728, %v3727
      %v3743 = vpack.c.b16 %v3730, %v3729
      %v3744 = vpack.c.b16 %v3732, %v3731
      %v3745 = vpack.c.b16 %v3734, %v3733
      %v3746 = vpack.c.b16 %v3736, %v3735
      %v3747 = vpack.c.b16 %v3738, %v3737
      %v3748 = vpack.c.b16 %v3740, %v3739
      %3757 = vmatprep.subr.bf16.mxu0 0
      %3758 = vmatpush1.bf16.msra.mxu0 %v3741
      %3759 = vmatprep.subr.bf16.mxu0 0
      %3760 = vmatpush1.bf16.msra.mxu0 %v3742
      %3761 = vmatprep.subr.bf16.mxu0 0
      %3762 = vmatpush1.bf16.msra.mxu0 %v3743
      %3763 = vmatprep.subr.bf16.mxu0 0
      %3764 = vmatpush1.bf16.msra.mxu0 %v3744
      %3765 = vmatprep.subr.bf16.mxu0 0
      %3766 = vmatpush1.bf16.msra.mxu0 %v3745
      %3767 = vmatprep.subr.bf16.mxu0 0
      %3768 = vmatpush1.bf16.msra.mxu0 %v3746
      %3769 = vmatprep.subr.bf16.mxu0 0
      %3770 = vmatpush1.bf16.msra.mxu0 %v3747
      %3771 = vmatprep.subr.bf16.mxu0 0
      %3772 = vmatpush1.bf16.msra.mxu0 %v3748
      %3773 = vmatprep.subr.bf16.mxu0 0
      %3774 = vmatpush1.bf16.msra.mxu0 0
      %3775 = vmatprep.subr.bf16.mxu0 0
      %3776 = vmatpush1.bf16.msra.mxu0 0
      %3777 = vmatprep.subr.bf16.mxu0 0
      %3778 = vmatpush1.bf16.msra.mxu0 0
      %3779 = vmatprep.subr.bf16.mxu0 0
      %3780 = vmatpush1.bf16.msra.mxu0 0
      %3781 = vmatprep.subr.bf16.mxu0 0
      %3782 = vmatpush1.bf16.msra.mxu0 0
      %3783 = vmatprep.subr.bf16.mxu0 0
      %3784 = vmatpush1.bf16.msra.mxu0 0
      %3785 = vmatprep.subr.bf16.mxu0 0
      %3786 = vmatpush1.bf16.msra.mxu0 0
      %3787 = vmatprep.subr.bf16.mxu0 0
      %3788 = vmatpush1.bf16.msra.mxu0 0
      %3789 = vmatprep.mubr.bf16.mxu0 0
      %3790 = vmatmul.mubr.bf16.gmra.mrb[0].mxu0 %v3685
      %v3791 = vpop.f32.mrb[0].mxu0
      %v3792 = vadd.f32 %v3707, %v3791
      %v3793 = vpop.f32.mrb[0].mxu0
      %v3794 = vpop.f32.mrb[0].mxu0
      %v3795 = vpop.f32.mrb[0].mxu0
      %3796 = vdwg.mxu0
      %v3797 = vmax.f32 %v3792, 0.0
      %v3798 = vpack.c.bf16 %v3797, %v3797
      %v3799 = vld [vmem:[%s10] sm:$0xf]
      %v3800 = vld [vmem:[%s10 + $0x4] sm:$0xf]
      %v3801 = vld [vmem:[%s10 + $0x8] sm:$0xf]
      %v3802 = vld [vmem:[%s10 + $0xc] sm:$0xf]
      %v3803 = vld [vmem:[%s10 + $0x10] sm:$0xf]
      %v3804 = vld [vmem:[%s10 + $0x14] sm:$0xf]
      %v3805 = vld [vmem:[%s10 + $0x18] sm:$0xf]
      %v3806 = vld [vmem:[%s10 + $0x1c] sm:$0xf]
      %v3807 = vld [vmem:[%s11] sm:$0x1]
      %v3809 = vlaneseq
      %v3810 = vshrl.u32 %v3809, 7
      %v3811 = vsub.s32 0, %v3810
      %v3812 = vrot.slane %v3807, %v3811
      %v3822 = vunpack.c.l.b16 %v3799
      %v3823 = vunpack.c.l.b16 %v3800
      %v3824 = vunpack.c.l.b16 %v3801
      %v3825 = vunpack.c.l.b16 %v3802
      %v3826 = vunpack.c.l.b16 %v3803
      %v3827 = vunpack.c.l.b16 %v3804
      %v3828 = vunpack.c.l.b16 %v3805
      %v3829 = vunpack.c.l.b16 %v3806
      %v3830 = vpack.c.b16 %v3823, %v3822
      %v3831 = vpack.c.b16 %v3825, %v3824
      %v3832 = vpack.c.b16 %v3827, %v3826
      %v3833 = vpack.c.b16 %v3829, %v3828
      %v3839 = vsel %vm3323, %v3798, 0
      %3841 = vmatprep.subr.bf16.mxu0 0
      %3842 = vmatpush1.bf16.msra.mxu0 %v3830
      %3843 = vmatprep.subr.bf16.mxu0 0
      %3844 = vmatpush1.bf16.msra.mxu0 %v3831
      %3845 = vmatprep.subr.bf16.mxu0 0
      %3846 = vmatpush1.bf16.msra.mxu0 %v3832
      %3847 = vmatprep.subr.bf16.mxu0 0
      %3848 = vmatpush1.bf16.msra.mxu0 %v3833
      %3849 = vmatprep.subr.bf16.mxu0 0
      %3850 = vmatpush1.bf16.msra.mxu0 0
      %3851 = vmatprep.subr.bf16.mxu0 0
      %3852 = vmatpush1.bf16.msra.mxu0 0
      %3853 = vmatprep.subr.bf16.mxu0 0
      %3854 = vmatpush1.bf16.msra.mxu0 0
      %3855 = vmatprep.subr.bf16.mxu0 0
      %3856 = vmatpush1.bf16.msra.mxu0 0
      %3857 = vmatprep.subr.bf16.mxu0 0
      %3858 = vmatpush1.bf16.msra.mxu0 0
      %3859 = vmatprep.subr.bf16.mxu0 0
      %3860 = vmatpush1.bf16.msra.mxu0 0
      %3861 = vmatprep.subr.bf16.mxu0 0
      %3862 = vmatpush1.bf16.msra.mxu0 0
      %3863 = vmatprep.subr.bf16.mxu0 0
      %3864 = vmatpush1.bf16.msra.mxu0 0
      %3865 = vmatprep.subr.bf16.mxu0 0
      %3866 = vmatpush1.bf16.msra.mxu0 0
      %3867 = vmatprep.subr.bf16.mxu0 0
      %3868 = vmatpush1.bf16.msra.mxu0 0
      %3869 = vmatprep.subr.bf16.mxu0 0
      %3870 = vmatpush1.bf16.msra.mxu0 0
      %3871 = vmatprep.subr.bf16.mxu0 0
      %3872 = vmatpush1.bf16.msra.mxu0 0
      %3873 = vmatprep.mubr.bf16.mxu0 0
      %3874 = vmatmul.mubr.bf16.gmra.mrb[0].mxu0 %v3839
      %v3875 = vpop.f32.mrb[0].mxu0
      %v3876 = vadd.f32 %v3812, %v3875
      %v3877 = vpop.f32.mrb[0].mxu0
      %v3878 = vpop.f32.mrb[0].mxu0
      %v3879 = vpop.f32.mrb[0].mxu0
      %3880 = vdwg.mxu0
      %v3881 = vmax.f32 %v3876, 0.0
      %v3882 = vld [vmem:[#allocation12] sm:$0xff]
      %v3883 = vld [vmem:[#allocation12 + $0x8] sm:$0xff]
      %v3884 = vld [vmem:[#allocation12 + $0x10] sm:$0xff]
      %v3885 = vld [vmem:[#allocation12 + $0x18] sm:$0xff]
      %v3886 = vld [vmem:[%s13] sm:$0x1]
      %v3888 = vlaneseq
      %v3889 = vshrl.u32 %v3888, 7
      %v3890 = vsub.s32 0, %v3889
      %v3891 = vrot.slane %v3886, %v3890
      %vm3893 = vcmask 261120
      %v3895 = vsel %vm3893, %v3881, 0
      %3897 = vmatprep.subr.mxu0 0.0
      %3898 = vmatpush1.msra.mxu0 %v3882
      %3899 = vmatprep.subr.mxu0 0.0
      %3900 = vmatpush1.msra.mxu0 %v3883
      %3901 = vmatprep.subr.mxu0 0.0
      %3902 = vmatpush1.msra.mxu0 %v3884
      %3903 = vmatprep.subr.mxu0 0.0
      %3904 = vmatpush1.msra.mxu0 %v3885
      %3905 = vmatprep.subr.mxu0 0.0
      %3906 = vmatpush1.msra.mxu0 0.0
      %3907 = vmatprep.subr.mxu0 0.0
      %3908 = vmatpush1.msra.mxu0 0.0
      %3909 = vmatprep.subr.mxu0 0.0
      %3910 = vmatpush1.msra.mxu0 0.0
      %3911 = vmatprep.subr.mxu0 0.0
      %3912 = vmatpush1.msra.mxu0 0.0
      %3913 = vmatprep.subr.mxu0 0.0
      %3914 = vmatpush1.msra.mxu0 0.0
      %3915 = vmatprep.subr.mxu0 0.0
      %3916 = vmatpush1.msra.mxu0 0.0
      %3917 = vmatprep.subr.mxu0 0.0
      %3918 = vmatpush1.msra.mxu0 0.0
      %3919 = vmatprep.subr.mxu0 0.0
      %3920 = vmatpush1.msra.mxu0 0.0
      %3921 = vmatprep.subr.mxu0 0.0
      %3922 = vmatpush1.msra.mxu0 0.0
      %3923 = vmatprep.subr.mxu0 0.0
      %3924 = vmatpush1.msra.mxu0 0.0
      %3925 = vmatprep.subr.mxu0 0.0
      %3926 = vmatpush1.msra.mxu0 0.0
      %3927 = vmatprep.subr.mxu0 0.0
      %3928 = vmatpush1.msra.mxu0 0.0
      %3929 = vmatprep.subr.mxu0 0.0
      %3930 = vmatpush1.msra.mxu0 0.0
      %3931 = vmatprep.subr.mxu0 0.0
      %3932 = vmatpush1.msra.mxu0 0.0
      %3933 = vmatprep.subr.mxu0 0.0
      %3934 = vmatpush1.msra.mxu0 0.0
      %3935 = vmatprep.subr.mxu0 0.0
      %3936 = vmatpush1.msra.mxu0 0.0
      %3937 = vmatprep.subr.mxu0 0.0
      %3938 = vmatpush1.msra.mxu0 0.0
      %3939 = vmatprep.subr.mxu0 0.0
      %3940 = vmatpush1.msra.mxu0 0.0
      %3941 = vmatprep.subr.mxu0 0.0
      %3942 = vmatpush1.msra.mxu0 0.0
      %3943 = vmatprep.subr.mxu0 0.0
      %3944 = vmatpush1.msra.mxu0 0.0
      %3945 = vmatprep.subr.mxu0 0.0
      %3946 = vmatpush1.msra.mxu0 0.0
      %3947 = vmatprep.subr.mxu0 0.0
      %3948 = vmatpush1.msra.mxu0 0.0
      %3949 = vmatprep.subr.mxu0 0.0
      %3950 = vmatpush1.msra.mxu0 0.0
      %3951 = vmatprep.subr.mxu0 0.0
      %3952 = vmatpush1.msra.mxu0 0.0
      %3953 = vmatprep.subr.mxu0 0.0
      %3954 = vmatpush1.msra.mxu0 0.0
      %3955 = vmatprep.subr.mxu0 0.0
      %3956 = vmatpush1.msra.mxu0 0.0
      %3957 = vmatprep.subr.mxu0 0.0
      %3958 = vmatpush1.msra.mxu0 0.0
      %3959 = vmatprep.subr.mxu0 0.0
      %3960 = vmatpush1.msra.mxu0 0.0
      %3961 = vmatprep.mubr.f32.mxu0 0.0
      %3962 = vmatmul.mubr.f32.gmra.mrb[0].mxu0 %v3895
      %v3963 = vpop.f32.mrb[0].mxu0
      %v3964 = vadd.f32 %v3891, %v3963
      %v3965 = vpop.f32.mrb[0].mxu0
      %3966 = vdwg.mxu0
      %3967 = vst [vmem:[#allocation14] sm:$0x3] %v3964
    $region89: #{tpu_custom_call.1} parent=1 // pred_fallthru
      _
    // Predicated region
    $region90: #{tpu_custom_call.1} parent=1 // pred_check
      _
    $region91: #{tpu_custom_call.1} parent=1 // pred_check_branch
      %3969 = sbr.rel (0) target = $region93
    $region92: #{tpu_custom_call.1} parent=1 // pred_region
      %s3971 = ssub.s32 32, 32
      %3972 = vsyncadd [#allocation5], %s3971
      %s3974 = sshll.u32 [#allocation14], 4
      %s3975 = int_to_ptr.vmem [resolvable:$true] %s3974
      %3977 = dma.vmem_to_hbm [thread:$0]  %s3975, 32, %s14, [#allocation5]
    $region93: #{tpu_custom_call.1} parent=1 // pred_fallthru
      _
    // Predicated region
    $region94: #{tpu_custom_call.1} parent=1 // pred_check
      _
    $region95: #{tpu_custom_call.1} parent=1 // pred_check_branch
      %3979 = sbr.rel (0) target = $region97
    $region96: #{tpu_custom_call.1} parent=1 // pred_region
      %3980 = dma.done [#allocation5], 32
    $region97: #{tpu_custom_call.1} parent=1 // pred_fallthru
      _
    %3981 = vsyncpa [#allocation4], 1
    %3982 = vsyncpa [#allocation7], 1
    %3983 = vsyncpa [#allocation10], 1
    %3984 = vsyncpa [#allocation13], 1
    %3985 = vsyncpa [#allocation5], 1

</llo_original>
